<compile_context>
chip_gen: v7x
topology: tpu7x:2x2x1
jax: 0.10.0
libtpu: 0.0.40
codegen_flags: <defaults>
</compile_context>

<pallas_src>
import functools

import jax
import jax.numpy as jnp
from jax.experimental import pallas as pl
from jax.experimental.pallas import tpu as pltpu

EPS = 1e-5                     # nn.BatchNorm2d default eps
TM_TARGET = 4096               # lane-axis (M) tile, multiple of 128; fits VMEM
VMEM_LIMIT = 32 * 1024 * 1024  # safe on v5e/v6e/v7x


# ------------------------------ Pallas kernels ------------------------------ #

def _gemm_relu_stats_kernel(w_ref, bias_ref, p_ref, y_ref, st_ref, *,
                            m_total, tm, masked):
    """relu(W' @ patches + bias) + per-channel partial BN statistics.

    Per grid step:
      w_ref:    (Cout, K)    bf16  weights with previous BN scale folded in
      bias_ref: (Cout, 1)    f32   previous BN shift folded in (W @ b)
      p_ref:    (K, TM)      bf16  im2col patches, M = N*H*W on the lane axis
      y_ref:    (Cout, TM)   bf16  raw post-ReLU activation (lane dense)
      st_ref:   (1, Cout, 2) f32   partial [sum, sum-of-squares] per channel
    """
    y = jnp.dot(w_ref[...], p_ref[...], preferred_element_type=jnp.float32)
    y = jnp.maximum(y + bias_ref[...], 0.0)

    if masked:
        # Last tile may contain M-padding columns -> exclude from the stats.
        col = jax.lax.broadcasted_iota(jnp.int32, y.shape, 1)
        col = col + pl.program_id(0) * tm
        yv = jnp.where(col < m_total, y, 0.0)
    else:
        yv = y
    s1 = jnp.sum(yv, axis=1, keepdims=True)          # (Cout, 1)
    s2 = jnp.sum(yv * yv, axis=1, keepdims=True)     # (Cout, 1)
    st_ref[0] = jnp.concatenate([s1, s2], axis=1)    # (Cout, 2)

    y_ref[...] = y.astype(y_ref.dtype)


def _head_kernel(y_ref, w_ref, bias_ref, o_ref):
    """AvgPool2d(6) + 1x1 conv (48->10, BN3c folded in) + log_softmax."""
    y = y_ref[...].astype(jnp.float32)               # (N, 36, 48) raw conv3c+ReLU
    avg = jnp.mean(y, axis=1)                        # (N, 48) global average pool
    logits = jnp.dot(avg, w_ref[...],
                     preferred_element_type=jnp.float32) + bias_ref[...]
    m = jnp.max(logits, axis=-1, keepdims=True)
    s = logits - m
    lse = jnp.log(jnp.sum(jnp.exp(s), axis=-1, keepdims=True))
    o_ref[...] = s - lse


# ----------------------------- Pallas wrappers ------------------------------ #

def _conv_gemm(wq, bias, patches):
    """relu(wq @ patches + bias), tiled over M (lanes), plus BN partial stats."""
    cout, k = wq.shape
    m = patches.shape[1]
    if m <= TM_TARGET:
        tm, ntiles, mpad = m, 1, m
    else:
        tm = TM_TARGET
        ntiles = pl.cdiv(m, tm)
        mpad = ntiles * tm
        if mpad != m:
            patches = jnp.pad(patches, ((0, 0), (0, mpad - m)))

    cost = pl.CostEstimate(
        flops=2 * cout * k * mpad,
        transcendentals=0,
        bytes_accessed=(k * mpad + cout * mpad + cout * k) * 2
        + cout * 4 + ntiles * cout * 2 * 4,
    )

    y, stats = pl.pallas_call(
        functools.partial(_gemm_relu_stats_kernel,
                          m_total=m, tm=tm, masked=(mpad != m)),
        out_shape=(jax.ShapeDtypeStruct((cout, mpad), jnp.bfloat16),
                   jax.ShapeDtypeStruct((ntiles, cout, 2), jnp.float32)),
        grid=(ntiles,),
        in_specs=[
            pl.BlockSpec((cout, k), lambda i: (0, 0)),   # folded weights
            pl.BlockSpec((cout, 1), lambda i: (0, 0)),   # folded bias
            pl.BlockSpec((k, tm), lambda i: (0, i)),     # patch tile (lane axis)
        ],
        out_specs=(
            pl.BlockSpec((cout, tm), lambda i: (0, i)),  # lane-dense output
            pl.BlockSpec((1, cout, 2), lambda i: (i, 0, 0)),
        ),
        compiler_params=pltpu.CompilerParams(
            dimension_semantics=("parallel",),
            vmem_limit_bytes=VMEM_LIMIT),
        cost_estimate=cost,
    )(wq, bias, patches)

    if mpad != m:
        y = y[:, :m]
    return y, stats


def head(y3c, n, w_out, bn3c):
    """AvgPool(6) + 1x1 conv (48->10) + log_softmax, BN3c folded (Pallas)."""
    a, b = bn3c
    w2d = w_out.reshape(10, 48)
    wq = (w2d * a[None, :]).T.astype(jnp.float32)    # (48, 10)
    bias = jnp.dot(w2d, b).reshape(1, 10).astype(jnp.float32)
    yh = jnp.transpose(y3c.reshape(48, n, 36), (1, 2, 0))   # (N, 36, 48) bf16
    return pl.pallas_call(
        _head_kernel,
        out_shape=jax.ShapeDtypeStruct((n, 10), jnp.float32),
        grid=(1,),
        in_specs=[
            pl.BlockSpec((n, 36, 48), lambda i: (0, 0, 0)),
            pl.BlockSpec((48, 10), lambda i: (0, 0)),
            pl.BlockSpec((1, 10), lambda i: (0, 0)),
        ],
        out_specs=pl.BlockSpec((n, 10), lambda i: (0, 0)),
        compiler_params=pltpu.CompilerParams(
            dimension_semantics=("arbitrary",),
            vmem_limit_bytes=VMEM_LIMIT),
    )(yh, wq, bias)


# -------------------------------- JAX glue ---------------------------------- #

def _bn_affine(stats, m, gamma, beta):
    """BatchNorm2d (training-mode batch stats) as a per-channel affine a*y+b."""
    ssum = jnp.sum(stats[:, :, 0], axis=0)
    ssq = jnp.sum(stats[:, :, 1], axis=0)
    mean = ssum / m
    var = jnp.maximum(ssq / m - mean * mean, 0.0)   # biased variance, clamped
    a = gamma * jax.lax.rsqrt(var + EPS)
    b = beta - mean * a
    return a, b


def _fold_prev_bn(w2d, a_k, b_k):
    """Fold the previous BN's per-input-channel affine into this conv."""
    wq = (w2d * a_k[None, :]).astype(jnp.bfloat16)
    bias = jnp.dot(w2d, b_k).reshape(-1, 1).astype(jnp.float32)
    return wq, bias


def _im2col_cm(xc, n, h, w, pad_vals, padding):
    """Channel-major im2col.  xc: (Cin, N*H*W) -> patches (9*Cin, N*Ho*Wo).

    K axis ordered (cin, dy, dx) to match PyTorch's (Cout, Cin, kh, kw) weights.
    `pad_vals` (= -b/a per channel) reproduce zero padding of the *normalised*
    activation when the previous BN is folded into this conv's weights.
    """
    cin = xc.shape[0]
    x4 = xc.reshape(cin, n, h, w)
    if padding:
        ho, wo = h, w
        if pad_vals is None:
            x4 = jnp.pad(x4, ((0, 0), (0, 0), (1, 1), (1, 1)))
        else:
            base = jnp.broadcast_to(
                pad_vals.astype(xc.dtype)[:, None, None, None],
                (cin, n, h + 2, w + 2))
            x4 = base.at[:, :, 1:h + 1, 1:w + 1].set(x4)
    else:
        ho, wo = h - 2, w - 2
    cols = [x4[:, :, dy:dy + ho, dx:dx + wo]
            for dy in range(3) for dx in range(3)]
    p = jnp.stack(cols, axis=1)                      # (Cin, 9, N, Ho, Wo)
    return p.reshape(cin * 9, n * ho * wo)


def conv3x3_relu(xc, n, h, w, w_pt, prev_bn=None, padding=True):
    """3x3 conv (bias=False) + ReLU with the previous BN folded in."""
    cout, cin = w_pt.shape[0], w_pt.shape[1]
    w2d = w_pt.reshape(cout, cin * 9)                # K ordered (cin, dy, dx)
    if prev_bn is None:
        a = jnp.ones((cin,), jnp.float32)
        b = jnp.zeros((cin,), jnp.float32)
        pad_vals = None
    else:
        a, b = prev_bn
        # pad with -b/a so that a*pad + b == 0 (zero padding of normalised act).
        safe_a = jnp.where(a != 0, a, 1.0)
        pad_vals = jnp.where(a != 0, -b / safe_a, 0.0)
    wq, bias = _fold_prev_bn(w2d, jnp.repeat(a, 9), jnp.repeat(b, 9))
    patches = _im2col_cm(xc, n, h, w, pad_vals, padding)
    return _conv_gemm(wq, bias, patches)


def conv1x1_relu(xc, w_pt, prev_bn):
    """1x1 conv (bias=False) + ReLU with the previous BN folded in."""
    cout, cin = w_pt.shape[0], w_pt.shape[1]
    w2d = w_pt.reshape(cout, cin)
    a, b = prev_bn
    wq, bias = _fold_prev_bn(w2d, a, b)
    y, _ = _conv_gemm(wq, bias, xc)
    return y


def maxpool2_cm(xc, n, h, w):
    """MaxPool2d(2,2) on channel-major data — pure data movement, kept in XLA."""
    c = xc.shape[0]
    x = xc.reshape(c, n, h // 2, 2, w // 2, 2)
    return x.max(axis=(3, 5)).reshape(c, n * (h // 2) * (w // 2))


# ------------------------------- Parameters --------------------------------- #

def _conv_w(key, cout, cin, k):
    fan_in = cin * k * k
    std = (2.0 / fan_in) ** 0.5
    return std * jax.random.normal(key, (cout, cin, k, k), jnp.float32)


def init_params(key):
    ks = jax.random.split(key, 11)
    p = {}
    p["c1a"] = _conv_w(ks[0], 8, 3, 3);   p["g1a"] = jnp.ones(8);  p["b1a"] = jnp.zeros(8)
    p["c1b"] = _conv_w(ks[1], 16, 8, 3);  p["g1b"] = jnp.ones(16); p["b1b"] = jnp.zeros(16)
    p["t1"] = _conv_w(ks[2], 8, 16, 1)
    p["c2a"] = _conv_w(ks[3], 16, 8, 3);  p["g2a"] = jnp.ones(16); p["b2a"] = jnp.zeros(16)
    p["c2b"] = _conv_w(ks[4], 24, 16, 3); p["g2b"] = jnp.ones(24); p["b2b"] = jnp.zeros(24)
    p["c2c"] = _conv_w(ks[5], 32, 24, 3); p["g2c"] = jnp.ones(32); p["b2c"] = jnp.zeros(32)
    p["t2"] = _conv_w(ks[6], 8, 32, 1)
    p["c3a"] = _conv_w(ks[7], 16, 8, 3);  p["g3a"] = jnp.ones(16); p["b3a"] = jnp.zeros(16)
    p["c3b"] = _conv_w(ks[8], 32, 16, 3); p["g3b"] = jnp.ones(32); p["b3b"] = jnp.zeros(32)
    p["c3c"] = _conv_w(ks[9], 48, 32, 3); p["g3c"] = jnp.ones(48); p["b3c"] = jnp.zeros(48)
    p["wout"] = _conv_w(ks[10], 10, 48, 1)
    return p


# ------------------------------- Forward pass -------------------------------- #

@jax.jit
def net_forward(p, x_nchw):
    n = x_nchw.shape[0]
    # NCHW -> channel-major (C, N*H*W), bf16 for the MXU.
    xc = jnp.transpose(x_nchw.astype(jnp.float32), (1, 0, 2, 3))
    xc = xc.reshape(3, n * 32 * 32).astype(jnp.bfloat16)

    # --- conv1 block:  Conv-ReLU-BN8, Conv-ReLU-BN16 ---
    y, st = conv3x3_relu(xc, n, 32, 32, p["c1a"])
    bn1a = _bn_affine(st, n * 32 * 32, p["g1a"], p["b1a"])
    y, st = conv3x3_relu(y, n, 32, 32, p["c1b"], bn1a)
    bn1b = _bn_affine(st, n * 32 * 32, p["g1b"], p["b1b"])
    # --- trans1: 1x1 conv + ReLU (BN1b folded in) + MaxPool2 ---
    y = conv1x1_relu(y, p["t1"], bn1b)
    y = maxpool2_cm(y, n, 32, 32)                               # (8, N*16*16)

    # --- conv2 block ---
    y, st = conv3x3_relu(y, n, 16, 16, p["c2a"])
    bn2a = _bn_affine(st, n * 16 * 16, p["g2a"], p["b2a"])
    y, st = conv3x3_relu(y, n, 16, 16, p["c2b"], bn2a)
    bn2b = _bn_affine(st, n * 16 * 16, p["g2b"], p["b2b"])
    y, st = conv3x3_relu(y, n, 16, 16, p["c2c"], bn2b)
    bn2c = _bn_affine(st, n * 16 * 16, p["g2c"], p["b2c"])
    # --- trans2 ---
    y = conv1x1_relu(y, p["t2"], bn2c)
    y = maxpool2_cm(y, n, 16, 16)                               # (8, N*8*8)

    # --- conv3 block (last conv: no padding -> 6x6) ---
    y, st = conv3x3_relu(y, n, 8, 8, p["c3a"])
    bn3a = _bn_affine(st, n * 8 * 8, p["g3a"], p["b3a"])
    y, st = conv3x3_relu(y, n, 8, 8, p["c3b"], bn3a)
    bn3b = _bn_affine(st, n * 8 * 8, p["g3b"], p["b3b"])
    y, st = conv3x3_relu(y, n, 8, 8, p["c3c"], bn3b, padding=False)  # (48, N*36)
    bn3c = _bn_affine(st, n * 6 * 6, p["g3c"], p["b3c"])

    # --- head: AvgPool(6) + 1x1 conv (48->10) + log_softmax (BN3c folded) ---
    return head(y, n, p["wout"], bn3c)


if __name__ == "__main__":
    x = jax.random.normal(jax.random.PRNGKey(0), (2, 3, 32, 32), jnp.float32)
    params = init_params(jax.random.PRNGKey(0))
    out = jax.block_until_ready(net_forward(params, x))
    assert out.shape == (2, 10)
    # log_softmax rows must sum (in probability space) to ~1
    assert bool(jnp.all(jnp.abs(jnp.sum(jnp.exp(out), axis=1) - 1.0) < 1e-4))
    print("KERNEL_OK")
</pallas_src>

<mosaic_0001>
module attributes {stable_mosaic.version = 11 : i64} {
  func.func @_gemm_relu_stats_kernel(%arg0: i32, %arg1: memref<8x27xbf16, #tpu.memory_space<vmem>>, %arg2: memref<8x1xf32, #tpu.memory_space<vmem>>, %arg3: memref<27x2048xbf16, #tpu.memory_space<vmem>>, %arg4: memref<8x2048xbf16, #tpu.memory_space<vmem>>, %arg5: memref<1x8x2xf32, #tpu.memory_space<vmem>>) attributes {dimension_semantics = [#tpu.dimension_semantics<parallel>], iteration_bounds = array<i64: 1>, scalar_prefetch = 0 : i64, scratch_operands = 0 : i64, tpu.core_type = #tpu.core_type<tc>, window_params = [{pipeline_mode = #tpu.pipeline_mode<synchronous>, transform_indices = @transform_0, window_bounds = array<i64: 8, 27>}, {pipeline_mode = #tpu.pipeline_mode<synchronous>, transform_indices = @transform_1, window_bounds = array<i64: 8, 1>}, {transform_indices = @transform_2, window_bounds = array<i64: 27, 2048>}, {transform_indices = @transform_3, window_bounds = array<i64: 8, 2048>}, {transform_indices = @transform_4, window_bounds = array<i64: 1, 8, 2>}]} {
    %c0 = arith.constant 0 : index
    %c0_0 = arith.constant 0 : index
    %0 = vector.load %arg1[%c0, %c0_0] : memref<8x27xbf16, #tpu.memory_space<vmem>>, vector<8x27xbf16>
    %c0_1 = arith.constant 0 : index
    %c0_2 = arith.constant 0 : index
    %1 = vector.load %arg3[%c0_1, %c0_2] : memref<27x2048xbf16, #tpu.memory_space<vmem>>, vector<27x2048xbf16>
    %cst = arith.constant dense<0.000000e+00> : vector<8x2048xf32>
    %2 = tpu.matmul %0, %1, %cst {dimension_numbers = #tpu.dot_dimension_numbers<[1], [0], [0], [1], [0, 0, 1, 1], [], []>} : vector<8x27xbf16>, vector<27x2048xbf16>, vector<8x2048xf32> -> vector<8x2048xf32>
    %c0_3 = arith.constant 0 : index
    %c0_4 = arith.constant 0 : index
    %3 = vector.load %arg2[%c0_3, %c0_4] : memref<8x1xf32, #tpu.memory_space<vmem>>, vector<8x1xf32>
    %4 = vector.broadcast %3 : vector<8x1xf32> to vector<8x2048xf32>
    %5 = arith.addf %2, %4 : vector<8x2048xf32>
    %cst_5 = arith.constant 0.000000e+00 : f32
    %6 = vector.broadcast %cst_5 : f32 to vector<8x2048xf32>
    %7 = arith.maximumf %5, %6 : vector<8x2048xf32>
    %cst_6 = arith.constant dense<0.000000e+00> : vector<8xf32>
    %8 = vector.multi_reduction <add>, %7, %cst_6 [1] : vector<8x2048xf32> to vector<8xf32>
    %9 = vector.shape_cast %8 : vector<8xf32> to vector<8x1xf32>
    %10 = arith.mulf %7, %7 : vector<8x2048xf32>
    %cst_7 = arith.constant dense<0.000000e+00> : vector<8xf32>
    %11 = vector.multi_reduction <add>, %10, %cst_7 [1] : vector<8x2048xf32> to vector<8xf32>
    %12 = vector.shape_cast %11 : vector<8xf32> to vector<8x1xf32>
    %13 = tpu.concatenate %9, %12 in 1 : vector<8x1xf32>, vector<8x1xf32> -> vector<8x2xf32>
    %c0_8 = arith.constant 0 : index
    %c0_9 = arith.constant 0 : index
    %c0_10 = arith.constant 0 : index
    %14 = vector.load %arg5[%c0_8, %c0_9, %c0_10] : memref<1x8x2xf32, #tpu.memory_space<vmem>>, vector<1x8x2xf32>
    %15 = vector.shape_cast %14 : vector<1x8x2xf32> to vector<8x2xf32>
    %16 = vector.shape_cast %13 : vector<8x2xf32> to vector<1x8x2xf32>
    tpu.vector_store %arg5[%c0_8, %c0_9, %c0_10], %16 {strides = array<i32>} : memref<1x8x2xf32, #tpu.memory_space<vmem>>, vector<1x8x2xf32>,
    %17 = arith.truncf %7 : vector<8x2048xf32> to vector<8x2048xbf16>
    %c0_11 = arith.constant 0 : index
    %c0_12 = arith.constant 0 : index
    %18 = vector.load %arg4[%c0_11, %c0_12] : memref<8x2048xbf16, #tpu.memory_space<vmem>>, vector<8x2048xbf16>
    tpu.vector_store %arg4[%c0_11, %c0_12], %17 {strides = array<i32>} : memref<8x2048xbf16, #tpu.memory_space<vmem>>, vector<8x2048xbf16>,
    return
  }
  func.func @transform_0(%arg0: i32) -> (i32, i32) {
    %c0_i32 = arith.constant 0 : i32
    %c0_i32_0 = arith.constant 0 : i32
    %c0_i32_1 = arith.constant 0 : i32
    return %c0_i32, %c0_i32_0 : i32, i32
  }
  func.func @transform_1(%arg0: i32) -> (i32, i32) {
    %c0_i32 = arith.constant 0 : i32
    %c0_i32_0 = arith.constant 0 : i32
    %c0_i32_1 = arith.constant 0 : i32
    return %c0_i32, %c0_i32_0 : i32, i32
  }
  func.func @transform_2(%arg0: i32) -> (i32, i32) {
    %c0_i32 = arith.constant 0 : i32
    %c0_i32_0 = arith.constant 0 : i32
    return %c0_i32, %arg0 : i32, i32
  }
  func.func @transform_3(%arg0: i32) -> (i32, i32) {
    %c0_i32 = arith.constant 0 : i32
    %c0_i32_0 = arith.constant 0 : i32
    return %c0_i32, %arg0 : i32, i32
  }
  func.func @transform_4(%arg0: i32) -> (i32, i32, i32) {
    %c0_i32 = arith.constant 0 : i32
    %c0_i32_0 = arith.constant 0 : i32
    %c0_i32_1 = arith.constant 0 : i32
    return %arg0, %c0_i32, %c0_i32_0 : i32, i32, i32
  }
}

module attributes {stable_mosaic.version = 11 : i64} {
  func.func @_gemm_relu_stats_kernel(%arg0: i32, %arg1: memref<16x72xbf16, #tpu.memory_space<vmem>>, %arg2: memref<16x1xf32, #tpu.memory_space<vmem>>, %arg3: memref<72x2048xbf16, #tpu.memory_space<vmem>>, %arg4: memref<16x2048xbf16, #tpu.memory_space<vmem>>, %arg5: memref<1x16x2xf32, #tpu.memory_space<vmem>>) attributes {dimension_semantics = [#tpu.dimension_semantics<parallel>], iteration_bounds = array<i64: 1>, scalar_prefetch = 0 : i64, scratch_operands = 0 : i64, tpu.core_type = #tpu.core_type<tc>, window_params = [{pipeline_mode = #tpu.pipeline_mode<synchronous>, transform_indices = @transform_0, window_bounds = array<i64: 16, 72>}, {pipeline_mode = #tpu.pipeline_mode<synchronous>, transform_indices = @transform_1, window_bounds = array<i64: 16, 1>}, {transform_indices = @transform_2, window_bounds = array<i64: 72, 2048>}, {transform_indices = @transform_3, window_bounds = array<i64: 16, 2048>}, {transform_indices = @transform_4, window_bounds = array<i64: 1, 16, 2>}]} {
    %c0 = arith.constant 0 : index
    %c0_0 = arith.constant 0 : index
    %0 = vector.load %arg1[%c0, %c0_0] : memref<16x72xbf16, #tpu.memory_space<vmem>>, vector<16x72xbf16>
    %c0_1 = arith.constant 0 : index
    %c0_2 = arith.constant 0 : index
    %1 = vector.load %arg3[%c0_1, %c0_2] : memref<72x2048xbf16, #tpu.memory_space<vmem>>, vector<72x2048xbf16>
    %cst = arith.constant dense<0.000000e+00> : vector<16x2048xf32>
    %2 = tpu.matmul %0, %1, %cst {dimension_numbers = #tpu.dot_dimension_numbers<[1], [0], [0], [1], [0, 0, 1, 1], [], []>} : vector<16x72xbf16>, vector<72x2048xbf16>, vector<16x2048xf32> -> vector<16x2048xf32>
    %c0_3 = arith.constant 0 : index
    %c0_4 = arith.constant 0 : index
    %3 = vector.load %arg2[%c0_3, %c0_4] : memref<16x1xf32, #tpu.memory_space<vmem>>, vector<16x1xf32>
    %4 = vector.broadcast %3 : vector<16x1xf32> to vector<16x2048xf32>
    %5 = arith.addf %2, %4 : vector<16x2048xf32>
    %cst_5 = arith.constant 0.000000e+00 : f32
    %6 = vector.broadcast %cst_5 : f32 to vector<16x2048xf32>
    %7 = arith.maximumf %5, %6 : vector<16x2048xf32>
    %cst_6 = arith.constant dense<0.000000e+00> : vector<16xf32>
    %8 = vector.multi_reduction <add>, %7, %cst_6 [1] : vector<16x2048xf32> to vector<16xf32>
    %9 = vector.shape_cast %8 : vector<16xf32> to vector<16x1xf32>
    %10 = arith.mulf %7, %7 : vector<16x2048xf32>
    %cst_7 = arith.constant dense<0.000000e+00> : vector<16xf32>
    %11 = vector.multi_reduction <add>, %10, %cst_7 [1] : vector<16x2048xf32> to vector<16xf32>
    %12 = vector.shape_cast %11 : vector<16xf32> to vector<16x1xf32>
    %13 = tpu.concatenate %9, %12 in 1 : vector<16x1xf32>, vector<16x1xf32> -> vector<16x2xf32>
    %c0_8 = arith.constant 0 : index
    %c0_9 = arith.constant 0 : index
    %c0_10 = arith.constant 0 : index
    %14 = vector.load %arg5[%c0_8, %c0_9, %c0_10] : memref<1x16x2xf32, #tpu.memory_space<vmem>>, vector<1x16x2xf32>
    %15 = vector.shape_cast %14 : vector<1x16x2xf32> to vector<16x2xf32>
    %16 = vector.shape_cast %13 : vector<16x2xf32> to vector<1x16x2xf32>
    tpu.vector_store %arg5[%c0_8, %c0_9, %c0_10], %16 {strides = array<i32>} : memref<1x16x2xf32, #tpu.memory_space<vmem>>, vector<1x16x2xf32>,
    %17 = arith.truncf %7 : vector<16x2048xf32> to vector<16x2048xbf16>
    %c0_11 = arith.constant 0 : index
    %c0_12 = arith.constant 0 : index
    %18 = vector.load %arg4[%c0_11, %c0_12] : memref<16x2048xbf16, #tpu.memory_space<vmem>>, vector<16x2048xbf16>
    tpu.vector_store %arg4[%c0_11, %c0_12], %17 {strides = array<i32>} : memref<16x2048xbf16, #tpu.memory_space<vmem>>, vector<16x2048xbf16>,
    return
  }
  func.func @transform_0(%arg0: i32) -> (i32, i32) {
    %c0_i32 = arith.constant 0 : i32
    %c0_i32_0 = arith.constant 0 : i32
    %c0_i32_1 = arith.constant 0 : i32
    return %c0_i32, %c0_i32_0 : i32, i32
  }
  func.func @transform_1(%arg0: i32) -> (i32, i32) {
    %c0_i32 = arith.constant 0 : i32
    %c0_i32_0 = arith.constant 0 : i32
    %c0_i32_1 = arith.constant 0 : i32
    return %c0_i32, %c0_i32_0 : i32, i32
  }
  func.func @transform_2(%arg0: i32) -> (i32, i32) {
    %c0_i32 = arith.constant 0 : i32
    %c0_i32_0 = arith.constant 0 : i32
    return %c0_i32, %arg0 : i32, i32
  }
  func.func @transform_3(%arg0: i32) -> (i32, i32) {
    %c0_i32 = arith.constant 0 : i32
    %c0_i32_0 = arith.constant 0 : i32
    return %c0_i32, %arg0 : i32, i32
  }
  func.func @transform_4(%arg0: i32) -> (i32, i32, i32) {
    %c0_i32 = arith.constant 0 : i32
    %c0_i32_0 = arith.constant 0 : i32
    %c0_i32_1 = arith.constant 0 : i32
    return %arg0, %c0_i32, %c0_i32_0 : i32, i32, i32
  }
}

module attributes {stable_mosaic.version = 11 : i64} {
  func.func @_gemm_relu_stats_kernel(%arg0: i32, %arg1: memref<8x16xbf16, #tpu.memory_space<vmem>>, %arg2: memref<8x1xf32, #tpu.memory_space<vmem>>, %arg3: memref<16x2048xbf16, #tpu.memory_space<vmem>>, %arg4: memref<8x2048xbf16, #tpu.memory_space<vmem>>, %arg5: memref<1x8x2xf32, #tpu.memory_space<vmem>>) attributes {dimension_semantics = [#tpu.dimension_semantics<parallel>], iteration_bounds = array<i64: 1>, scalar_prefetch = 0 : i64, scratch_operands = 0 : i64, tpu.core_type = #tpu.core_type<tc>, window_params = [{pipeline_mode = #tpu.pipeline_mode<synchronous>, transform_indices = @transform_0, window_bounds = array<i64: 8, 16>}, {pipeline_mode = #tpu.pipeline_mode<synchronous>, transform_indices = @transform_1, window_bounds = array<i64: 8, 1>}, {transform_indices = @transform_2, window_bounds = array<i64: 16, 2048>}, {transform_indices = @transform_3, window_bounds = array<i64: 8, 2048>}, {transform_indices = @transform_4, window_bounds = array<i64: 1, 8, 2>}]} {
    %c0 = arith.constant 0 : index
    %c0_0 = arith.constant 0 : index
    %0 = vector.load %arg1[%c0, %c0_0] : memref<8x16xbf16, #tpu.memory_space<vmem>>, vector<8x16xbf16>
    %c0_1 = arith.constant 0 : index
    %c0_2 = arith.constant 0 : index
    %1 = vector.load %arg3[%c0_1, %c0_2] : memref<16x2048xbf16, #tpu.memory_space<vmem>>, vector<16x2048xbf16>
    %cst = arith.constant dense<0.000000e+00> : vector<8x2048xf32>
    %2 = tpu.matmul %0, %1, %cst {dimension_numbers = #tpu.dot_dimension_numbers<[1], [0], [0], [1], [0, 0, 1, 1], [], []>} : vector<8x16xbf16>, vector<16x2048xbf16>, vector<8x2048xf32> -> vector<8x2048xf32>
    %c0_3 = arith.constant 0 : index
    %c0_4 = arith.constant 0 : index
    %3 = vector.load %arg2[%c0_3, %c0_4] : memref<8x1xf32, #tpu.memory_space<vmem>>, vector<8x1xf32>
    %4 = vector.broadcast %3 : vector<8x1xf32> to vector<8x2048xf32>
    %5 = arith.addf %2, %4 : vector<8x2048xf32>
    %cst_5 = arith.constant 0.000000e+00 : f32
    %6 = vector.broadcast %cst_5 : f32 to vector<8x2048xf32>
    %7 = arith.maximumf %5, %6 : vector<8x2048xf32>
    %cst_6 = arith.constant dense<0.000000e+00> : vector<8xf32>
    %8 = vector.multi_reduction <add>, %7, %cst_6 [1] : vector<8x2048xf32> to vector<8xf32>
    %9 = vector.shape_cast %8 : vector<8xf32> to vector<8x1xf32>
    %10 = arith.mulf %7, %7 : vector<8x2048xf32>
    %cst_7 = arith.constant dense<0.000000e+00> : vector<8xf32>
    %11 = vector.multi_reduction <add>, %10, %cst_7 [1] : vector<8x2048xf32> to vector<8xf32>
    %12 = vector.shape_cast %11 : vector<8xf32> to vector<8x1xf32>
    %13 = tpu.concatenate %9, %12 in 1 : vector<8x1xf32>, vector<8x1xf32> -> vector<8x2xf32>
    %c0_8 = arith.constant 0 : index
    %c0_9 = arith.constant 0 : index
    %c0_10 = arith.constant 0 : index
    %14 = vector.load %arg5[%c0_8, %c0_9, %c0_10] : memref<1x8x2xf32, #tpu.memory_space<vmem>>, vector<1x8x2xf32>
    %15 = vector.shape_cast %14 : vector<1x8x2xf32> to vector<8x2xf32>
    %16 = vector.shape_cast %13 : vector<8x2xf32> to vector<1x8x2xf32>
    tpu.vector_store %arg5[%c0_8, %c0_9, %c0_10], %16 {strides = array<i32>} : memref<1x8x2xf32, #tpu.memory_space<vmem>>, vector<1x8x2xf32>,
    %17 = arith.truncf %7 : vector<8x2048xf32> to vector<8x2048xbf16>
    %c0_11 = arith.constant 0 : index
    %c0_12 = arith.constant 0 : index
    %18 = vector.load %arg4[%c0_11, %c0_12] : memref<8x2048xbf16, #tpu.memory_space<vmem>>, vector<8x2048xbf16>
    tpu.vector_store %arg4[%c0_11, %c0_12], %17 {strides = array<i32>} : memref<8x2048xbf16, #tpu.memory_space<vmem>>, vector<8x2048xbf16>,
    return
  }
  func.func @transform_0(%arg0: i32) -> (i32, i32) {
    %c0_i32 = arith.constant 0 : i32
    %c0_i32_0 = arith.constant 0 : i32
    %c0_i32_1 = arith.constant 0 : i32
    return %c0_i32, %c0_i32_0 : i32, i32
  }
  func.func @transform_1(%arg0: i32) -> (i32, i32) {
    %c0_i32 = arith.constant 0 : i32
    %c0_i32_0 = arith.constant 0 : i32
    %c0_i32_1 = arith.constant 0 : i32
    return %c0_i32, %c0_i32_0 : i32, i32
  }
  func.func @transform_2(%arg0: i32) -> (i32, i32) {
    %c0_i32 = arith.constant 0 : i32
    %c0_i32_0 = arith.constant 0 : i32
    return %c0_i32, %arg0 : i32, i32
  }
  func.func @transform_3(%arg0: i32) -> (i32, i32) {
    %c0_i32 = arith.constant 0 : i32
    %c0_i32_0 = arith.constant 0 : i32
    return %c0_i32, %arg0 : i32, i32
  }
  func.func @transform_4(%arg0: i32) -> (i32, i32, i32) {
    %c0_i32 = arith.constant 0 : i32
    %c0_i32_0 = arith.constant 0 : i32
    %c0_i32_1 = arith.constant 0 : i32
    return %arg0, %c0_i32, %c0_i32_0 : i32, i32, i32
  }
}

module attributes {stable_mosaic.version = 11 : i64} {
  func.func @_gemm_relu_stats_kernel(%arg0: i32, %arg1: memref<16x72xbf16, #tpu.memory_space<vmem>>, %arg2: memref<16x1xf32, #tpu.memory_space<vmem>>, %arg3: memref<72x512xbf16, #tpu.memory_space<vmem>>, %arg4: memref<16x512xbf16, #tpu.memory_space<vmem>>, %arg5: memref<1x16x2xf32, #tpu.memory_space<vmem>>) attributes {dimension_semantics = [#tpu.dimension_semantics<parallel>], iteration_bounds = array<i64: 1>, scalar_prefetch = 0 : i64, scratch_operands = 0 : i64, tpu.core_type = #tpu.core_type<tc>, window_params = [{pipeline_mode = #tpu.pipeline_mode<synchronous>, transform_indices = @transform_0, window_bounds = array<i64: 16, 72>}, {pipeline_mode = #tpu.pipeline_mode<synchronous>, transform_indices = @transform_1, window_bounds = array<i64: 16, 1>}, {transform_indices = @transform_2, window_bounds = array<i64: 72, 512>}, {transform_indices = @transform_3, window_bounds = array<i64: 16, 512>}, {transform_indices = @transform_4, window_bounds = array<i64: 1, 16, 2>}]} {
    %c0 = arith.constant 0 : index
    %c0_0 = arith.constant 0 : index
    %0 = vector.load %arg1[%c0, %c0_0] : memref<16x72xbf16, #tpu.memory_space<vmem>>, vector<16x72xbf16>
    %c0_1 = arith.constant 0 : index
    %c0_2 = arith.constant 0 : index
    %1 = vector.load %arg3[%c0_1, %c0_2] : memref<72x512xbf16, #tpu.memory_space<vmem>>, vector<72x512xbf16>
    %cst = arith.constant dense<0.000000e+00> : vector<16x512xf32>
    %2 = tpu.matmul %0, %1, %cst {dimension_numbers = #tpu.dot_dimension_numbers<[1], [0], [0], [1], [0, 0, 1, 1], [], []>} : vector<16x72xbf16>, vector<72x512xbf16>, vector<16x512xf32> -> vector<16x512xf32>
    %c0_3 = arith.constant 0 : index
    %c0_4 = arith.constant 0 : index
    %3 = vector.load %arg2[%c0_3, %c0_4] : memref<16x1xf32, #tpu.memory_space<vmem>>, vector<16x1xf32>
    %4 = vector.broadcast %3 : vector<16x1xf32> to vector<16x512xf32>
    %5 = arith.addf %2, %4 : vector<16x512xf32>
    %cst_5 = arith.constant 0.000000e+00 : f32
    %6 = vector.broadcast %cst_5 : f32 to vector<16x512xf32>
    %7 = arith.maximumf %5, %6 : vector<16x512xf32>
    %cst_6 = arith.constant dense<0.000000e+00> : vector<16xf32>
    %8 = vector.multi_reduction <add>, %7, %cst_6 [1] : vector<16x512xf32> to vector<16xf32>
    %9 = vector.shape_cast %8 : vector<16xf32> to vector<16x1xf32>
    %10 = arith.mulf %7, %7 : vector<16x512xf32>
    %cst_7 = arith.constant dense<0.000000e+00> : vector<16xf32>
    %11 = vector.multi_reduction <add>, %10, %cst_7 [1] : vector<16x512xf32> to vector<16xf32>
    %12 = vector.shape_cast %11 : vector<16xf32> to vector<16x1xf32>
    %13 = tpu.concatenate %9, %12 in 1 : vector<16x1xf32>, vector<16x1xf32> -> vector<16x2xf32>
    %c0_8 = arith.constant 0 : index
    %c0_9 = arith.constant 0 : index
    %c0_10 = arith.constant 0 : index
    %14 = vector.load %arg5[%c0_8, %c0_9, %c0_10] : memref<1x16x2xf32, #tpu.memory_space<vmem>>, vector<1x16x2xf32>
    %15 = vector.shape_cast %14 : vector<1x16x2xf32> to vector<16x2xf32>
    %16 = vector.shape_cast %13 : vector<16x2xf32> to vector<1x16x2xf32>
    tpu.vector_store %arg5[%c0_8, %c0_9, %c0_10], %16 {strides = array<i32>} : memref<1x16x2xf32, #tpu.memory_space<vmem>>, vector<1x16x2xf32>,
    %17 = arith.truncf %7 : vector<16x512xf32> to vector<16x512xbf16>
    %c0_11 = arith.constant 0 : index
    %c0_12 = arith.constant 0 : index
    %18 = vector.load %arg4[%c0_11, %c0_12] : memref<16x512xbf16, #tpu.memory_space<vmem>>, vector<16x512xbf16>
    tpu.vector_store %arg4[%c0_11, %c0_12], %17 {strides = array<i32>} : memref<16x512xbf16, #tpu.memory_space<vmem>>, vector<16x512xbf16>,
    return
  }
  func.func @transform_0(%arg0: i32) -> (i32, i32) {
    %c0_i32 = arith.constant 0 : i32
    %c0_i32_0 = arith.constant 0 : i32
    %c0_i32_1 = arith.constant 0 : i32
    return %c0_i32, %c0_i32_0 : i32, i32
  }
  func.func @transform_1(%arg0: i32) -> (i32, i32) {
    %c0_i32 = arith.constant 0 : i32
    %c0_i32_0 = arith.constant 0 : i32
    %c0_i32_1 = arith.constant 0 : i32
    return %c0_i32, %c0_i32_0 : i32, i32
  }
  func.func @transform_2(%arg0: i32) -> (i32, i32) {
    %c0_i32 = arith.constant 0 : i32
    %c0_i32_0 = arith.constant 0 : i32
    return %c0_i32, %arg0 : i32, i32
  }
  func.func @transform_3(%arg0: i32) -> (i32, i32) {
    %c0_i32 = arith.constant 0 : i32
    %c0_i32_0 = arith.constant 0 : i32
    return %c0_i32, %arg0 : i32, i32
  }
  func.func @transform_4(%arg0: i32) -> (i32, i32, i32) {
    %c0_i32 = arith.constant 0 : i32
    %c0_i32_0 = arith.constant 0 : i32
    %c0_i32_1 = arith.constant 0 : i32
    return %arg0, %c0_i32, %c0_i32_0 : i32, i32, i32
  }
}

module attributes {stable_mosaic.version = 11 : i64} {
  func.func @_gemm_relu_stats_kernel(%arg0: i32, %arg1: memref<24x144xbf16, #tpu.memory_space<vmem>>, %arg2: memref<24x1xf32, #tpu.memory_space<vmem>>, %arg3: memref<144x512xbf16, #tpu.memory_space<vmem>>, %arg4: memref<24x512xbf16, #tpu.memory_space<vmem>>, %arg5: memref<1x24x2xf32, #tpu.memory_space<vmem>>) attributes {dimension_semantics = [#tpu.dimension_semantics<parallel>], iteration_bounds = array<i64: 1>, scalar_prefetch = 0 : i64, scratch_operands = 0 : i64, tpu.core_type = #tpu.core_type<tc>, window_params = [{pipeline_mode = #tpu.pipeline_mode<synchronous>, transform_indices = @transform_0, window_bounds = array<i64: 24, 144>}, {pipeline_mode = #tpu.pipeline_mode<synchronous>, transform_indices = @transform_1, window_bounds = array<i64: 24, 1>}, {transform_indices = @transform_2, window_bounds = array<i64: 144, 512>}, {transform_indices = @transform_3, window_bounds = array<i64: 24, 512>}, {transform_indices = @transform_4, window_bounds = array<i64: 1, 24, 2>}]} {
    %c0 = arith.constant 0 : index
    %c0_0 = arith.constant 0 : index
    %0 = vector.load %arg1[%c0, %c0_0] : memref<24x144xbf16, #tpu.memory_space<vmem>>, vector<24x144xbf16>
    %c0_1 = arith.constant 0 : index
    %c0_2 = arith.constant 0 : index
    %1 = vector.load %arg3[%c0_1, %c0_2] : memref<144x512xbf16, #tpu.memory_space<vmem>>, vector<144x512xbf16>
    %cst = arith.constant dense<0.000000e+00> : vector<24x512xf32>
    %2 = tpu.matmul %0, %1, %cst {dimension_numbers = #tpu.dot_dimension_numbers<[1], [0], [0], [1], [0, 0, 1, 1], [], []>} : vector<24x144xbf16>, vector<144x512xbf16>, vector<24x512xf32> -> vector<24x512xf32>
    %c0_3 = arith.constant 0 : index
    %c0_4 = arith.constant 0 : index
    %3 = vector.load %arg2[%c0_3, %c0_4] : memref<24x1xf32, #tpu.memory_space<vmem>>, vector<24x1xf32>
    %4 = vector.broadcast %3 : vector<24x1xf32> to vector<24x512xf32>
    %5 = arith.addf %2, %4 : vector<24x512xf32>
    %cst_5 = arith.constant 0.000000e+00 : f32
    %6 = vector.broadcast %cst_5 : f32 to vector<24x512xf32>
    %7 = arith.maximumf %5, %6 : vector<24x512xf32>
    %cst_6 = arith.constant dense<0.000000e+00> : vector<24xf32>
    %8 = vector.multi_reduction <add>, %7, %cst_6 [1] : vector<24x512xf32> to vector<24xf32>
    %9 = vector.shape_cast %8 : vector<24xf32> to vector<24x1xf32>
    %10 = arith.mulf %7, %7 : vector<24x512xf32>
    %cst_7 = arith.constant dense<0.000000e+00> : vector<24xf32>
    %11 = vector.multi_reduction <add>, %10, %cst_7 [1] : vector<24x512xf32> to vector<24xf32>
    %12 = vector.shape_cast %11 : vector<24xf32> to vector<24x1xf32>
    %13 = tpu.concatenate %9, %12 in 1 : vector<24x1xf32>, vector<24x1xf32> -> vector<24x2xf32>
    %c0_8 = arith.constant 0 : index
    %c0_9 = arith.constant 0 : index
    %c0_10 = arith.constant 0 : index
    %14 = vector.load %arg5[%c0_8, %c0_9, %c0_10] : memref<1x24x2xf32, #tpu.memory_space<vmem>>, vector<1x24x2xf32>
    %15 = vector.shape_cast %14 : vector<1x24x2xf32> to vector<24x2xf32>
    %16 = vector.shape_cast %13 : vector<24x2xf32> to vector<1x24x2xf32>
    tpu.vector_store %arg5[%c0_8, %c0_9, %c0_10], %16 {strides = array<i32>} : memref<1x24x2xf32, #tpu.memory_space<vmem>>, vector<1x24x2xf32>,
    %17 = arith.truncf %7 : vector<24x512xf32> to vector<24x512xbf16>
    %c0_11 = arith.constant 0 : index
    %c0_12 = arith.constant 0 : index
    %18 = vector.load %arg4[%c0_11, %c0_12] : memref<24x512xbf16, #tpu.memory_space<vmem>>, vector<24x512xbf16>
    tpu.vector_store %arg4[%c0_11, %c0_12], %17 {strides = array<i32>} : memref<24x512xbf16, #tpu.memory_space<vmem>>, vector<24x512xbf16>,
    return
  }
  func.func @transform_0(%arg0: i32) -> (i32, i32) {
    %c0_i32 = arith.constant 0 : i32
    %c0_i32_0 = arith.constant 0 : i32
    %c0_i32_1 = arith.constant 0 : i32
    return %c0_i32, %c0_i32_0 : i32, i32
  }
  func.func @transform_1(%arg0: i32) -> (i32, i32) {
    %c0_i32 = arith.constant 0 : i32
    %c0_i32_0 = arith.constant 0 : i32
    %c0_i32_1 = arith.constant 0 : i32
    return %c0_i32, %c0_i32_0 : i32, i32
  }
  func.func @transform_2(%arg0: i32) -> (i32, i32) {
    %c0_i32 = arith.constant 0 : i32
    %c0_i32_0 = arith.constant 0 : i32
    return %c0_i32, %arg0 : i32, i32
  }
  func.func @transform_3(%arg0: i32) -> (i32, i32) {
    %c0_i32 = arith.constant 0 : i32
    %c0_i32_0 = arith.constant 0 : i32
    return %c0_i32, %arg0 : i32, i32
  }
  func.func @transform_4(%arg0: i32) -> (i32, i32, i32) {
    %c0_i32 = arith.constant 0 : i32
    %c0_i32_0 = arith.constant 0 : i32
    %c0_i32_1 = arith.constant 0 : i32
    return %arg0, %c0_i32, %c0_i32_0 : i32, i32, i32
  }
}

module attributes {stable_mosaic.version = 11 : i64} {
  func.func @_gemm_relu_stats_kernel(%arg0: i32, %arg1: memref<32x216xbf16, #tpu.memory_space<vmem>>, %arg2: memref<32x1xf32, #tpu.memory_space<vmem>>, %arg3: memref<216x512xbf16, #tpu.memory_space<vmem>>, %arg4: memref<32x512xbf16, #tpu.memory_space<vmem>>, %arg5: memref<1x32x2xf32, #tpu.memory_space<vmem>>) attributes {dimension_semantics = [#tpu.dimension_semantics<parallel>], iteration_bounds = array<i64: 1>, scalar_prefetch = 0 : i64, scratch_operands = 0 : i64, tpu.core_type = #tpu.core_type<tc>, window_params = [{pipeline_mode = #tpu.pipeline_mode<synchronous>, transform_indices = @transform_0, window_bounds = array<i64: 32, 216>}, {pipeline_mode = #tpu.pipeline_mode<synchronous>, transform_indices = @transform_1, window_bounds = array<i64: 32, 1>}, {transform_indices = @transform_2, window_bounds = array<i64: 216, 512>}, {transform_indices = @transform_3, window_bounds = array<i64: 32, 512>}, {transform_indices = @transform_4, window_bounds = array<i64: 1, 32, 2>}]} {
    %c0 = arith.constant 0 : index
    %c0_0 = arith.constant 0 : index
    %0 = vector.load %arg1[%c0, %c0_0] : memref<32x216xbf16, #tpu.memory_space<vmem>>, vector<32x216xbf16>
    %c0_1 = arith.constant 0 : index
    %c0_2 = arith.constant 0 : index
    %1 = vector.load %arg3[%c0_1, %c0_2] : memref<216x512xbf16, #tpu.memory_space<vmem>>, vector<216x512xbf16>
    %cst = arith.constant dense<0.000000e+00> : vector<32x512xf32>
    %2 = tpu.matmul %0, %1, %cst {dimension_numbers = #tpu.dot_dimension_numbers<[1], [0], [0], [1], [0, 0, 1, 1], [], []>} : vector<32x216xbf16>, vector<216x512xbf16>, vector<32x512xf32> -> vector<32x512xf32>
    %c0_3 = arith.constant 0 : index
    %c0_4 = arith.constant 0 : index
    %3 = vector.load %arg2[%c0_3, %c0_4] : memref<32x1xf32, #tpu.memory_space<vmem>>, vector<32x1xf32>
    %4 = vector.broadcast %3 : vector<32x1xf32> to vector<32x512xf32>
    %5 = arith.addf %2, %4 : vector<32x512xf32>
    %cst_5 = arith.constant 0.000000e+00 : f32
    %6 = vector.broadcast %cst_5 : f32 to vector<32x512xf32>
    %7 = arith.maximumf %5, %6 : vector<32x512xf32>
    %cst_6 = arith.constant dense<0.000000e+00> : vector<32xf32>
    %8 = vector.multi_reduction <add>, %7, %cst_6 [1] : vector<32x512xf32> to vector<32xf32>
    %9 = vector.shape_cast %8 : vector<32xf32> to vector<32x1xf32>
    %10 = arith.mulf %7, %7 : vector<32x512xf32>
    %cst_7 = arith.constant dense<0.000000e+00> : vector<32xf32>
    %11 = vector.multi_reduction <add>, %10, %cst_7 [1] : vector<32x512xf32> to vector<32xf32>
    %12 = vector.shape_cast %11 : vector<32xf32> to vector<32x1xf32>
    %13 = tpu.concatenate %9, %12 in 1 : vector<32x1xf32>, vector<32x1xf32> -> vector<32x2xf32>
    %c0_8 = arith.constant 0 : index
    %c0_9 = arith.constant 0 : index
    %c0_10 = arith.constant 0 : index
    %14 = vector.load %arg5[%c0_8, %c0_9, %c0_10] : memref<1x32x2xf32, #tpu.memory_space<vmem>>, vector<1x32x2xf32>
    %15 = vector.shape_cast %14 : vector<1x32x2xf32> to vector<32x2xf32>
    %16 = vector.shape_cast %13 : vector<32x2xf32> to vector<1x32x2xf32>
    tpu.vector_store %arg5[%c0_8, %c0_9, %c0_10], %16 {strides = array<i32>} : memref<1x32x2xf32, #tpu.memory_space<vmem>>, vector<1x32x2xf32>,
    %17 = arith.truncf %7 : vector<32x512xf32> to vector<32x512xbf16>
    %c0_11 = arith.constant 0 : index
    %c0_12 = arith.constant 0 : index
    %18 = vector.load %arg4[%c0_11, %c0_12] : memref<32x512xbf16, #tpu.memory_space<vmem>>, vector<32x512xbf16>
    tpu.vector_store %arg4[%c0_11, %c0_12], %17 {strides = array<i32>} : memref<32x512xbf16, #tpu.memory_space<vmem>>, vector<32x512xbf16>,
    return
  }
  func.func @transform_0(%arg0: i32) -> (i32, i32) {
    %c0_i32 = arith.constant 0 : i32
    %c0_i32_0 = arith.constant 0 : i32
    %c0_i32_1 = arith.constant 0 : i32
    return %c0_i32, %c0_i32_0 : i32, i32
  }
  func.func @transform_1(%arg0: i32) -> (i32, i32) {
    %c0_i32 = arith.constant 0 : i32
    %c0_i32_0 = arith.constant 0 : i32
    %c0_i32_1 = arith.constant 0 : i32
    return %c0_i32, %c0_i32_0 : i32, i32
  }
  func.func @transform_2(%arg0: i32) -> (i32, i32) {
    %c0_i32 = arith.constant 0 : i32
    %c0_i32_0 = arith.constant 0 : i32
    return %c0_i32, %arg0 : i32, i32
  }
  func.func @transform_3(%arg0: i32) -> (i32, i32) {
    %c0_i32 = arith.constant 0 : i32
    %c0_i32_0 = arith.constant 0 : i32
    return %c0_i32, %arg0 : i32, i32
  }
  func.func @transform_4(%arg0: i32) -> (i32, i32, i32) {
    %c0_i32 = arith.constant 0 : i32
    %c0_i32_0 = arith.constant 0 : i32
    %c0_i32_1 = arith.constant 0 : i32
    return %arg0, %c0_i32, %c0_i32_0 : i32, i32, i32
  }
}

module attributes {stable_mosaic.version = 11 : i64} {
  func.func @_gemm_relu_stats_kernel(%arg0: i32, %arg1: memref<8x32xbf16, #tpu.memory_space<vmem>>, %arg2: memref<8x1xf32, #tpu.memory_space<vmem>>, %arg3: memref<32x512xbf16, #tpu.memory_space<vmem>>, %arg4: memref<8x512xbf16, #tpu.memory_space<vmem>>, %arg5: memref<1x8x2xf32, #tpu.memory_space<vmem>>) attributes {dimension_semantics = [#tpu.dimension_semantics<parallel>], iteration_bounds = array<i64: 1>, scalar_prefetch = 0 : i64, scratch_operands = 0 : i64, tpu.core_type = #tpu.core_type<tc>, window_params = [{pipeline_mode = #tpu.pipeline_mode<synchronous>, transform_indices = @transform_0, window_bounds = array<i64: 8, 32>}, {pipeline_mode = #tpu.pipeline_mode<synchronous>, transform_indices = @transform_1, window_bounds = array<i64: 8, 1>}, {transform_indices = @transform_2, window_bounds = array<i64: 32, 512>}, {transform_indices = @transform_3, window_bounds = array<i64: 8, 512>}, {transform_indices = @transform_4, window_bounds = array<i64: 1, 8, 2>}]} {
    %c0 = arith.constant 0 : index
    %c0_0 = arith.constant 0 : index
    %0 = vector.load %arg1[%c0, %c0_0] : memref<8x32xbf16, #tpu.memory_space<vmem>>, vector<8x32xbf16>
    %c0_1 = arith.constant 0 : index
    %c0_2 = arith.constant 0 : index
    %1 = vector.load %arg3[%c0_1, %c0_2] : memref<32x512xbf16, #tpu.memory_space<vmem>>, vector<32x512xbf16>
    %cst = arith.constant dense<0.000000e+00> : vector<8x512xf32>
    %2 = tpu.matmul %0, %1, %cst {dimension_numbers = #tpu.dot_dimension_numbers<[1], [0], [0], [1], [0, 0, 1, 1], [], []>} : vector<8x32xbf16>, vector<32x512xbf16>, vector<8x512xf32> -> vector<8x512xf32>
    %c0_3 = arith.constant 0 : index
    %c0_4 = arith.constant 0 : index
    %3 = vector.load %arg2[%c0_3, %c0_4] : memref<8x1xf32, #tpu.memory_space<vmem>>, vector<8x1xf32>
    %4 = vector.broadcast %3 : vector<8x1xf32> to vector<8x512xf32>
    %5 = arith.addf %2, %4 : vector<8x512xf32>
    %cst_5 = arith.constant 0.000000e+00 : f32
    %6 = vector.broadcast %cst_5 : f32 to vector<8x512xf32>
    %7 = arith.maximumf %5, %6 : vector<8x512xf32>
    %cst_6 = arith.constant dense<0.000000e+00> : vector<8xf32>
    %8 = vector.multi_reduction <add>, %7, %cst_6 [1] : vector<8x512xf32> to vector<8xf32>
    %9 = vector.shape_cast %8 : vector<8xf32> to vector<8x1xf32>
    %10 = arith.mulf %7, %7 : vector<8x512xf32>
    %cst_7 = arith.constant dense<0.000000e+00> : vector<8xf32>
    %11 = vector.multi_reduction <add>, %10, %cst_7 [1] : vector<8x512xf32> to vector<8xf32>
    %12 = vector.shape_cast %11 : vector<8xf32> to vector<8x1xf32>
    %13 = tpu.concatenate %9, %12 in 1 : vector<8x1xf32>, vector<8x1xf32> -> vector<8x2xf32>
    %c0_8 = arith.constant 0 : index
    %c0_9 = arith.constant 0 : index
    %c0_10 = arith.constant 0 : index
    %14 = vector.load %arg5[%c0_8, %c0_9, %c0_10] : memref<1x8x2xf32, #tpu.memory_space<vmem>>, vector<1x8x2xf32>
    %15 = vector.shape_cast %14 : vector<1x8x2xf32> to vector<8x2xf32>
    %16 = vector.shape_cast %13 : vector<8x2xf32> to vector<1x8x2xf32>
    tpu.vector_store %arg5[%c0_8, %c0_9, %c0_10], %16 {strides = array<i32>} : memref<1x8x2xf32, #tpu.memory_space<vmem>>, vector<1x8x2xf32>,
    %17 = arith.truncf %7 : vector<8x512xf32> to vector<8x512xbf16>
    %c0_11 = arith.constant 0 : index
    %c0_12 = arith.constant 0 : index
    %18 = vector.load %arg4[%c0_11, %c0_12] : memref<8x512xbf16, #tpu.memory_space<vmem>>, vector<8x512xbf16>
    tpu.vector_store %arg4[%c0_11, %c0_12], %17 {strides = array<i32>} : memref<8x512xbf16, #tpu.memory_space<vmem>>, vector<8x512xbf16>,
    return
  }
  func.func @transform_0(%arg0: i32) -> (i32, i32) {
    %c0_i32 = arith.constant 0 : i32
    %c0_i32_0 = arith.constant 0 : i32
    %c0_i32_1 = arith.constant 0 : i32
    return %c0_i32, %c0_i32_0 : i32, i32
  }
  func.func @transform_1(%arg0: i32) -> (i32, i32) {
    %c0_i32 = arith.constant 0 : i32
    %c0_i32_0 = arith.constant 0 : i32
    %c0_i32_1 = arith.constant 0 : i32
    return %c0_i32, %c0_i32_0 : i32, i32
  }
  func.func @transform_2(%arg0: i32) -> (i32, i32) {
    %c0_i32 = arith.constant 0 : i32
    %c0_i32_0 = arith.constant 0 : i32
    return %c0_i32, %arg0 : i32, i32
  }
  func.func @transform_3(%arg0: i32) -> (i32, i32) {
    %c0_i32 = arith.constant 0 : i32
    %c0_i32_0 = arith.constant 0 : i32
    return %c0_i32, %arg0 : i32, i32
  }
  func.func @transform_4(%arg0: i32) -> (i32, i32, i32) {
    %c0_i32 = arith.constant 0 : i32
    %c0_i32_0 = arith.constant 0 : i32
    %c0_i32_1 = arith.constant 0 : i32
    return %arg0, %c0_i32, %c0_i32_0 : i32, i32, i32
  }
}

module attributes {stable_mosaic.version = 11 : i64} {
  func.func @_gemm_relu_stats_kernel(%arg0: i32, %arg1: memref<16x72xbf16, #tpu.memory_space<vmem>>, %arg2: memref<16x1xf32, #tpu.memory_space<vmem>>, %arg3: memref<72x128xbf16, #tpu.memory_space<vmem>>, %arg4: memref<16x128xbf16, #tpu.memory_space<vmem>>, %arg5: memref<1x16x2xf32, #tpu.memory_space<vmem>>) attributes {dimension_semantics = [#tpu.dimension_semantics<parallel>], iteration_bounds = array<i64: 1>, scalar_prefetch = 0 : i64, scratch_operands = 0 : i64, tpu.core_type = #tpu.core_type<tc>, window_params = [{pipeline_mode = #tpu.pipeline_mode<synchronous>, transform_indices = @transform_0, window_bounds = array<i64: 16, 72>}, {pipeline_mode = #tpu.pipeline_mode<synchronous>, transform_indices = @transform_1, window_bounds = array<i64: 16, 1>}, {transform_indices = @transform_2, window_bounds = array<i64: 72, 128>}, {transform_indices = @transform_3, window_bounds = array<i64: 16, 128>}, {transform_indices = @transform_4, window_bounds = array<i64: 1, 16, 2>}]} {
    %c0 = arith.constant 0 : index
    %c0_0 = arith.constant 0 : index
    %0 = vector.load %arg1[%c0, %c0_0] : memref<16x72xbf16, #tpu.memory_space<vmem>>, vector<16x72xbf16>
    %c0_1 = arith.constant 0 : index
    %c0_2 = arith.constant 0 : index
    %1 = vector.load %arg3[%c0_1, %c0_2] : memref<72x128xbf16, #tpu.memory_space<vmem>>, vector<72x128xbf16>
    %cst = arith.constant dense<0.000000e+00> : vector<16x128xf32>
    %2 = tpu.matmul %0, %1, %cst {dimension_numbers = #tpu.dot_dimension_numbers<[1], [0], [0], [1], [0, 0, 1, 1], [], []>} : vector<16x72xbf16>, vector<72x128xbf16>, vector<16x128xf32> -> vector<16x128xf32>
    %c0_3 = arith.constant 0 : index
    %c0_4 = arith.constant 0 : index
    %3 = vector.load %arg2[%c0_3, %c0_4] : memref<16x1xf32, #tpu.memory_space<vmem>>, vector<16x1xf32>
    %4 = vector.broadcast %3 : vector<16x1xf32> to vector<16x128xf32>
    %5 = arith.addf %2, %4 : vector<16x128xf32>
    %cst_5 = arith.constant 0.000000e+00 : f32
    %6 = vector.broadcast %cst_5 : f32 to vector<16x128xf32>
    %7 = arith.maximumf %5, %6 : vector<16x128xf32>
    %cst_6 = arith.constant dense<0.000000e+00> : vector<16xf32>
    %8 = vector.multi_reduction <add>, %7, %cst_6 [1] : vector<16x128xf32> to vector<16xf32>
    %9 = vector.shape_cast %8 : vector<16xf32> to vector<16x1xf32>
    %10 = arith.mulf %7, %7 : vector<16x128xf32>
    %cst_7 = arith.constant dense<0.000000e+00> : vector<16xf32>
    %11 = vector.multi_reduction <add>, %10, %cst_7 [1] : vector<16x128xf32> to vector<16xf32>
    %12 = vector.shape_cast %11 : vector<16xf32> to vector<16x1xf32>
    %13 = tpu.concatenate %9, %12 in 1 : vector<16x1xf32>, vector<16x1xf32> -> vector<16x2xf32>
    %c0_8 = arith.constant 0 : index
    %c0_9 = arith.constant 0 : index
    %c0_10 = arith.constant 0 : index
    %14 = vector.load %arg5[%c0_8, %c0_9, %c0_10] : memref<1x16x2xf32, #tpu.memory_space<vmem>>, vector<1x16x2xf32>
    %15 = vector.shape_cast %14 : vector<1x16x2xf32> to vector<16x2xf32>
    %16 = vector.shape_cast %13 : vector<16x2xf32> to vector<1x16x2xf32>
    tpu.vector_store %arg5[%c0_8, %c0_9, %c0_10], %16 {strides = array<i32>} : memref<1x16x2xf32, #tpu.memory_space<vmem>>, vector<1x16x2xf32>,
    %17 = arith.truncf %7 : vector<16x128xf32> to vector<16x128xbf16>
    %c0_11 = arith.constant 0 : index
    %c0_12 = arith.constant 0 : index
    %18 = vector.load %arg4[%c0_11, %c0_12] : memref<16x128xbf16, #tpu.memory_space<vmem>>, vector<16x128xbf16>
    tpu.vector_store %arg4[%c0_11, %c0_12], %17 {strides = array<i32>} : memref<16x128xbf16, #tpu.memory_space<vmem>>, vector<16x128xbf16>,
    return
  }
  func.func @transform_0(%arg0: i32) -> (i32, i32) {
    %c0_i32 = arith.constant 0 : i32
    %c0_i32_0 = arith.constant 0 : i32
    %c0_i32_1 = arith.constant 0 : i32
    return %c0_i32, %c0_i32_0 : i32, i32
  }
  func.func @transform_1(%arg0: i32) -> (i32, i32) {
    %c0_i32 = arith.constant 0 : i32
    %c0_i32_0 = arith.constant 0 : i32
    %c0_i32_1 = arith.constant 0 : i32
    return %c0_i32, %c0_i32_0 : i32, i32
  }
  func.func @transform_2(%arg0: i32) -> (i32, i32) {
    %c0_i32 = arith.constant 0 : i32
    %c0_i32_0 = arith.constant 0 : i32
    return %c0_i32, %arg0 : i32, i32
  }
  func.func @transform_3(%arg0: i32) -> (i32, i32) {
    %c0_i32 = arith.constant 0 : i32
    %c0_i32_0 = arith.constant 0 : i32
    return %c0_i32, %arg0 : i32, i32
  }
  func.func @transform_4(%arg0: i32) -> (i32, i32, i32) {
    %c0_i32 = arith.constant 0 : i32
    %c0_i32_0 = arith.constant 0 : i32
    %c0_i32_1 = arith.constant 0 : i32
    return %arg0, %c0_i32, %c0_i32_0 : i32, i32, i32
  }
}

module attributes {stable_mosaic.version = 11 : i64} {
  func.func @_gemm_relu_stats_kernel(%arg0: i32, %arg1: memref<32x144xbf16, #tpu.memory_space<vmem>>, %arg2: memref<32x1xf32, #tpu.memory_space<vmem>>, %arg3: memref<144x128xbf16, #tpu.memory_space<vmem>>, %arg4: memref<32x128xbf16, #tpu.memory_space<vmem>>, %arg5: memref<1x32x2xf32, #tpu.memory_space<vmem>>) attributes {dimension_semantics = [#tpu.dimension_semantics<parallel>], iteration_bounds = array<i64: 1>, scalar_prefetch = 0 : i64, scratch_operands = 0 : i64, tpu.core_type = #tpu.core_type<tc>, window_params = [{pipeline_mode = #tpu.pipeline_mode<synchronous>, transform_indices = @transform_0, window_bounds = array<i64: 32, 144>}, {pipeline_mode = #tpu.pipeline_mode<synchronous>, transform_indices = @transform_1, window_bounds = array<i64: 32, 1>}, {transform_indices = @transform_2, window_bounds = array<i64: 144, 128>}, {transform_indices = @transform_3, window_bounds = array<i64: 32, 128>}, {transform_indices = @transform_4, window_bounds = array<i64: 1, 32, 2>}]} {
    %c0 = arith.constant 0 : index
    %c0_0 = arith.constant 0 : index
    %0 = vector.load %arg1[%c0, %c0_0] : memref<32x144xbf16, #tpu.memory_space<vmem>>, vector<32x144xbf16>
    %c0_1 = arith.constant 0 : index
    %c0_2 = arith.constant 0 : index
    %1 = vector.load %arg3[%c0_1, %c0_2] : memref<144x128xbf16, #tpu.memory_space<vmem>>, vector<144x128xbf16>
    %cst = arith.constant dense<0.000000e+00> : vector<32x128xf32>
    %2 = tpu.matmul %0, %1, %cst {dimension_numbers = #tpu.dot_dimension_numbers<[1], [0], [0], [1], [0, 0, 1, 1], [], []>} : vector<32x144xbf16>, vector<144x128xbf16>, vector<32x128xf32> -> vector<32x128xf32>
    %c0_3 = arith.constant 0 : index
    %c0_4 = arith.constant 0 : index
    %3 = vector.load %arg2[%c0_3, %c0_4] : memref<32x1xf32, #tpu.memory_space<vmem>>, vector<32x1xf32>
    %4 = vector.broadcast %3 : vector<32x1xf32> to vector<32x128xf32>
    %5 = arith.addf %2, %4 : vector<32x128xf32>
    %cst_5 = arith.constant 0.000000e+00 : f32
    %6 = vector.broadcast %cst_5 : f32 to vector<32x128xf32>
    %7 = arith.maximumf %5, %6 : vector<32x128xf32>
    %cst_6 = arith.constant dense<0.000000e+00> : vector<32xf32>
    %8 = vector.multi_reduction <add>, %7, %cst_6 [1] : vector<32x128xf32> to vector<32xf32>
    %9 = vector.shape_cast %8 : vector<32xf32> to vector<32x1xf32>
    %10 = arith.mulf %7, %7 : vector<32x128xf32>
    %cst_7 = arith.constant dense<0.000000e+00> : vector<32xf32>
    %11 = vector.multi_reduction <add>, %10, %cst_7 [1] : vector<32x128xf32> to vector<32xf32>
    %12 = vector.shape_cast %11 : vector<32xf32> to vector<32x1xf32>
    %13 = tpu.concatenate %9, %12 in 1 : vector<32x1xf32>, vector<32x1xf32> -> vector<32x2xf32>
    %c0_8 = arith.constant 0 : index
    %c0_9 = arith.constant 0 : index
    %c0_10 = arith.constant 0 : index
    %14 = vector.load %arg5[%c0_8, %c0_9, %c0_10] : memref<1x32x2xf32, #tpu.memory_space<vmem>>, vector<1x32x2xf32>
    %15 = vector.shape_cast %14 : vector<1x32x2xf32> to vector<32x2xf32>
    %16 = vector.shape_cast %13 : vector<32x2xf32> to vector<1x32x2xf32>
    tpu.vector_store %arg5[%c0_8, %c0_9, %c0_10], %16 {strides = array<i32>} : memref<1x32x2xf32, #tpu.memory_space<vmem>>, vector<1x32x2xf32>,
    %17 = arith.truncf %7 : vector<32x128xf32> to vector<32x128xbf16>
    %c0_11 = arith.constant 0 : index
    %c0_12 = arith.constant 0 : index
    %18 = vector.load %arg4[%c0_11, %c0_12] : memref<32x128xbf16, #tpu.memory_space<vmem>>, vector<32x128xbf16>
    tpu.vector_store %arg4[%c0_11, %c0_12], %17 {strides = array<i32>} : memref<32x128xbf16, #tpu.memory_space<vmem>>, vector<32x128xbf16>,
    return
  }
  func.func @transform_0(%arg0: i32) -> (i32, i32) {
    %c0_i32 = arith.constant 0 : i32
    %c0_i32_0 = arith.constant 0 : i32
    %c0_i32_1 = arith.constant 0 : i32
    return %c0_i32, %c0_i32_0 : i32, i32
  }
  func.func @transform_1(%arg0: i32) -> (i32, i32) {
    %c0_i32 = arith.constant 0 : i32
    %c0_i32_0 = arith.constant 0 : i32
    %c0_i32_1 = arith.constant 0 : i32
    return %c0_i32, %c0_i32_0 : i32, i32
  }
  func.func @transform_2(%arg0: i32) -> (i32, i32) {
    %c0_i32 = arith.constant 0 : i32
    %c0_i32_0 = arith.constant 0 : i32
    return %c0_i32, %arg0 : i32, i32
  }
  func.func @transform_3(%arg0: i32) -> (i32, i32) {
    %c0_i32 = arith.constant 0 : i32
    %c0_i32_0 = arith.constant 0 : i32
    return %c0_i32, %arg0 : i32, i32
  }
  func.func @transform_4(%arg0: i32) -> (i32, i32, i32) {
    %c0_i32 = arith.constant 0 : i32
    %c0_i32_0 = arith.constant 0 : i32
    %c0_i32_1 = arith.constant 0 : i32
    return %arg0, %c0_i32, %c0_i32_0 : i32, i32, i32
  }
}

module attributes {stable_mosaic.version = 11 : i64} {
  func.func @_gemm_relu_stats_kernel(%arg0: i32, %arg1: memref<48x288xbf16, #tpu.memory_space<vmem>>, %arg2: memref<48x1xf32, #tpu.memory_space<vmem>>, %arg3: memref<288x72xbf16, #tpu.memory_space<vmem>>, %arg4: memref<48x72xbf16, #tpu.memory_space<vmem>>, %arg5: memref<1x48x2xf32, #tpu.memory_space<vmem>>) attributes {dimension_semantics = [#tpu.dimension_semantics<parallel>], iteration_bounds = array<i64: 1>, scalar_prefetch = 0 : i64, scratch_operands = 0 : i64, tpu.core_type = #tpu.core_type<tc>, window_params = [{pipeline_mode = #tpu.pipeline_mode<synchronous>, transform_indices = @transform_0, window_bounds = array<i64: 48, 288>}, {pipeline_mode = #tpu.pipeline_mode<synchronous>, transform_indices = @transform_1, window_bounds = array<i64: 48, 1>}, {transform_indices = @transform_2, window_bounds = array<i64: 288, 72>}, {transform_indices = @transform_3, window_bounds = array<i64: 48, 72>}, {transform_indices = @transform_4, window_bounds = array<i64: 1, 48, 2>}]} {
    %c0 = arith.constant 0 : index
    %c0_0 = arith.constant 0 : index
    %0 = vector.load %arg1[%c0, %c0_0] : memref<48x288xbf16, #tpu.memory_space<vmem>>, vector<48x288xbf16>
    %c0_1 = arith.constant 0 : index
    %c0_2 = arith.constant 0 : index
    %1 = vector.load %arg3[%c0_1, %c0_2] : memref<288x72xbf16, #tpu.memory_space<vmem>>, vector<288x72xbf16>
    %cst = arith.constant dense<0.000000e+00> : vector<48x72xf32>
    %2 = tpu.matmul %0, %1, %cst {dimension_numbers = #tpu.dot_dimension_numbers<[1], [0], [0], [1], [0, 0, 1, 1], [], []>} : vector<48x288xbf16>, vector<288x72xbf16>, vector<48x72xf32> -> vector<48x72xf32>
    %c0_3 = arith.constant 0 : index
    %c0_4 = arith.constant 0 : index
    %3 = vector.load %arg2[%c0_3, %c0_4] : memref<48x1xf32, #tpu.memory_space<vmem>>, vector<48x1xf32>
    %4 = vector.broadcast %3 : vector<48x1xf32> to vector<48x72xf32>
    %5 = arith.addf %2, %4 : vector<48x72xf32>
    %cst_5 = arith.constant 0.000000e+00 : f32
    %6 = vector.broadcast %cst_5 : f32 to vector<48x72xf32>
    %7 = arith.maximumf %5, %6 : vector<48x72xf32>
    %cst_6 = arith.constant dense<0.000000e+00> : vector<48xf32>
    %8 = vector.multi_reduction <add>, %7, %cst_6 [1] : vector<48x72xf32> to vector<48xf32>
    %9 = vector.shape_cast %8 : vector<48xf32> to vector<48x1xf32>
    %10 = arith.mulf %7, %7 : vector<48x72xf32>
    %cst_7 = arith.constant dense<0.000000e+00> : vector<48xf32>
    %11 = vector.multi_reduction <add>, %10, %cst_7 [1] : vector<48x72xf32> to vector<48xf32>
    %12 = vector.shape_cast %11 : vector<48xf32> to vector<48x1xf32>
    %13 = tpu.concatenate %9, %12 in 1 : vector<48x1xf32>, vector<48x1xf32> -> vector<48x2xf32>
    %c0_8 = arith.constant 0 : index
    %c0_9 = arith.constant 0 : index
    %c0_10 = arith.constant 0 : index
    %14 = vector.load %arg5[%c0_8, %c0_9, %c0_10] : memref<1x48x2xf32, #tpu.memory_space<vmem>>, vector<1x48x2xf32>
    %15 = vector.shape_cast %14 : vector<1x48x2xf32> to vector<48x2xf32>
    %16 = vector.shape_cast %13 : vector<48x2xf32> to vector<1x48x2xf32>
    tpu.vector_store %arg5[%c0_8, %c0_9, %c0_10], %16 {strides = array<i32>} : memref<1x48x2xf32, #tpu.memory_space<vmem>>, vector<1x48x2xf32>,
    %17 = arith.truncf %7 : vector<48x72xf32> to vector<48x72xbf16>
    %c0_11 = arith.constant 0 : index
    %c0_12 = arith.constant 0 : index
    %18 = vector.load %arg4[%c0_11, %c0_12] : memref<48x72xbf16, #tpu.memory_space<vmem>>, vector<48x72xbf16>
    tpu.vector_store %arg4[%c0_11, %c0_12], %17 {strides = array<i32>} : memref<48x72xbf16, #tpu.memory_space<vmem>>, vector<48x72xbf16>,
    return
  }
  func.func @transform_0(%arg0: i32) -> (i32, i32) {
    %c0_i32 = arith.constant 0 : i32
    %c0_i32_0 = arith.constant 0 : i32
    %c0_i32_1 = arith.constant 0 : i32
    return %c0_i32, %c0_i32_0 : i32, i32
  }
  func.func @transform_1(%arg0: i32) -> (i32, i32) {
    %c0_i32 = arith.constant 0 : i32
    %c0_i32_0 = arith.constant 0 : i32
    %c0_i32_1 = arith.constant 0 : i32
    return %c0_i32, %c0_i32_0 : i32, i32
  }
  func.func @transform_2(%arg0: i32) -> (i32, i32) {
    %c0_i32 = arith.constant 0 : i32
    %c0_i32_0 = arith.constant 0 : i32
    return %c0_i32, %arg0 : i32, i32
  }
  func.func @transform_3(%arg0: i32) -> (i32, i32) {
    %c0_i32 = arith.constant 0 : i32
    %c0_i32_0 = arith.constant 0 : i32
    return %c0_i32, %arg0 : i32, i32
  }
  func.func @transform_4(%arg0: i32) -> (i32, i32, i32) {
    %c0_i32 = arith.constant 0 : i32
    %c0_i32_0 = arith.constant 0 : i32
    %c0_i32_1 = arith.constant 0 : i32
    return %arg0, %c0_i32, %c0_i32_0 : i32, i32, i32
  }
}

module attributes {stable_mosaic.version = 11 : i64} {
  func.func @_head_kernel(%arg0: i32, %arg1: memref<2x36x48xbf16, #tpu.memory_space<vmem>>, %arg2: memref<48x10xf32, #tpu.memory_space<vmem>>, %arg3: memref<1x10xf32, #tpu.memory_space<vmem>>, %arg4: memref<2x10xf32, #tpu.memory_space<vmem>>) attributes {dimension_semantics = [#tpu.dimension_semantics<arbitrary>], iteration_bounds = array<i64: 1>, scalar_prefetch = 0 : i64, scratch_operands = 0 : i64, tpu.core_type = #tpu.core_type<tc>, window_params = [{pipeline_mode = #tpu.pipeline_mode<synchronous>, transform_indices = @transform_0, window_bounds = array<i64: 2, 36, 48>}, {pipeline_mode = #tpu.pipeline_mode<synchronous>, transform_indices = @transform_1, window_bounds = array<i64: 48, 10>}, {pipeline_mode = #tpu.pipeline_mode<synchronous>, transform_indices = @transform_2, window_bounds = array<i64: 1, 10>}, {pipeline_mode = #tpu.pipeline_mode<synchronous>, transform_indices = @transform_3, window_bounds = array<i64: 2, 10>}]} {
    %c0 = arith.constant 0 : index
    %c0_0 = arith.constant 0 : index
    %c0_1 = arith.constant 0 : index
    %0 = vector.load %arg1[%c0, %c0_0, %c0_1] : memref<2x36x48xbf16, #tpu.memory_space<vmem>>, vector<2x36x48xbf16>
    %1 = arith.extf %0 : vector<2x36x48xbf16> to vector<2x36x48xf32>
    %cst = arith.constant dense<0.000000e+00> : vector<2x48xf32>
    %2 = vector.multi_reduction <add>, %1, %cst [1] : vector<2x36x48xf32> to vector<2x48xf32>
    %cst_2 = arith.constant 3.600000e+01 : f32
    %3 = vector.broadcast %cst_2 : f32 to vector<2x48xf32>
    %4 = arith.divf %2, %3 : vector<2x48xf32>
    %c0_3 = arith.constant 0 : index
    %c0_4 = arith.constant 0 : index
    %5 = vector.load %arg2[%c0_3, %c0_4] : memref<48x10xf32, #tpu.memory_space<vmem>>, vector<48x10xf32>
    %cst_5 = arith.constant dense<0.000000e+00> : vector<2x10xf32>
    %6 = tpu.matmul %4, %5, %cst_5 {dimension_numbers = #tpu.dot_dimension_numbers<[1], [0], [0], [1], [0, 0, 1, 1], [], []>} : vector<2x48xf32>, vector<48x10xf32>, vector<2x10xf32> -> vector<2x10xf32>
    %c0_6 = arith.constant 0 : index
    %c0_7 = arith.constant 0 : index
    %7 = vector.load %arg3[%c0_6, %c0_7] : memref<1x10xf32, #tpu.memory_space<vmem>>, vector<1x10xf32>
    %8 = vector.broadcast %7 : vector<1x10xf32> to vector<2x10xf32>
    %9 = arith.addf %6, %8 : vector<2x10xf32>
    %cst_8 = arith.constant dense<0xFF800000> : vector<2xf32>
    %10 = vector.multi_reduction <maximumf>, %9, %cst_8 [1] : vector<2x10xf32> to vector<2xf32>
    %11 = vector.shape_cast %10 : vector<2xf32> to vector<2x1xf32>
    %12 = vector.broadcast %11 : vector<2x1xf32> to vector<2x10xf32>
    %13 = arith.subf %9, %12 : vector<2x10xf32>
    %14 = math.exp %13 : vector<2x10xf32>
    %cst_9 = arith.constant dense<0.000000e+00> : vector<2xf32>
    %15 = vector.multi_reduction <add>, %14, %cst_9 [1] : vector<2x10xf32> to vector<2xf32>
    %16 = vector.shape_cast %15 : vector<2xf32> to vector<2x1xf32>
    %17 = math.log %16 : vector<2x1xf32>
    %18 = vector.broadcast %17 : vector<2x1xf32> to vector<2x10xf32>
    %19 = arith.subf %13, %18 : vector<2x10xf32>
    %c0_10 = arith.constant 0 : index
    %c0_11 = arith.constant 0 : index
    %20 = vector.load %arg4[%c0_10, %c0_11] : memref<2x10xf32, #tpu.memory_space<vmem>>, vector<2x10xf32>
    tpu.vector_store %arg4[%c0_10, %c0_11], %19 {strides = array<i32>} : memref<2x10xf32, #tpu.memory_space<vmem>>, vector<2x10xf32>,
    return
  }
  func.func @transform_0(%arg0: i32) -> (i32, i32, i32) {
    %c0_i32 = arith.constant 0 : i32
    %c0_i32_0 = arith.constant 0 : i32
    %c0_i32_1 = arith.constant 0 : i32
    %c0_i32_2 = arith.constant 0 : i32
    return %c0_i32, %c0_i32_0, %c0_i32_1 : i32, i32, i32
  }
  func.func @transform_1(%arg0: i32) -> (i32, i32) {
    %c0_i32 = arith.constant 0 : i32
    %c0_i32_0 = arith.constant 0 : i32
    %c0_i32_1 = arith.constant 0 : i32
    return %c0_i32, %c0_i32_0 : i32, i32
  }
  func.func @transform_2(%arg0: i32) -> (i32, i32) {
    %c0_i32 = arith.constant 0 : i32
    %c0_i32_0 = arith.constant 0 : i32
    %c0_i32_1 = arith.constant 0 : i32
    return %c0_i32, %c0_i32_0 : i32, i32
  }
  func.func @transform_3(%arg0: i32) -> (i32, i32) {
    %c0_i32 = arith.constant 0 : i32
    %c0_i32_0 = arith.constant 0 : i32
    %c0_i32_1 = arith.constant 0 : i32
    return %c0_i32, %c0_i32_0 : i32, i32
  }
}

</mosaic_0001>

<llo_original>
// kernel: net_forward.11
$region0: #{net_forward.11}
  #allocation0 [shape = 'u32[]', space=smem, size = 0x4, offset = 0x4, fixed_abs, tag = 'smem constant byte address 0x4 - core index']
  #allocation1 [shape = 'u32[144,128]{1,0:T(1,128)}', space=vmem, size = 0x12000, scoped, tag = 'internal scratch']
  %s0 = inlined_call_operand.vmem [shape: bf16[8,27], index: 0, kind: input, shape index: {}]
  %s1 = inlined_call_operand.vmem [shape: f32[8,1], index: 1, kind: input, shape index: {}]
  %s2 = inlined_call_operand.vmem [shape: bf16[27,2048], index: 2, kind: input, shape index: {}]
  %s3 = inlined_call_operand.vmem [shape: bf16[8,2048], index: 3, kind: output, shape index: {0}]
  %s4 = inlined_call_operand.vmem [shape: f32[1,8,2], index: 4, kind: output, shape index: {1}]
  %5 = xla_tuple %s3, %s4
  %s6 = sld [smem:[#allocation0]]
  $region30: #{net_forward.11} parent=0
    _
  %s8 = ssub.s32 1, %s6
  %s9 = scalar_select 0, %s8, %s6
  // Predicated region
  $region2: #{net_forward.11} parent=0 // pred_check
    _
  $region3: #{net_forward.11} parent=0 // pred_check_branch
    %11 = sbr.rel (0) target = $region5
  $region4: #{net_forward.11} parent=0 // pred_region
    _
  $region5: #{net_forward.11} parent=0 // pred_fallthru
    _
  // Predicated region
  $region6: #{net_forward.11} parent=0 // pred_check
    _
  $region7: #{net_forward.11} parent=0 // pred_check_branch
    %13 = sbr.rel (0) target = $region9
  $region8: #{net_forward.11} parent=0 // pred_region
    _
  $region9: #{net_forward.11} parent=0 // pred_fallthru
    _
  // Predicated region
  $region10: #{net_forward.11} parent=0 // pred_check
    _
  $region11: #{net_forward.11} parent=0 // pred_check_branch
    %15 = sbr.rel (0) target = $region13
  $region12: #{net_forward.11} parent=0 // pred_region
    _
  $region13: #{net_forward.11} parent=0 // pred_fallthru
    _
  %v17 = vld [vmem:[%s0] sm:$0xf]
  %v18 = vld [vmem:[%s2] sm:$0xff]
  %v19 = vld [vmem:[%s2 + $0x8] sm:$0xff]
  %v20 = vld [vmem:[%s2 + $0x10] sm:$0xff]
  %v21 = vld [vmem:[%s2 + $0x18] sm:$0xff]
  %v22 = vld [vmem:[%s2 + $0x20] sm:$0xff]
  %v23 = vld [vmem:[%s2 + $0x28] sm:$0xff]
  %v24 = vld [vmem:[%s2 + $0x30] sm:$0xff]
  %v25 = vld [vmem:[%s2 + $0x38] sm:$0xff]
  %v26 = vld [vmem:[%s2 + $0x40] sm:$0xff]
  %v27 = vld [vmem:[%s2 + $0x48] sm:$0xff]
  %v28 = vld [vmem:[%s2 + $0x50] sm:$0xff]
  %v29 = vld [vmem:[%s2 + $0x58] sm:$0xff]
  %v30 = vld [vmem:[%s2 + $0x60] sm:$0xff]
  %v31 = vld [vmem:[%s2 + $0x68] sm:$0xff]
  %v32 = vld [vmem:[%s2 + $0x70] sm:$0xff]
  %v33 = vld [vmem:[%s2 + $0x78] sm:$0xff]
  %v34 = vld [vmem:[%s2 + $0x80] sm:$0xff]
  %v35 = vld [vmem:[%s2 + $0x88] sm:$0xff]
  %v36 = vld [vmem:[%s2 + $0x90] sm:$0xff]
  %v37 = vld [vmem:[%s2 + $0x98] sm:$0xff]
  %v38 = vld [vmem:[%s2 + $0xa0] sm:$0xff]
  %v39 = vld [vmem:[%s2 + $0xa8] sm:$0xff]
  %v40 = vld [vmem:[%s2 + $0xb0] sm:$0xff]
  %v41 = vld [vmem:[%s2 + $0xb8] sm:$0xff]
  %v42 = vld [vmem:[%s2 + $0xc0] sm:$0x33]
  %v43 = vld [vmem:[%s2 + $0xc8] sm:$0x33]
  %v44 = vld [vmem:[%s2 + $0xd0] sm:$0x33]
  %v45 = vld [vmem:[%s2 + $0xd8] sm:$0x33]
  %v46 = vld [vmem:[%s2 + $0xe0] sm:$0x33]
  %v47 = vld [vmem:[%s2 + $0xe8] sm:$0x33]
  %v48 = vld [vmem:[%s2 + $0xf0] sm:$0x33]
  %v49 = vld [vmem:[%s2 + $0xf8] sm:$0x33]
  %v50 = vld [vmem:[%s1] sm:$0xff]
  %52 = vset.pattern.permute.xlu0 0
  %53 = vperm.xlu0 %52, %v50
  %v54 = vpop.permute.xlu0 %53
  %v88 = vunpack.c.l.b16 %v18
  %v89 = vunpack.c.h.b16 %v18
  %v90 = vunpack.c.l.b16 %v19
  %v91 = vunpack.c.h.b16 %v19
  %v92 = vunpack.c.l.b16 %v20
  %v93 = vunpack.c.h.b16 %v20
  %v94 = vunpack.c.l.b16 %v21
  %v95 = vunpack.c.h.b16 %v21
  %v96 = vunpack.c.l.b16 %v22
  %v97 = vunpack.c.h.b16 %v22
  %v98 = vunpack.c.l.b16 %v23
  %v99 = vunpack.c.h.b16 %v23
  %v100 = vunpack.c.l.b16 %v24
  %v101 = vunpack.c.h.b16 %v24
  %v102 = vunpack.c.l.b16 %v25
  %v103 = vunpack.c.h.b16 %v25
  %v104 = vunpack.c.l.b16 %v26
  %v105 = vunpack.c.h.b16 %v26
  %v106 = vunpack.c.l.b16 %v27
  %v107 = vunpack.c.h.b16 %v27
  %v108 = vunpack.c.l.b16 %v28
  %v109 = vunpack.c.h.b16 %v28
  %v110 = vunpack.c.l.b16 %v29
  %v111 = vunpack.c.h.b16 %v29
  %v112 = vunpack.c.l.b16 %v30
  %v113 = vunpack.c.h.b16 %v30
  %v114 = vunpack.c.l.b16 %v31
  %v115 = vunpack.c.h.b16 %v31
  %v116 = vunpack.c.l.b16 %v32
  %v117 = vunpack.c.h.b16 %v32
  %v118 = vunpack.c.l.b16 %v33
  %v119 = vunpack.c.h.b16 %v33
  %v120 = vunpack.c.l.b16 %v34
  %v121 = vunpack.c.h.b16 %v34
  %v122 = vunpack.c.l.b16 %v35
  %v123 = vunpack.c.h.b16 %v35
  %v124 = vunpack.c.l.b16 %v36
  %v125 = vunpack.c.h.b16 %v36
  %v126 = vunpack.c.l.b16 %v37
  %v127 = vunpack.c.h.b16 %v37
  %v128 = vunpack.c.l.b16 %v38
  %v129 = vunpack.c.h.b16 %v38
  %v130 = vunpack.c.l.b16 %v39
  %v131 = vunpack.c.h.b16 %v39
  %v132 = vunpack.c.l.b16 %v40
  %v133 = vunpack.c.h.b16 %v40
  %v134 = vunpack.c.l.b16 %v41
  %v135 = vunpack.c.h.b16 %v41
  %v136 = vunpack.c.l.b16 %v42
  %v137 = vunpack.c.h.b16 %v42
  %v138 = vunpack.c.l.b16 %v43
  %v139 = vunpack.c.h.b16 %v43
  %v140 = vunpack.c.l.b16 %v44
  %v141 = vunpack.c.h.b16 %v44
  %v142 = vunpack.c.l.b16 %v45
  %v143 = vunpack.c.h.b16 %v45
  %v144 = vunpack.c.l.b16 %v46
  %v145 = vunpack.c.h.b16 %v46
  %v146 = vunpack.c.l.b16 %v47
  %v147 = vunpack.c.h.b16 %v47
  %v148 = vunpack.c.l.b16 %v48
  %v149 = vunpack.c.h.b16 %v48
  %v150 = vunpack.c.l.b16 %v49
  %v151 = vunpack.c.h.b16 %v49
  %v152 = vpack.c.b16 %v104, %v88
  %v153 = vpack.c.b16 %v105, %v89
  %v154 = vpack.c.b16 %v106, %v90
  %v155 = vpack.c.b16 %v107, %v91
  %v156 = vpack.c.b16 %v108, %v92
  %v157 = vpack.c.b16 %v109, %v93
  %v158 = vpack.c.b16 %v110, %v94
  %v159 = vpack.c.b16 %v111, %v95
  %v160 = vpack.c.b16 %v112, %v96
  %v161 = vpack.c.b16 %v113, %v97
  %v162 = vpack.c.b16 %v114, %v98
  %v163 = vpack.c.b16 %v115, %v99
  %v164 = vpack.c.b16 %v116, %v100
  %v165 = vpack.c.b16 %v117, %v101
  %v166 = vpack.c.b16 %v118, %v102
  %v167 = vpack.c.b16 %v119, %v103
  %v168 = vpack.c.b16 %v136, %v120
  %v169 = vpack.c.b16 %v137, %v121
  %v170 = vpack.c.b16 %v138, %v122
  %v171 = vpack.c.b16 %v139, %v123
  %v172 = vpack.c.b16 %v140, %v124
  %v173 = vpack.c.b16 %v141, %v125
  %v174 = vpack.c.b16 %v142, %v126
  %v175 = vpack.c.b16 %v143, %v127
  %v176 = vpack.c.b16 %v144, %v128
  %v177 = vpack.c.b16 %v145, %v129
  %v178 = vpack.c.b16 %v146, %v130
  %v179 = vpack.c.b16 %v147, %v131
  %v180 = vpack.c.b16 %v148, %v132
  %v181 = vpack.c.b16 %v149, %v133
  %v182 = vpack.c.b16 %v150, %v134
  %v183 = vpack.c.b16 %v151, %v135
  %vm200 = vcmask 220160
  %v202 = vsel %vm200, %v17, 0
  %vm204 = vcmask 1044480
  %vm205 = vcmask 1045504
  %v206 = vsel %vm204, 4294967295, 65535
  %v207 = vsel %vm205, %v206, 0
  %v209 = vand.u32 %v168, %v207
  %v212 = vand.u32 %v169, %v207
  %v215 = vand.u32 %v170, %v207
  %v218 = vand.u32 %v171, %v207
  %v221 = vand.u32 %v172, %v207
  %v224 = vand.u32 %v173, %v207
  %v227 = vand.u32 %v174, %v207
  %v230 = vand.u32 %v175, %v207
  %v233 = vand.u32 %v176, %v207
  %v236 = vand.u32 %v177, %v207
  %v239 = vand.u32 %v178, %v207
  %v242 = vand.u32 %v179, %v207
  %v245 = vand.u32 %v180, %v207
  %v248 = vand.u32 %v181, %v207
  %v251 = vand.u32 %v182, %v207
  %v254 = vand.u32 %v183, %v207
  %256 = vmatprep.subr.bf16.mxu0 %v153
  %257 = vmatpush1.bf16.msra.mxu0 %v152
  %258 = vmatprep.subr.bf16.mxu0 %v212
  %259 = vmatpush1.bf16.msra.mxu0 %v209
  %260 = vmatprep.subr.bf16.mxu0 0
  %261 = vmatpush1.bf16.msra.mxu0 0
  %262 = vmatprep.subr.bf16.mxu0 0
  %263 = vmatpush1.bf16.msra.mxu0 0
  %264 = vmatprep.subr.bf16.mxu0 0
  %265 = vmatpush1.bf16.msra.mxu0 0
  %266 = vmatprep.subr.bf16.mxu0 0
  %267 = vmatpush1.bf16.msra.mxu0 0
  %268 = vmatprep.subr.bf16.mxu0 0
  %269 = vmatpush1.bf16.msra.mxu0 0
  %270 = vmatprep.subr.bf16.mxu0 0
  %271 = vmatpush1.bf16.msra.mxu0 0
  %272 = vmatprep.subr.bf16.mxu0 0
  %273 = vmatpush1.bf16.msra.mxu0 0
  %274 = vmatprep.subr.bf16.mxu0 0
  %275 = vmatpush1.bf16.msra.mxu0 0
  %276 = vmatprep.subr.bf16.mxu0 0
  %277 = vmatpush1.bf16.msra.mxu0 0
  %278 = vmatprep.subr.bf16.mxu0 0
  %279 = vmatpush1.bf16.msra.mxu0 0
  %280 = vmatprep.subr.bf16.mxu0 0
  %281 = vmatpush1.bf16.msra.mxu0 0
  %282 = vmatprep.subr.bf16.mxu0 0
  %283 = vmatpush1.bf16.msra.mxu0 0
  %284 = vmatprep.subr.bf16.mxu0 0
  %285 = vmatpush1.bf16.msra.mxu0 0
  %286 = vmatprep.subr.bf16.mxu0 0
  %287 = vmatpush1.bf16.msra.mxu0 0
  %288 = vmatprep.mubr.bf16.mxu0 0
  %289 = vmatmul.mubr.bf16.gmra.mrb[0].mxu0 %v202
  %v290 = vpop.f32.mrb[0].mxu0
  %v291 = vadd.f32 %v54, %v290
  %v292 = vpop.f32.mrb[0].mxu0
  %v293 = vadd.f32 %v54, %v292
  %v294 = vpop.f32.mrb[0].mxu0
  %v295 = vpop.f32.mrb[0].mxu0
  %296 = vdwg.mxu0
  %297 = vmatprep.subr.bf16.mxu0 %v155
  %298 = vmatpush1.bf16.msra.mxu0 %v154
  %299 = vmatprep.subr.bf16.mxu0 %v218
  %300 = vmatpush1.bf16.msra.mxu0 %v215
  %301 = vmatprep.subr.bf16.mxu0 0
  %302 = vmatpush1.bf16.msra.mxu0 0
  %303 = vmatprep.subr.bf16.mxu0 0
  %304 = vmatpush1.bf16.msra.mxu0 0
  %305 = vmatprep.subr.bf16.mxu0 0
  %306 = vmatpush1.bf16.msra.mxu0 0
  %307 = vmatprep.subr.bf16.mxu0 0
  %308 = vmatpush1.bf16.msra.mxu0 0
  %309 = vmatprep.subr.bf16.mxu0 0
  %310 = vmatpush1.bf16.msra.mxu0 0
  %311 = vmatprep.subr.bf16.mxu0 0
  %312 = vmatpush1.bf16.msra.mxu0 0
  %313 = vmatprep.subr.bf16.mxu0 0
  %314 = vmatpush1.bf16.msra.mxu0 0
  %315 = vmatprep.subr.bf16.mxu0 0
  %316 = vmatpush1.bf16.msra.mxu0 0
  %317 = vmatprep.subr.bf16.mxu0 0
  %318 = vmatpush1.bf16.msra.mxu0 0
  %319 = vmatprep.subr.bf16.mxu0 0
  %320 = vmatpush1.bf16.msra.mxu0 0
  %321 = vmatprep.subr.bf16.mxu0 0
  %322 = vmatpush1.bf16.msra.mxu0 0
  %323 = vmatprep.subr.bf16.mxu0 0
  %324 = vmatpush1.bf16.msra.mxu0 0
  %325 = vmatprep.subr.bf16.mxu0 0
  %326 = vmatpush1.bf16.msra.mxu0 0
  %327 = vmatprep.subr.bf16.mxu0 0
  %328 = vmatpush1.bf16.msra.mxu0 0
  %329 = vmatprep.mubr.bf16.mxu0 0
  %330 = vmatmul.mubr.bf16.gmra.mrb[0].mxu0 %v202
  %v331 = vpop.f32.mrb[0].mxu0
  %v332 = vadd.f32 %v54, %v331
  %v333 = vpop.f32.mrb[0].mxu0
  %v334 = vadd.f32 %v54, %v333
  %v335 = vpop.f32.mrb[0].mxu0
  %v336 = vpop.f32.mrb[0].mxu0
  %337 = vdwg.mxu0
  %338 = vmatprep.subr.bf16.mxu0 %v157
  %339 = vmatpush1.bf16.msra.mxu0 %v156
  %340 = vmatprep.subr.bf16.mxu0 %v224
  %341 = vmatpush1.bf16.msra.mxu0 %v221
  %342 = vmatprep.subr.bf16.mxu0 0
  %343 = vmatpush1.bf16.msra.mxu0 0
  %344 = vmatprep.subr.bf16.mxu0 0
  %345 = vmatpush1.bf16.msra.mxu0 0
  %346 = vmatprep.subr.bf16.mxu0 0
  %347 = vmatpush1.bf16.msra.mxu0 0
  %348 = vmatprep.subr.bf16.mxu0 0
  %349 = vmatpush1.bf16.msra.mxu0 0
  %350 = vmatprep.subr.bf16.mxu0 0
  %351 = vmatpush1.bf16.msra.mxu0 0
  %352 = vmatprep.subr.bf16.mxu0 0
  %353 = vmatpush1.bf16.msra.mxu0 0
  %354 = vmatprep.subr.bf16.mxu0 0
  %355 = vmatpush1.bf16.msra.mxu0 0
  %356 = vmatprep.subr.bf16.mxu0 0
  %357 = vmatpush1.bf16.msra.mxu0 0
  %358 = vmatprep.subr.bf16.mxu0 0
  %359 = vmatpush1.bf16.msra.mxu0 0
  %360 = vmatprep.subr.bf16.mxu0 0
  %361 = vmatpush1.bf16.msra.mxu0 0
  %362 = vmatprep.subr.bf16.mxu0 0
  %363 = vmatpush1.bf16.msra.mxu0 0
  %364 = vmatprep.subr.bf16.mxu0 0
  %365 = vmatpush1.bf16.msra.mxu0 0
  %366 = vmatprep.subr.bf16.mxu0 0
  %367 = vmatpush1.bf16.msra.mxu0 0
  %368 = vmatprep.subr.bf16.mxu0 0
  %369 = vmatpush1.bf16.msra.mxu0 0
  %370 = vmatprep.mubr.bf16.mxu0 0
  %371 = vmatmul.mubr.bf16.gmra.mrb[0].mxu0 %v202
  %v372 = vpop.f32.mrb[0].mxu0
  %v373 = vadd.f32 %v54, %v372
  %v374 = vpop.f32.mrb[0].mxu0
  %v375 = vadd.f32 %v54, %v374
  %v376 = vpop.f32.mrb[0].mxu0
  %v377 = vpop.f32.mrb[0].mxu0
  %378 = vdwg.mxu0
  %379 = vmatprep.subr.bf16.mxu0 %v159
  %380 = vmatpush1.bf16.msra.mxu0 %v158
  %381 = vmatprep.subr.bf16.mxu0 %v230
  %382 = vmatpush1.bf16.msra.mxu0 %v227
  %383 = vmatprep.subr.bf16.mxu0 0
  %384 = vmatpush1.bf16.msra.mxu0 0
  %385 = vmatprep.subr.bf16.mxu0 0
  %386 = vmatpush1.bf16.msra.mxu0 0
  %387 = vmatprep.subr.bf16.mxu0 0
  %388 = vmatpush1.bf16.msra.mxu0 0
  %389 = vmatprep.subr.bf16.mxu0 0
  %390 = vmatpush1.bf16.msra.mxu0 0
  %391 = vmatprep.subr.bf16.mxu0 0
  %392 = vmatpush1.bf16.msra.mxu0 0
  %393 = vmatprep.subr.bf16.mxu0 0
  %394 = vmatpush1.bf16.msra.mxu0 0
  %395 = vmatprep.subr.bf16.mxu0 0
  %396 = vmatpush1.bf16.msra.mxu0 0
  %397 = vmatprep.subr.bf16.mxu0 0
  %398 = vmatpush1.bf16.msra.mxu0 0
  %399 = vmatprep.subr.bf16.mxu0 0
  %400 = vmatpush1.bf16.msra.mxu0 0
  %401 = vmatprep.subr.bf16.mxu0 0
  %402 = vmatpush1.bf16.msra.mxu0 0
  %403 = vmatprep.subr.bf16.mxu0 0
  %404 = vmatpush1.bf16.msra.mxu0 0
  %405 = vmatprep.subr.bf16.mxu0 0
  %406 = vmatpush1.bf16.msra.mxu0 0
  %407 = vmatprep.subr.bf16.mxu0 0
  %408 = vmatpush1.bf16.msra.mxu0 0
  %409 = vmatprep.subr.bf16.mxu0 0
  %410 = vmatpush1.bf16.msra.mxu0 0
  %411 = vmatprep.mubr.bf16.mxu0 0
  %412 = vmatmul.mubr.bf16.gmra.mrb[0].mxu0 %v202
  %v413 = vpop.f32.mrb[0].mxu0
  %v414 = vadd.f32 %v54, %v413
  %v415 = vpop.f32.mrb[0].mxu0
  %v416 = vadd.f32 %v54, %v415
  %v417 = vpop.f32.mrb[0].mxu0
  %v418 = vpop.f32.mrb[0].mxu0
  %419 = vdwg.mxu0
  %420 = vmatprep.subr.bf16.mxu0 %v161
  %421 = vmatpush1.bf16.msra.mxu0 %v160
  %422 = vmatprep.subr.bf16.mxu0 %v236
  %423 = vmatpush1.bf16.msra.mxu0 %v233
  %424 = vmatprep.subr.bf16.mxu0 0
  %425 = vmatpush1.bf16.msra.mxu0 0
  %426 = vmatprep.subr.bf16.mxu0 0
  %427 = vmatpush1.bf16.msra.mxu0 0
  %428 = vmatprep.subr.bf16.mxu0 0
  %429 = vmatpush1.bf16.msra.mxu0 0
  %430 = vmatprep.subr.bf16.mxu0 0
  %431 = vmatpush1.bf16.msra.mxu0 0
  %432 = vmatprep.subr.bf16.mxu0 0
  %433 = vmatpush1.bf16.msra.mxu0 0
  %434 = vmatprep.subr.bf16.mxu0 0
  %435 = vmatpush1.bf16.msra.mxu0 0
  %436 = vmatprep.subr.bf16.mxu0 0
  %437 = vmatpush1.bf16.msra.mxu0 0
  %438 = vmatprep.subr.bf16.mxu0 0
  %439 = vmatpush1.bf16.msra.mxu0 0
  %440 = vmatprep.subr.bf16.mxu0 0
  %441 = vmatpush1.bf16.msra.mxu0 0
  %442 = vmatprep.subr.bf16.mxu0 0
  %443 = vmatpush1.bf16.msra.mxu0 0
  %444 = vmatprep.subr.bf16.mxu0 0
  %445 = vmatpush1.bf16.msra.mxu0 0
  %446 = vmatprep.subr.bf16.mxu0 0
  %447 = vmatpush1.bf16.msra.mxu0 0
  %448 = vmatprep.subr.bf16.mxu0 0
  %449 = vmatpush1.bf16.msra.mxu0 0
  %450 = vmatprep.subr.bf16.mxu0 0
  %451 = vmatpush1.bf16.msra.mxu0 0
  %452 = vmatprep.mubr.bf16.mxu0 0
  %453 = vmatmul.mubr.bf16.gmra.mrb[0].mxu0 %v202
  %v454 = vpop.f32.mrb[0].mxu0
  %v455 = vadd.f32 %v54, %v454
  %v456 = vpop.f32.mrb[0].mxu0
  %v457 = vadd.f32 %v54, %v456
  %v458 = vpop.f32.mrb[0].mxu0
  %v459 = vpop.f32.mrb[0].mxu0
  %460 = vdwg.mxu0
  %461 = vmatprep.subr.bf16.mxu0 %v163
  %462 = vmatpush1.bf16.msra.mxu0 %v162
  %463 = vmatprep.subr.bf16.mxu0 %v242
  %464 = vmatpush1.bf16.msra.mxu0 %v239
  %465 = vmatprep.subr.bf16.mxu0 0
  %466 = vmatpush1.bf16.msra.mxu0 0
  %467 = vmatprep.subr.bf16.mxu0 0
  %468 = vmatpush1.bf16.msra.mxu0 0
  %469 = vmatprep.subr.bf16.mxu0 0
  %470 = vmatpush1.bf16.msra.mxu0 0
  %471 = vmatprep.subr.bf16.mxu0 0
  %472 = vmatpush1.bf16.msra.mxu0 0
  %473 = vmatprep.subr.bf16.mxu0 0
  %474 = vmatpush1.bf16.msra.mxu0 0
  %475 = vmatprep.subr.bf16.mxu0 0
  %476 = vmatpush1.bf16.msra.mxu0 0
  %477 = vmatprep.subr.bf16.mxu0 0
  %478 = vmatpush1.bf16.msra.mxu0 0
  %479 = vmatprep.subr.bf16.mxu0 0
  %480 = vmatpush1.bf16.msra.mxu0 0
  %481 = vmatprep.subr.bf16.mxu0 0
  %482 = vmatpush1.bf16.msra.mxu0 0
  %483 = vmatprep.subr.bf16.mxu0 0
  %484 = vmatpush1.bf16.msra.mxu0 0
  %485 = vmatprep.subr.bf16.mxu0 0
  %486 = vmatpush1.bf16.msra.mxu0 0
  %487 = vmatprep.subr.bf16.mxu0 0
  %488 = vmatpush1.bf16.msra.mxu0 0
  %489 = vmatprep.subr.bf16.mxu0 0
  %490 = vmatpush1.bf16.msra.mxu0 0
  %491 = vmatprep.subr.bf16.mxu0 0
  %492 = vmatpush1.bf16.msra.mxu0 0
  %493 = vmatprep.mubr.bf16.mxu0 0
  %494 = vmatmul.mubr.bf16.gmra.mrb[0].mxu0 %v202
  %v495 = vpop.f32.mrb[0].mxu0
  %v496 = vadd.f32 %v54, %v495
  %v497 = vpop.f32.mrb[0].mxu0
  %v498 = vadd.f32 %v54, %v497
  %v499 = vpop.f32.mrb[0].mxu0
  %v500 = vpop.f32.mrb[0].mxu0
  %501 = vdwg.mxu0
  %502 = vmatprep.subr.bf16.mxu0 %v165
  %503 = vmatpush1.bf16.msra.mxu0 %v164
  %504 = vmatprep.subr.bf16.mxu0 %v248
  %505 = vmatpush1.bf16.msra.mxu0 %v245
  %506 = vmatprep.subr.bf16.mxu0 0
  %507 = vmatpush1.bf16.msra.mxu0 0
  %508 = vmatprep.subr.bf16.mxu0 0
  %509 = vmatpush1.bf16.msra.mxu0 0
  %510 = vmatprep.subr.bf16.mxu0 0
  %511 = vmatpush1.bf16.msra.mxu0 0
  %512 = vmatprep.subr.bf16.mxu0 0
  %513 = vmatpush1.bf16.msra.mxu0 0
  %514 = vmatprep.subr.bf16.mxu0 0
  %515 = vmatpush1.bf16.msra.mxu0 0
  %516 = vmatprep.subr.bf16.mxu0 0
  %517 = vmatpush1.bf16.msra.mxu0 0
  %518 = vmatprep.subr.bf16.mxu0 0
  %519 = vmatpush1.bf16.msra.mxu0 0
  %520 = vmatprep.subr.bf16.mxu0 0
  %521 = vmatpush1.bf16.msra.mxu0 0
  %522 = vmatprep.subr.bf16.mxu0 0
  %523 = vmatpush1.bf16.msra.mxu0 0
  %524 = vmatprep.subr.bf16.mxu0 0
  %525 = vmatpush1.bf16.msra.mxu0 0
  %526 = vmatprep.subr.bf16.mxu0 0
  %527 = vmatpush1.bf16.msra.mxu0 0
  %528 = vmatprep.subr.bf16.mxu0 0
  %529 = vmatpush1.bf16.msra.mxu0 0
  %530 = vmatprep.subr.bf16.mxu0 0
  %531 = vmatpush1.bf16.msra.mxu0 0
  %532 = vmatprep.subr.bf16.mxu0 0
  %533 = vmatpush1.bf16.msra.mxu0 0
  %534 = vmatprep.mubr.bf16.mxu0 0
  %535 = vmatmul.mubr.bf16.gmra.mrb[0].mxu0 %v202
  %v536 = vpop.f32.mrb[0].mxu0
  %v537 = vadd.f32 %v54, %v536
  %v538 = vpop.f32.mrb[0].mxu0
  %v539 = vadd.f32 %v54, %v538
  %v540 = vpop.f32.mrb[0].mxu0
  %v541 = vpop.f32.mrb[0].mxu0
  %542 = vdwg.mxu0
  %543 = vmatprep.subr.bf16.mxu0 %v167
  %544 = vmatpush1.bf16.msra.mxu0 %v166
  %545 = vmatprep.subr.bf16.mxu0 %v254
  %546 = vmatpush1.bf16.msra.mxu0 %v251
  %547 = vmatprep.subr.bf16.mxu0 0
  %548 = vmatpush1.bf16.msra.mxu0 0
  %549 = vmatprep.subr.bf16.mxu0 0
  %550 = vmatpush1.bf16.msra.mxu0 0
  %551 = vmatprep.subr.bf16.mxu0 0
  %552 = vmatpush1.bf16.msra.mxu0 0
  %553 = vmatprep.subr.bf16.mxu0 0
  %554 = vmatpush1.bf16.msra.mxu0 0
  %555 = vmatprep.subr.bf16.mxu0 0
  %556 = vmatpush1.bf16.msra.mxu0 0
  %557 = vmatprep.subr.bf16.mxu0 0
  %558 = vmatpush1.bf16.msra.mxu0 0
  %559 = vmatprep.subr.bf16.mxu0 0
  %560 = vmatpush1.bf16.msra.mxu0 0
  %561 = vmatprep.subr.bf16.mxu0 0
  %562 = vmatpush1.bf16.msra.mxu0 0
  %563 = vmatprep.subr.bf16.mxu0 0
  %564 = vmatpush1.bf16.msra.mxu0 0
  %565 = vmatprep.subr.bf16.mxu0 0
  %566 = vmatpush1.bf16.msra.mxu0 0
  %567 = vmatprep.subr.bf16.mxu0 0
  %568 = vmatpush1.bf16.msra.mxu0 0
  %569 = vmatprep.subr.bf16.mxu0 0
  %570 = vmatpush1.bf16.msra.mxu0 0
  %571 = vmatprep.subr.bf16.mxu0 0
  %572 = vmatpush1.bf16.msra.mxu0 0
  %573 = vmatprep.subr.bf16.mxu0 0
  %574 = vmatpush1.bf16.msra.mxu0 0
  %575 = vmatprep.mubr.bf16.mxu0 0
  %576 = vmatmul.mubr.bf16.gmra.mrb[0].mxu0 %v202
  %v577 = vpop.f32.mrb[0].mxu0
  %v578 = vadd.f32 %v54, %v577
  %v579 = vpop.f32.mrb[0].mxu0
  %v580 = vadd.f32 %v54, %v579
  %v581 = vpop.f32.mrb[0].mxu0
  %v582 = vpop.f32.mrb[0].mxu0
  %583 = vdwg.mxu0
  %v584 = vmax.f32 %v291, 0.0
  %v585 = vmax.f32 %v293, 0.0
  %v586 = vmax.f32 %v332, 0.0
  %v587 = vmax.f32 %v334, 0.0
  %v588 = vmax.f32 %v373, 0.0
  %v589 = vmax.f32 %v375, 0.0
  %v590 = vmax.f32 %v414, 0.0
  %v591 = vmax.f32 %v416, 0.0
  %v592 = vmax.f32 %v455, 0.0
  %v593 = vmax.f32 %v457, 0.0
  %v594 = vmax.f32 %v496, 0.0
  %v595 = vmax.f32 %v498, 0.0
  %v596 = vmax.f32 %v537, 0.0
  %v597 = vmax.f32 %v539, 0.0
  %v598 = vmax.f32 %v578, 0.0
  %v599 = vmax.f32 %v580, 0.0
  %v600 = vadd.f32 %v584, %v585
  %v601 = vadd.f32 %v600, %v586
  %v602 = vadd.f32 %v601, %v587
  %v603 = vadd.f32 %v602, %v588
  %v604 = vadd.f32 %v603, %v589
  %v605 = vadd.f32 %v604, %v590
  %v606 = vadd.f32 %v605, %v591
  %v607 = vadd.f32 %v606, %v592
  %v608 = vadd.f32 %v607, %v593
  %v609 = vadd.f32 %v608, %v594
  %v610 = vadd.f32 %v609, %v595
  %v611 = vadd.f32 %v610, %v596
  %v612 = vadd.f32 %v611, %v597
  %v613 = vadd.f32 %v612, %v598
  %v614 = vadd.f32 %v613, %v599
  %615 = vadd.xlane.f32.xlu0 %v614
  %v616 = vpop.xlane.xlu0 %615
  %v617 = vmul.f32 %v584, %v584
  %v618 = vmul.f32 %v585, %v585
  %v619 = vmul.f32 %v586, %v586
  %v620 = vmul.f32 %v587, %v587
  %v621 = vmul.f32 %v588, %v588
  %v622 = vmul.f32 %v589, %v589
  %v623 = vmul.f32 %v590, %v590
  %v624 = vmul.f32 %v591, %v591
  %v625 = vmul.f32 %v592, %v592
  %v626 = vmul.f32 %v593, %v593
  %v627 = vmul.f32 %v594, %v594
  %v628 = vmul.f32 %v595, %v595
  %v629 = vmul.f32 %v596, %v596
  %v630 = vmul.f32 %v597, %v597
  %v631 = vmul.f32 %v598, %v598
  %v632 = vmul.f32 %v599, %v599
  %v633 = vadd.f32 %v617, %v618
  %v634 = vadd.f32 %v633, %v619
  %v635 = vadd.f32 %v634, %v620
  %v636 = vadd.f32 %v635, %v621
  %v637 = vadd.f32 %v636, %v622
  %v638 = vadd.f32 %v637, %v623
  %v639 = vadd.f32 %v638, %v624
  %v640 = vadd.f32 %v639, %v625
  %v641 = vadd.f32 %v640, %v626
  %v642 = vadd.f32 %v641, %v627
  %v643 = vadd.f32 %v642, %v628
  %v644 = vadd.f32 %v643, %v629
  %v645 = vadd.f32 %v644, %v630
  %v646 = vadd.f32 %v645, %v631
  %v647 = vadd.f32 %v646, %v632
  %648 = vadd.xlane.f32.xlu0 %v647
  %v649 = vpop.xlane.xlu0 %648
  %vm650 = vcmask 7168
  %v651 = vsel %vm650, %v616, %v649
  %vm652 = vcmask 15360
  %653 = vst.msk [vmem:[%s4] sm:$0xff] %vm652, %v651
  %v654 = vpack.c.bf16 %v584, %v584
  %v655 = vpack.c.bf16 %v585, %v585
  %v656 = vpack.c.bf16 %v586, %v586
  %v657 = vpack.c.bf16 %v587, %v587
  %v658 = vpack.c.bf16 %v588, %v588
  %v659 = vpack.c.bf16 %v589, %v589
  %v660 = vpack.c.bf16 %v590, %v590
  %v661 = vpack.c.bf16 %v591, %v591
  %v662 = vpack.c.bf16 %v592, %v592
  %v663 = vpack.c.bf16 %v593, %v593
  %v664 = vpack.c.bf16 %v594, %v594
  %v665 = vpack.c.bf16 %v595, %v595
  %v666 = vpack.c.bf16 %v596, %v596
  %v667 = vpack.c.bf16 %v597, %v597
  %v668 = vpack.c.bf16 %v598, %v598
  %v669 = vpack.c.bf16 %v599, %v599
  %v686 = vunpack.c.l.b16 %v654
  %v687 = vunpack.c.l.b16 %v655
  %v688 = vunpack.c.l.b16 %v656
  %v689 = vunpack.c.l.b16 %v657
  %v690 = vunpack.c.l.b16 %v658
  %v691 = vunpack.c.l.b16 %v659
  %v692 = vunpack.c.l.b16 %v660
  %v693 = vunpack.c.l.b16 %v661
  %v694 = vunpack.c.l.b16 %v662
  %v695 = vunpack.c.l.b16 %v663
  %v696 = vunpack.c.l.b16 %v664
  %v697 = vunpack.c.l.b16 %v665
  %v698 = vunpack.c.l.b16 %v666
  %v699 = vunpack.c.l.b16 %v667
  %v700 = vunpack.c.l.b16 %v668
  %v701 = vunpack.c.l.b16 %v669
  %v702 = vpack.c.b16 %v687, %v686
  %v703 = vpack.c.b16 %v689, %v688
  %v704 = vpack.c.b16 %v691, %v690
  %v705 = vpack.c.b16 %v693, %v692
  %v706 = vpack.c.b16 %v695, %v694
  %v707 = vpack.c.b16 %v697, %v696
  %v708 = vpack.c.b16 %v699, %v698
  %v709 = vpack.c.b16 %v701, %v700
  %718 = vst [vmem:[%s3] sm:$0xff] %v702
  %719 = vst [vmem:[%s3 + $0x8] sm:$0xff] %v703
  %720 = vst [vmem:[%s3 + $0x10] sm:$0xff] %v704
  %721 = vst [vmem:[%s3 + $0x18] sm:$0xff] %v705
  %722 = vst [vmem:[%s3 + $0x20] sm:$0xff] %v706
  %723 = vst [vmem:[%s3 + $0x28] sm:$0xff] %v707
  %724 = vst [vmem:[%s3 + $0x30] sm:$0xff] %v708
  %725 = vst [vmem:[%s3 + $0x38] sm:$0xff] %v709
  // Predicated region
  $region14: #{net_forward.11} parent=0 // pred_check
    _
  $region15: #{net_forward.11} parent=0 // pred_check_branch
    %727 = sbr.rel (0) target = $region17
  $region16: #{net_forward.11} parent=0 // pred_region
    _
  $region17: #{net_forward.11} parent=0 // pred_fallthru
    _
  // Predicated region
  $region18: #{net_forward.11} parent=0 // pred_check
    _
  $region19: #{net_forward.11} parent=0 // pred_check_branch
    %729 = sbr.rel (0) target = $region21
  $region20: #{net_forward.11} parent=0 // pred_region
    _
  $region21: #{net_forward.11} parent=0 // pred_fallthru
    _
  // Predicated region
  $region22: #{net_forward.11} parent=0 // pred_check
    _
  $region23: #{net_forward.11} parent=0 // pred_check_branch
    %731 = sbr.rel (0) target = $region25
  $region24: #{net_forward.11} parent=0 // pred_region
    _
  $region25: #{net_forward.11} parent=0 // pred_fallthru
    _
  // Predicated region
  $region26: #{net_forward.11} parent=0 // pred_check
    _
  $region27: #{net_forward.11} parent=0 // pred_check_branch
    %733 = sbr.rel (0) target = $region29
  $region28: #{net_forward.11} parent=0 // pred_region
    _
  $region29: #{net_forward.11} parent=0 // pred_fallthru
    _

// kernel: mul.60
$region0: #{mul.60}
  %s0 = inlined_call_operand.vmem [shape: f32[8,9], index: 0, kind: input, shape index: {}]
  %s1 = inlined_call_operand.vmem [shape: f32[72], index: 1, kind: output, shape index: {}]
  $region1: #{mul.60} parent=0
    #allocation0 [shape = 'u8[4096]{0}', space=vmem, size = 0x1000, scoped, tag = 'scoped mem for output reshape']
    %v2 = vld [vmem:[%s0] sm:$0x1]
    %vm3 = vcmask 72704
    %4 = vst.msk [vmem:[#allocation0] sm:$0x1] %vm3, %v2
    %s5 = scalar_lea.vmem %s0, 7
    %v6 = vld [vmem:[%s5] sm:$0x1]
    %7 = vrot.lane.b32.xlu0 %v6, 63
    %v8 = vpop.permute.xlu0 %7
    %vm9 = vcmask 589304
    %10 = vst.msk [vmem:[#allocation0] sm:$0x1] %vm9, %v8
    %s11 = scalar_lea.vmem %s0, 6
    %v12 = vld [vmem:[%s11] sm:$0x1]
    %13 = vrot.lane.b32.xlu0 %v12, 54
    %v14 = vpop.permute.xlu0 %13
    %vm15 = vcmask 515504
    %16 = vst.msk [vmem:[#allocation0] sm:$0x1] %vm15, %v14
    %s17 = scalar_lea.vmem %s0, 5
    %v18 = vld [vmem:[%s17] sm:$0x1]
    %19 = vrot.lane.b32.xlu0 %v18, 45
    %v20 = vpop.permute.xlu0 %19
    %vm21 = vcmask 441704
    %22 = vst.msk [vmem:[#allocation0] sm:$0x1] %vm21, %v20
    %s23 = scalar_lea.vmem %s0, 4
    %v24 = vld [vmem:[%s23] sm:$0x1]
    %25 = vrot.lane.b32.xlu0 %v24, 36
    %v26 = vpop.permute.xlu0 %25
    %vm27 = vcmask 367904
    %28 = vst.msk [vmem:[#allocation0] sm:$0x1] %vm27, %v26
    %s29 = scalar_lea.vmem %s0, 3
    %v30 = vld [vmem:[%s29] sm:$0x1]
    %31 = vrot.lane.b32.xlu0 %v30, 27
    %v32 = vpop.permute.xlu0 %31
    %vm33 = vcmask 294104
    %34 = vst.msk [vmem:[#allocation0] sm:$0x1] %vm33, %v32
    %s35 = scalar_lea.vmem %s0, 2
    %v36 = vld [vmem:[%s35] sm:$0x1]
    %37 = vrot.lane.b32.xlu0 %v36, 18
    %v38 = vpop.permute.xlu0 %37
    %vm39 = vcmask 220304
    %40 = vst.msk [vmem:[#allocation0] sm:$0x1] %vm39, %v38
    %s41 = scalar_lea.vmem %s0, 1
    %v42 = vld [vmem:[%s41] sm:$0x1]
    %43 = vrot.lane.b32.xlu0 %v42, 9
    %v44 = vpop.permute.xlu0 %43
    %vm45 = vcmask 146504
    %46 = vst.msk [vmem:[#allocation0] sm:$0x1] %vm45, %v44
    %s48 = sshllo.u32 0, 1
    %v50 = vld [vmem:[#allocation0] sm:%s48]
    %s51 = sshllo.u32 0, 1
    %52 = vst [vmem:[%s1] sm:%s51] %v50

// kernel: net_forward.12
$region0: #{net_forward.12}
  #allocation0 [shape = 'u32[]', space=smem, size = 0x4, offset = 0x4, fixed_abs, tag = 'smem constant byte address 0x4 - core index']
  #allocation1 [shape = 'u32[144,128]{1,0:T(1,128)}', space=vmem, size = 0x12000, scoped, tag = 'internal scratch']
  %s0 = inlined_call_operand.vmem [shape: bf16[16,72], index: 0, kind: input, shape index: {}]
  %s1 = inlined_call_operand.vmem [shape: f32[16,1], index: 1, kind: input, shape index: {}]
  %s2 = inlined_call_operand.vmem [shape: bf16[72,2048], index: 2, kind: input, shape index: {}]
  %s3 = inlined_call_operand.vmem [shape: bf16[16,2048], index: 3, kind: output, shape index: {0}]
  %s4 = inlined_call_operand.vmem [shape: f32[1,16,2], index: 4, kind: output, shape index: {1}]
  %5 = xla_tuple %s3, %s4
  %s6 = sld [smem:[#allocation0]]
  $region30: #{net_forward.12} parent=0
    _
  %s8 = ssub.s32 1, %s6
  %s9 = scalar_select 0, %s8, %s6
  // Predicated region
  $region2: #{net_forward.12} parent=0 // pred_check
    _
  $region3: #{net_forward.12} parent=0 // pred_check_branch
    %11 = sbr.rel (0) target = $region5
  $region4: #{net_forward.12} parent=0 // pred_region
    _
  $region5: #{net_forward.12} parent=0 // pred_fallthru
    _
  // Predicated region
  $region6: #{net_forward.12} parent=0 // pred_check
    _
  $region7: #{net_forward.12} parent=0 // pred_check_branch
    %13 = sbr.rel (0) target = $region9
  $region8: #{net_forward.12} parent=0 // pred_region
    _
  $region9: #{net_forward.12} parent=0 // pred_fallthru
    _
  // Predicated region
  $region10: #{net_forward.12} parent=0 // pred_check
    _
  $region11: #{net_forward.12} parent=0 // pred_check_branch
    %15 = sbr.rel (0) target = $region13
  $region12: #{net_forward.12} parent=0 // pred_region
    _
  $region13: #{net_forward.12} parent=0 // pred_fallthru
    _
  %v17 = vld [vmem:[%s0] sm:$0xf]
  %v18 = vld [vmem:[%s0 + $0x4] sm:$0xf]
  %v19 = vld [vmem:[%s2] sm:$0xff]
  %v20 = vld [vmem:[%s2 + $0x8] sm:$0xff]
  %v21 = vld [vmem:[%s2 + $0x10] sm:$0xff]
  %v22 = vld [vmem:[%s2 + $0x18] sm:$0xff]
  %v23 = vld [vmem:[%s2 + $0x20] sm:$0xff]
  %v24 = vld [vmem:[%s2 + $0x28] sm:$0xff]
  %v25 = vld [vmem:[%s2 + $0x30] sm:$0xff]
  %v26 = vld [vmem:[%s2 + $0x38] sm:$0xff]
  %v27 = vld [vmem:[%s2 + $0x40] sm:$0xff]
  %v28 = vld [vmem:[%s2 + $0x48] sm:$0xff]
  %v29 = vld [vmem:[%s2 + $0x50] sm:$0xff]
  %v30 = vld [vmem:[%s2 + $0x58] sm:$0xff]
  %v31 = vld [vmem:[%s2 + $0x60] sm:$0xff]
  %v32 = vld [vmem:[%s2 + $0x68] sm:$0xff]
  %v33 = vld [vmem:[%s2 + $0x70] sm:$0xff]
  %v34 = vld [vmem:[%s2 + $0x78] sm:$0xff]
  %v35 = vld [vmem:[%s2 + $0x80] sm:$0xff]
  %v36 = vld [vmem:[%s2 + $0x88] sm:$0xff]
  %v37 = vld [vmem:[%s2 + $0x90] sm:$0xff]
  %v38 = vld [vmem:[%s2 + $0x98] sm:$0xff]
  %v39 = vld [vmem:[%s2 + $0xa0] sm:$0xff]
  %v40 = vld [vmem:[%s2 + $0xa8] sm:$0xff]
  %v41 = vld [vmem:[%s2 + $0xb0] sm:$0xff]
  %v42 = vld [vmem:[%s2 + $0xb8] sm:$0xff]
  %v43 = vld [vmem:[%s2 + $0xc0] sm:$0xff]
  %v44 = vld [vmem:[%s2 + $0xc8] sm:$0xff]
  %v45 = vld [vmem:[%s2 + $0xd0] sm:$0xff]
  %v46 = vld [vmem:[%s2 + $0xd8] sm:$0xff]
  %v47 = vld [vmem:[%s2 + $0xe0] sm:$0xff]
  %v48 = vld [vmem:[%s2 + $0xe8] sm:$0xff]
  %v49 = vld [vmem:[%s2 + $0xf0] sm:$0xff]
  %v50 = vld [vmem:[%s2 + $0xf8] sm:$0xff]
  %v51 = vld [vmem:[%s2 + $0x100] sm:$0xff]
  %v52 = vld [vmem:[%s2 + $0x108] sm:$0xff]
  %v53 = vld [vmem:[%s2 + $0x110] sm:$0xff]
  %v54 = vld [vmem:[%s2 + $0x118] sm:$0xff]
  %v55 = vld [vmem:[%s2 + $0x120] sm:$0xff]
  %v56 = vld [vmem:[%s2 + $0x128] sm:$0xff]
  %v57 = vld [vmem:[%s2 + $0x130] sm:$0xff]
  %v58 = vld [vmem:[%s2 + $0x138] sm:$0xff]
  %v59 = vld [vmem:[%s2 + $0x140] sm:$0xff]
  %v60 = vld [vmem:[%s2 + $0x148] sm:$0xff]
  %v61 = vld [vmem:[%s2 + $0x150] sm:$0xff]
  %v62 = vld [vmem:[%s2 + $0x158] sm:$0xff]
  %v63 = vld [vmem:[%s2 + $0x160] sm:$0xff]
  %v64 = vld [vmem:[%s2 + $0x168] sm:$0xff]
  %v65 = vld [vmem:[%s2 + $0x170] sm:$0xff]
  %v66 = vld [vmem:[%s2 + $0x178] sm:$0xff]
  %v67 = vld [vmem:[%s2 + $0x180] sm:$0xff]
  %v68 = vld [vmem:[%s2 + $0x188] sm:$0xff]
  %v69 = vld [vmem:[%s2 + $0x190] sm:$0xff]
  %v70 = vld [vmem:[%s2 + $0x198] sm:$0xff]
  %v71 = vld [vmem:[%s2 + $0x1a0] sm:$0xff]
  %v72 = vld [vmem:[%s2 + $0x1a8] sm:$0xff]
  %v73 = vld [vmem:[%s2 + $0x1b0] sm:$0xff]
  %v74 = vld [vmem:[%s2 + $0x1b8] sm:$0xff]
  %v75 = vld [vmem:[%s2 + $0x1c0] sm:$0xff]
  %v76 = vld [vmem:[%s2 + $0x1c8] sm:$0xff]
  %v77 = vld [vmem:[%s2 + $0x1d0] sm:$0xff]
  %v78 = vld [vmem:[%s2 + $0x1d8] sm:$0xff]
  %v79 = vld [vmem:[%s2 + $0x1e0] sm:$0xff]
  %v80 = vld [vmem:[%s2 + $0x1e8] sm:$0xff]
  %v81 = vld [vmem:[%s2 + $0x1f0] sm:$0xff]
  %v82 = vld [vmem:[%s2 + $0x1f8] sm:$0xff]
  %v83 = vld [vmem:[%s2 + $0x200] sm:$0xff]
  %v84 = vld [vmem:[%s2 + $0x208] sm:$0xff]
  %v85 = vld [vmem:[%s2 + $0x210] sm:$0xff]
  %v86 = vld [vmem:[%s2 + $0x218] sm:$0xff]
  %v87 = vld [vmem:[%s2 + $0x220] sm:$0xff]
  %v88 = vld [vmem:[%s2 + $0x228] sm:$0xff]
  %v89 = vld [vmem:[%s2 + $0x230] sm:$0xff]
  %v90 = vld [vmem:[%s2 + $0x238] sm:$0xff]
  %v91 = vld [vmem:[%s1] sm:$0xff]
  %v92 = vld [vmem:[%s1 + $0x8] sm:$0xff]
  %94 = vset.pattern.permute.xlu0 0
  %95 = vperm.xlu0 %94, %v91
  %v96 = vpop.permute.xlu0 %95
  %99 = vset.pattern.permute.xlu0 0
  %100 = vperm.xlu0 %99, %v92
  %v101 = vpop.permute.xlu0 %100
  %v105 = vunpack.c.l.b16 %v17
  %v106 = vunpack.c.l.b16 %v18
  %v107 = vpack.c.b16 %v106, %v105
  %v180 = vunpack.c.l.b16 %v19
  %v181 = vunpack.c.h.b16 %v19
  %v182 = vunpack.c.l.b16 %v20
  %v183 = vunpack.c.h.b16 %v20
  %v184 = vunpack.c.l.b16 %v21
  %v185 = vunpack.c.h.b16 %v21
  %v186 = vunpack.c.l.b16 %v22
  %v187 = vunpack.c.h.b16 %v22
  %v188 = vunpack.c.l.b16 %v23
  %v189 = vunpack.c.h.b16 %v23
  %v190 = vunpack.c.l.b16 %v24
  %v191 = vunpack.c.h.b16 %v24
  %v192 = vunpack.c.l.b16 %v25
  %v193 = vunpack.c.h.b16 %v25
  %v194 = vunpack.c.l.b16 %v26
  %v195 = vunpack.c.h.b16 %v26
  %v196 = vunpack.c.l.b16 %v27
  %v197 = vunpack.c.h.b16 %v27
  %v198 = vunpack.c.l.b16 %v28
  %v199 = vunpack.c.h.b16 %v28
  %v200 = vunpack.c.l.b16 %v29
  %v201 = vunpack.c.h.b16 %v29
  %v202 = vunpack.c.l.b16 %v30
  %v203 = vunpack.c.h.b16 %v30
  %v204 = vunpack.c.l.b16 %v31
  %v205 = vunpack.c.h.b16 %v31
  %v206 = vunpack.c.l.b16 %v32
  %v207 = vunpack.c.h.b16 %v32
  %v208 = vunpack.c.l.b16 %v33
  %v209 = vunpack.c.h.b16 %v33
  %v210 = vunpack.c.l.b16 %v34
  %v211 = vunpack.c.h.b16 %v34
  %v212 = vunpack.c.l.b16 %v35
  %v213 = vunpack.c.h.b16 %v35
  %v214 = vunpack.c.l.b16 %v36
  %v215 = vunpack.c.h.b16 %v36
  %v216 = vunpack.c.l.b16 %v37
  %v217 = vunpack.c.h.b16 %v37
  %v218 = vunpack.c.l.b16 %v38
  %v219 = vunpack.c.h.b16 %v38
  %v220 = vunpack.c.l.b16 %v39
  %v221 = vunpack.c.h.b16 %v39
  %v222 = vunpack.c.l.b16 %v40
  %v223 = vunpack.c.h.b16 %v40
  %v224 = vunpack.c.l.b16 %v41
  %v225 = vunpack.c.h.b16 %v41
  %v226 = vunpack.c.l.b16 %v42
  %v227 = vunpack.c.h.b16 %v42
  %v228 = vunpack.c.l.b16 %v43
  %v229 = vunpack.c.h.b16 %v43
  %v230 = vunpack.c.l.b16 %v44
  %v231 = vunpack.c.h.b16 %v44
  %v232 = vunpack.c.l.b16 %v45
  %v233 = vunpack.c.h.b16 %v45
  %v234 = vunpack.c.l.b16 %v46
  %v235 = vunpack.c.h.b16 %v46
  %v236 = vunpack.c.l.b16 %v47
  %v237 = vunpack.c.h.b16 %v47
  %v238 = vunpack.c.l.b16 %v48
  %v239 = vunpack.c.h.b16 %v48
  %v240 = vunpack.c.l.b16 %v49
  %v241 = vunpack.c.h.b16 %v49
  %v242 = vunpack.c.l.b16 %v50
  %v243 = vunpack.c.h.b16 %v50
  %v244 = vunpack.c.l.b16 %v51
  %v245 = vunpack.c.h.b16 %v51
  %v246 = vunpack.c.l.b16 %v52
  %v247 = vunpack.c.h.b16 %v52
  %v248 = vunpack.c.l.b16 %v53
  %v249 = vunpack.c.h.b16 %v53
  %v250 = vunpack.c.l.b16 %v54
  %v251 = vunpack.c.h.b16 %v54
  %v252 = vunpack.c.l.b16 %v55
  %v253 = vunpack.c.h.b16 %v55
  %v254 = vunpack.c.l.b16 %v56
  %v255 = vunpack.c.h.b16 %v56
  %v256 = vunpack.c.l.b16 %v57
  %v257 = vunpack.c.h.b16 %v57
  %v258 = vunpack.c.l.b16 %v58
  %v259 = vunpack.c.h.b16 %v58
  %v260 = vunpack.c.l.b16 %v59
  %v261 = vunpack.c.h.b16 %v59
  %v262 = vunpack.c.l.b16 %v60
  %v263 = vunpack.c.h.b16 %v60
  %v264 = vunpack.c.l.b16 %v61
  %v265 = vunpack.c.h.b16 %v61
  %v266 = vunpack.c.l.b16 %v62
  %v267 = vunpack.c.h.b16 %v62
  %v268 = vunpack.c.l.b16 %v63
  %v269 = vunpack.c.h.b16 %v63
  %v270 = vunpack.c.l.b16 %v64
  %v271 = vunpack.c.h.b16 %v64
  %v272 = vunpack.c.l.b16 %v65
  %v273 = vunpack.c.h.b16 %v65
  %v274 = vunpack.c.l.b16 %v66
  %v275 = vunpack.c.h.b16 %v66
  %v276 = vunpack.c.l.b16 %v67
  %v277 = vunpack.c.h.b16 %v67
  %v278 = vunpack.c.l.b16 %v68
  %v279 = vunpack.c.h.b16 %v68
  %v280 = vunpack.c.l.b16 %v69
  %v281 = vunpack.c.h.b16 %v69
  %v282 = vunpack.c.l.b16 %v70
  %v283 = vunpack.c.h.b16 %v70
  %v284 = vunpack.c.l.b16 %v71
  %v285 = vunpack.c.h.b16 %v71
  %v286 = vunpack.c.l.b16 %v72
  %v287 = vunpack.c.h.b16 %v72
  %v288 = vunpack.c.l.b16 %v73
  %v289 = vunpack.c.h.b16 %v73
  %v290 = vunpack.c.l.b16 %v74
  %v291 = vunpack.c.h.b16 %v74
  %v292 = vunpack.c.l.b16 %v75
  %v293 = vunpack.c.h.b16 %v75
  %v294 = vunpack.c.l.b16 %v76
  %v295 = vunpack.c.h.b16 %v76
  %v296 = vunpack.c.l.b16 %v77
  %v297 = vunpack.c.h.b16 %v77
  %v298 = vunpack.c.l.b16 %v78
  %v299 = vunpack.c.h.b16 %v78
  %v300 = vunpack.c.l.b16 %v79
  %v301 = vunpack.c.h.b16 %v79
  %v302 = vunpack.c.l.b16 %v80
  %v303 = vunpack.c.h.b16 %v80
  %v304 = vunpack.c.l.b16 %v81
  %v305 = vunpack.c.h.b16 %v81
  %v306 = vunpack.c.l.b16 %v82
  %v307 = vunpack.c.h.b16 %v82
  %v308 = vunpack.c.l.b16 %v83
  %v309 = vunpack.c.h.b16 %v83
  %v310 = vunpack.c.l.b16 %v84
  %v311 = vunpack.c.h.b16 %v84
  %v312 = vunpack.c.l.b16 %v85
  %v313 = vunpack.c.h.b16 %v85
  %v314 = vunpack.c.l.b16 %v86
  %v315 = vunpack.c.h.b16 %v86
  %v316 = vunpack.c.l.b16 %v87
  %v317 = vunpack.c.h.b16 %v87
  %v318 = vunpack.c.l.b16 %v88
  %v319 = vunpack.c.h.b16 %v88
  %v320 = vunpack.c.l.b16 %v89
  %v321 = vunpack.c.h.b16 %v89
  %v322 = vunpack.c.l.b16 %v90
  %v323 = vunpack.c.h.b16 %v90
  %v324 = vpack.c.b16 %v196, %v180
  %v325 = vpack.c.b16 %v197, %v181
  %v326 = vpack.c.b16 %v198, %v182
  %v327 = vpack.c.b16 %v199, %v183
  %v328 = vpack.c.b16 %v200, %v184
  %v329 = vpack.c.b16 %v201, %v185
  %v330 = vpack.c.b16 %v202, %v186
  %v331 = vpack.c.b16 %v203, %v187
  %v332 = vpack.c.b16 %v204, %v188
  %v333 = vpack.c.b16 %v205, %v189
  %v334 = vpack.c.b16 %v206, %v190
  %v335 = vpack.c.b16 %v207, %v191
  %v336 = vpack.c.b16 %v208, %v192
  %v337 = vpack.c.b16 %v209, %v193
  %v338 = vpack.c.b16 %v210, %v194
  %v339 = vpack.c.b16 %v211, %v195
  %v340 = vpack.c.b16 %v228, %v212
  %v341 = vpack.c.b16 %v229, %v213
  %v342 = vpack.c.b16 %v230, %v214
  %v343 = vpack.c.b16 %v231, %v215
  %v344 = vpack.c.b16 %v232, %v216
  %v345 = vpack.c.b16 %v233, %v217
  %v346 = vpack.c.b16 %v234, %v218
  %v347 = vpack.c.b16 %v235, %v219
  %v348 = vpack.c.b16 %v236, %v220
  %v349 = vpack.c.b16 %v237, %v221
  %v350 = vpack.c.b16 %v238, %v222
  %v351 = vpack.c.b16 %v239, %v223
  %v352 = vpack.c.b16 %v240, %v224
  %v353 = vpack.c.b16 %v241, %v225
  %v354 = vpack.c.b16 %v242, %v226
  %v355 = vpack.c.b16 %v243, %v227
  %v356 = vpack.c.b16 %v260, %v244
  %v357 = vpack.c.b16 %v261, %v245
  %v358 = vpack.c.b16 %v262, %v246
  %v359 = vpack.c.b16 %v263, %v247
  %v360 = vpack.c.b16 %v264, %v248
  %v361 = vpack.c.b16 %v265, %v249
  %v362 = vpack.c.b16 %v266, %v250
  %v363 = vpack.c.b16 %v267, %v251
  %v364 = vpack.c.b16 %v268, %v252
  %v365 = vpack.c.b16 %v269, %v253
  %v366 = vpack.c.b16 %v270, %v254
  %v367 = vpack.c.b16 %v271, %v255
  %v368 = vpack.c.b16 %v272, %v256
  %v369 = vpack.c.b16 %v273, %v257
  %v370 = vpack.c.b16 %v274, %v258
  %v371 = vpack.c.b16 %v275, %v259
  %v372 = vpack.c.b16 %v292, %v276
  %v373 = vpack.c.b16 %v293, %v277
  %v374 = vpack.c.b16 %v294, %v278
  %v375 = vpack.c.b16 %v295, %v279
  %v376 = vpack.c.b16 %v296, %v280
  %v377 = vpack.c.b16 %v297, %v281
  %v378 = vpack.c.b16 %v298, %v282
  %v379 = vpack.c.b16 %v299, %v283
  %v380 = vpack.c.b16 %v300, %v284
  %v381 = vpack.c.b16 %v301, %v285
  %v382 = vpack.c.b16 %v302, %v286
  %v383 = vpack.c.b16 %v303, %v287
  %v384 = vpack.c.b16 %v304, %v288
  %v385 = vpack.c.b16 %v305, %v289
  %v386 = vpack.c.b16 %v306, %v290
  %v387 = vpack.c.b16 %v307, %v291
  %v388 = vpack.c.b16 %v308, %v308
  %v389 = vpack.c.b16 %v309, %v309
  %v390 = vpack.c.b16 %v310, %v310
  %v391 = vpack.c.b16 %v311, %v311
  %v392 = vpack.c.b16 %v312, %v312
  %v393 = vpack.c.b16 %v313, %v313
  %v394 = vpack.c.b16 %v314, %v314
  %v395 = vpack.c.b16 %v315, %v315
  %v396 = vpack.c.b16 %v316, %v316
  %v397 = vpack.c.b16 %v317, %v317
  %v398 = vpack.c.b16 %v318, %v318
  %v399 = vpack.c.b16 %v319, %v319
  %v400 = vpack.c.b16 %v320, %v320
  %v401 = vpack.c.b16 %v321, %v321
  %v402 = vpack.c.b16 %v322, %v322
  %v403 = vpack.c.b16 %v323, %v323
  %vm468 = vcmask 588800
  %v470 = vsel %vm468, %v107, 0
  %vm472 = vcmask 1043456
  %v474 = vsel %vm472, %v388, 0
  %v477 = vsel %vm472, %v389, 0
  %v480 = vsel %vm472, %v390, 0
  %v483 = vsel %vm472, %v391, 0
  %v486 = vsel %vm472, %v392, 0
  %v489 = vsel %vm472, %v393, 0
  %v492 = vsel %vm472, %v394, 0
  %v495 = vsel %vm472, %v395, 0
  %v498 = vsel %vm472, %v396, 0
  %v501 = vsel %vm472, %v397, 0
  %v504 = vsel %vm472, %v398, 0
  %v507 = vsel %vm472, %v399, 0
  %v510 = vsel %vm472, %v400, 0
  %v513 = vsel %vm472, %v401, 0
  %v516 = vsel %vm472, %v402, 0
  %v519 = vsel %vm472, %v403, 0
  %521 = vmatprep.subr.bf16.mxu0 %v325
  %522 = vmatpush1.bf16.msra.mxu0 %v324
  %523 = vmatprep.subr.bf16.mxu0 %v341
  %524 = vmatpush1.bf16.msra.mxu0 %v340
  %525 = vmatprep.subr.bf16.mxu0 %v357
  %526 = vmatpush1.bf16.msra.mxu0 %v356
  %527 = vmatprep.subr.bf16.mxu0 %v373
  %528 = vmatpush1.bf16.msra.mxu0 %v372
  %529 = vmatprep.subr.bf16.mxu0 %v477
  %530 = vmatpush1.bf16.msra.mxu0 %v474
  %531 = vmatprep.subr.bf16.mxu0 0
  %532 = vmatpush1.bf16.msra.mxu0 0
  %533 = vmatprep.subr.bf16.mxu0 0
  %534 = vmatpush1.bf16.msra.mxu0 0
  %535 = vmatprep.subr.bf16.mxu0 0
  %536 = vmatpush1.bf16.msra.mxu0 0
  %537 = vmatprep.subr.bf16.mxu0 0
  %538 = vmatpush1.bf16.msra.mxu0 0
  %539 = vmatprep.subr.bf16.mxu0 0
  %540 = vmatpush1.bf16.msra.mxu0 0
  %541 = vmatprep.subr.bf16.mxu0 0
  %542 = vmatpush1.bf16.msra.mxu0 0
  %543 = vmatprep.subr.bf16.mxu0 0
  %544 = vmatpush1.bf16.msra.mxu0 0
  %545 = vmatprep.subr.bf16.mxu0 0
  %546 = vmatpush1.bf16.msra.mxu0 0
  %547 = vmatprep.subr.bf16.mxu0 0
  %548 = vmatpush1.bf16.msra.mxu0 0
  %549 = vmatprep.subr.bf16.mxu0 0
  %550 = vmatpush1.bf16.msra.mxu0 0
  %551 = vmatprep.subr.bf16.mxu0 0
  %552 = vmatpush1.bf16.msra.mxu0 0
  %553 = vmatprep.mubr.bf16.mxu0 0
  %554 = vmatmul.mubr.bf16.gmra.mrb[0].mxu0 %v470
  %v555 = vpop.f32.mrb[0].mxu0
  %v556 = vadd.f32 %v96, %v555
  %v557 = vpop.f32.mrb[0].mxu0
  %v558 = vadd.f32 %v96, %v557
  %v559 = vpop.f32.mrb[0].mxu0
  %v560 = vadd.f32 %v101, %v559
  %v561 = vpop.f32.mrb[0].mxu0
  %v562 = vadd.f32 %v101, %v561
  %563 = vdwg.mxu0
  %564 = vmatprep.subr.bf16.mxu0 %v327
  %565 = vmatpush1.bf16.msra.mxu0 %v326
  %566 = vmatprep.subr.bf16.mxu0 %v343
  %567 = vmatpush1.bf16.msra.mxu0 %v342
  %568 = vmatprep.subr.bf16.mxu0 %v359
  %569 = vmatpush1.bf16.msra.mxu0 %v358
  %570 = vmatprep.subr.bf16.mxu0 %v375
  %571 = vmatpush1.bf16.msra.mxu0 %v374
  %572 = vmatprep.subr.bf16.mxu0 %v483
  %573 = vmatpush1.bf16.msra.mxu0 %v480
  %574 = vmatprep.subr.bf16.mxu0 0
  %575 = vmatpush1.bf16.msra.mxu0 0
  %576 = vmatprep.subr.bf16.mxu0 0
  %577 = vmatpush1.bf16.msra.mxu0 0
  %578 = vmatprep.subr.bf16.mxu0 0
  %579 = vmatpush1.bf16.msra.mxu0 0
  %580 = vmatprep.subr.bf16.mxu0 0
  %581 = vmatpush1.bf16.msra.mxu0 0
  %582 = vmatprep.subr.bf16.mxu0 0
  %583 = vmatpush1.bf16.msra.mxu0 0
  %584 = vmatprep.subr.bf16.mxu0 0
  %585 = vmatpush1.bf16.msra.mxu0 0
  %586 = vmatprep.subr.bf16.mxu0 0
  %587 = vmatpush1.bf16.msra.mxu0 0
  %588 = vmatprep.subr.bf16.mxu0 0
  %589 = vmatpush1.bf16.msra.mxu0 0
  %590 = vmatprep.subr.bf16.mxu0 0
  %591 = vmatpush1.bf16.msra.mxu0 0
  %592 = vmatprep.subr.bf16.mxu0 0
  %593 = vmatpush1.bf16.msra.mxu0 0
  %594 = vmatprep.subr.bf16.mxu0 0
  %595 = vmatpush1.bf16.msra.mxu0 0
  %596 = vmatprep.mubr.bf16.mxu0 0
  %597 = vmatmul.mubr.bf16.gmra.mrb[0].mxu0 %v470
  %v598 = vpop.f32.mrb[0].mxu0
  %v599 = vadd.f32 %v96, %v598
  %v600 = vpop.f32.mrb[0].mxu0
  %v601 = vadd.f32 %v96, %v600
  %v602 = vpop.f32.mrb[0].mxu0
  %v603 = vadd.f32 %v101, %v602
  %v604 = vpop.f32.mrb[0].mxu0
  %v605 = vadd.f32 %v101, %v604
  %606 = vdwg.mxu0
  %607 = vmatprep.subr.bf16.mxu0 %v329
  %608 = vmatpush1.bf16.msra.mxu0 %v328
  %609 = vmatprep.subr.bf16.mxu0 %v345
  %610 = vmatpush1.bf16.msra.mxu0 %v344
  %611 = vmatprep.subr.bf16.mxu0 %v361
  %612 = vmatpush1.bf16.msra.mxu0 %v360
  %613 = vmatprep.subr.bf16.mxu0 %v377
  %614 = vmatpush1.bf16.msra.mxu0 %v376
  %615 = vmatprep.subr.bf16.mxu0 %v489
  %616 = vmatpush1.bf16.msra.mxu0 %v486
  %617 = vmatprep.subr.bf16.mxu0 0
  %618 = vmatpush1.bf16.msra.mxu0 0
  %619 = vmatprep.subr.bf16.mxu0 0
  %620 = vmatpush1.bf16.msra.mxu0 0
  %621 = vmatprep.subr.bf16.mxu0 0
  %622 = vmatpush1.bf16.msra.mxu0 0
  %623 = vmatprep.subr.bf16.mxu0 0
  %624 = vmatpush1.bf16.msra.mxu0 0
  %625 = vmatprep.subr.bf16.mxu0 0
  %626 = vmatpush1.bf16.msra.mxu0 0
  %627 = vmatprep.subr.bf16.mxu0 0
  %628 = vmatpush1.bf16.msra.mxu0 0
  %629 = vmatprep.subr.bf16.mxu0 0
  %630 = vmatpush1.bf16.msra.mxu0 0
  %631 = vmatprep.subr.bf16.mxu0 0
  %632 = vmatpush1.bf16.msra.mxu0 0
  %633 = vmatprep.subr.bf16.mxu0 0
  %634 = vmatpush1.bf16.msra.mxu0 0
  %635 = vmatprep.subr.bf16.mxu0 0
  %636 = vmatpush1.bf16.msra.mxu0 0
  %637 = vmatprep.subr.bf16.mxu0 0
  %638 = vmatpush1.bf16.msra.mxu0 0
  %639 = vmatprep.mubr.bf16.mxu0 0
  %640 = vmatmul.mubr.bf16.gmra.mrb[0].mxu0 %v470
  %v641 = vpop.f32.mrb[0].mxu0
  %v642 = vadd.f32 %v96, %v641
  %v643 = vpop.f32.mrb[0].mxu0
  %v644 = vadd.f32 %v96, %v643
  %v645 = vpop.f32.mrb[0].mxu0
  %v646 = vadd.f32 %v101, %v645
  %v647 = vpop.f32.mrb[0].mxu0
  %v648 = vadd.f32 %v101, %v647
  %649 = vdwg.mxu0
  %650 = vmatprep.subr.bf16.mxu0 %v331
  %651 = vmatpush1.bf16.msra.mxu0 %v330
  %652 = vmatprep.subr.bf16.mxu0 %v347
  %653 = vmatpush1.bf16.msra.mxu0 %v346
  %654 = vmatprep.subr.bf16.mxu0 %v363
  %655 = vmatpush1.bf16.msra.mxu0 %v362
  %656 = vmatprep.subr.bf16.mxu0 %v379
  %657 = vmatpush1.bf16.msra.mxu0 %v378
  %658 = vmatprep.subr.bf16.mxu0 %v495
  %659 = vmatpush1.bf16.msra.mxu0 %v492
  %660 = vmatprep.subr.bf16.mxu0 0
  %661 = vmatpush1.bf16.msra.mxu0 0
  %662 = vmatprep.subr.bf16.mxu0 0
  %663 = vmatpush1.bf16.msra.mxu0 0
  %664 = vmatprep.subr.bf16.mxu0 0
  %665 = vmatpush1.bf16.msra.mxu0 0
  %666 = vmatprep.subr.bf16.mxu0 0
  %667 = vmatpush1.bf16.msra.mxu0 0
  %668 = vmatprep.subr.bf16.mxu0 0
  %669 = vmatpush1.bf16.msra.mxu0 0
  %670 = vmatprep.subr.bf16.mxu0 0
  %671 = vmatpush1.bf16.msra.mxu0 0
  %672 = vmatprep.subr.bf16.mxu0 0
  %673 = vmatpush1.bf16.msra.mxu0 0
  %674 = vmatprep.subr.bf16.mxu0 0
  %675 = vmatpush1.bf16.msra.mxu0 0
  %676 = vmatprep.subr.bf16.mxu0 0
  %677 = vmatpush1.bf16.msra.mxu0 0
  %678 = vmatprep.subr.bf16.mxu0 0
  %679 = vmatpush1.bf16.msra.mxu0 0
  %680 = vmatprep.subr.bf16.mxu0 0
  %681 = vmatpush1.bf16.msra.mxu0 0
  %682 = vmatprep.mubr.bf16.mxu0 0
  %683 = vmatmul.mubr.bf16.gmra.mrb[0].mxu0 %v470
  %v684 = vpop.f32.mrb[0].mxu0
  %v685 = vadd.f32 %v96, %v684
  %v686 = vpop.f32.mrb[0].mxu0
  %v687 = vadd.f32 %v96, %v686
  %v688 = vpop.f32.mrb[0].mxu0
  %v689 = vadd.f32 %v101, %v688
  %v690 = vpop.f32.mrb[0].mxu0
  %v691 = vadd.f32 %v101, %v690
  %692 = vdwg.mxu0
  %693 = vmatprep.subr.bf16.mxu0 %v333
  %694 = vmatpush1.bf16.msra.mxu0 %v332
  %695 = vmatprep.subr.bf16.mxu0 %v349
  %696 = vmatpush1.bf16.msra.mxu0 %v348
  %697 = vmatprep.subr.bf16.mxu0 %v365
  %698 = vmatpush1.bf16.msra.mxu0 %v364
  %699 = vmatprep.subr.bf16.mxu0 %v381
  %700 = vmatpush1.bf16.msra.mxu0 %v380
  %701 = vmatprep.subr.bf16.mxu0 %v501
  %702 = vmatpush1.bf16.msra.mxu0 %v498
  %703 = vmatprep.subr.bf16.mxu0 0
  %704 = vmatpush1.bf16.msra.mxu0 0
  %705 = vmatprep.subr.bf16.mxu0 0
  %706 = vmatpush1.bf16.msra.mxu0 0
  %707 = vmatprep.subr.bf16.mxu0 0
  %708 = vmatpush1.bf16.msra.mxu0 0
  %709 = vmatprep.subr.bf16.mxu0 0
  %710 = vmatpush1.bf16.msra.mxu0 0
  %711 = vmatprep.subr.bf16.mxu0 0
  %712 = vmatpush1.bf16.msra.mxu0 0
  %713 = vmatprep.subr.bf16.mxu0 0
  %714 = vmatpush1.bf16.msra.mxu0 0
  %715 = vmatprep.subr.bf16.mxu0 0
  %716 = vmatpush1.bf16.msra.mxu0 0
  %717 = vmatprep.subr.bf16.mxu0 0
  %718 = vmatpush1.bf16.msra.mxu0 0
  %719 = vmatprep.subr.bf16.mxu0 0
  %720 = vmatpush1.bf16.msra.mxu0 0
  %721 = vmatprep.subr.bf16.mxu0 0
  %722 = vmatpush1.bf16.msra.mxu0 0
  %723 = vmatprep.subr.bf16.mxu0 0
  %724 = vmatpush1.bf16.msra.mxu0 0
  %725 = vmatprep.mubr.bf16.mxu0 0
  %726 = vmatmul.mubr.bf16.gmra.mrb[0].mxu0 %v470
  %v727 = vpop.f32.mrb[0].mxu0
  %v728 = vadd.f32 %v96, %v727
  %v729 = vpop.f32.mrb[0].mxu0
  %v730 = vadd.f32 %v96, %v729
  %v731 = vpop.f32.mrb[0].mxu0
  %v732 = vadd.f32 %v101, %v731
  %v733 = vpop.f32.mrb[0].mxu0
  %v734 = vadd.f32 %v101, %v733
  %735 = vdwg.mxu0
  %736 = vmatprep.subr.bf16.mxu0 %v335
  %737 = vmatpush1.bf16.msra.mxu0 %v334
  %738 = vmatprep.subr.bf16.mxu0 %v351
  %739 = vmatpush1.bf16.msra.mxu0 %v350
  %740 = vmatprep.subr.bf16.mxu0 %v367
  %741 = vmatpush1.bf16.msra.mxu0 %v366
  %742 = vmatprep.subr.bf16.mxu0 %v383
  %743 = vmatpush1.bf16.msra.mxu0 %v382
  %744 = vmatprep.subr.bf16.mxu0 %v507
  %745 = vmatpush1.bf16.msra.mxu0 %v504
  %746 = vmatprep.subr.bf16.mxu0 0
  %747 = vmatpush1.bf16.msra.mxu0 0
  %748 = vmatprep.subr.bf16.mxu0 0
  %749 = vmatpush1.bf16.msra.mxu0 0
  %750 = vmatprep.subr.bf16.mxu0 0
  %751 = vmatpush1.bf16.msra.mxu0 0
  %752 = vmatprep.subr.bf16.mxu0 0
  %753 = vmatpush1.bf16.msra.mxu0 0
  %754 = vmatprep.subr.bf16.mxu0 0
  %755 = vmatpush1.bf16.msra.mxu0 0
  %756 = vmatprep.subr.bf16.mxu0 0
  %757 = vmatpush1.bf16.msra.mxu0 0
  %758 = vmatprep.subr.bf16.mxu0 0
  %759 = vmatpush1.bf16.msra.mxu0 0
  %760 = vmatprep.subr.bf16.mxu0 0
  %761 = vmatpush1.bf16.msra.mxu0 0
  %762 = vmatprep.subr.bf16.mxu0 0
  %763 = vmatpush1.bf16.msra.mxu0 0
  %764 = vmatprep.subr.bf16.mxu0 0
  %765 = vmatpush1.bf16.msra.mxu0 0
  %766 = vmatprep.subr.bf16.mxu0 0
  %767 = vmatpush1.bf16.msra.mxu0 0
  %768 = vmatprep.mubr.bf16.mxu0 0
  %769 = vmatmul.mubr.bf16.gmra.mrb[0].mxu0 %v470
  %v770 = vpop.f32.mrb[0].mxu0
  %v771 = vadd.f32 %v96, %v770
  %v772 = vpop.f32.mrb[0].mxu0
  %v773 = vadd.f32 %v96, %v772
  %v774 = vpop.f32.mrb[0].mxu0
  %v775 = vadd.f32 %v101, %v774
  %v776 = vpop.f32.mrb[0].mxu0
  %v777 = vadd.f32 %v101, %v776
  %778 = vdwg.mxu0
  %779 = vmatprep.subr.bf16.mxu0 %v337
  %780 = vmatpush1.bf16.msra.mxu0 %v336
  %781 = vmatprep.subr.bf16.mxu0 %v353
  %782 = vmatpush1.bf16.msra.mxu0 %v352
  %783 = vmatprep.subr.bf16.mxu0 %v369
  %784 = vmatpush1.bf16.msra.mxu0 %v368
  %785 = vmatprep.subr.bf16.mxu0 %v385
  %786 = vmatpush1.bf16.msra.mxu0 %v384
  %787 = vmatprep.subr.bf16.mxu0 %v513
  %788 = vmatpush1.bf16.msra.mxu0 %v510
  %789 = vmatprep.subr.bf16.mxu0 0
  %790 = vmatpush1.bf16.msra.mxu0 0
  %791 = vmatprep.subr.bf16.mxu0 0
  %792 = vmatpush1.bf16.msra.mxu0 0
  %793 = vmatprep.subr.bf16.mxu0 0
  %794 = vmatpush1.bf16.msra.mxu0 0
  %795 = vmatprep.subr.bf16.mxu0 0
  %796 = vmatpush1.bf16.msra.mxu0 0
  %797 = vmatprep.subr.bf16.mxu0 0
  %798 = vmatpush1.bf16.msra.mxu0 0
  %799 = vmatprep.subr.bf16.mxu0 0
  %800 = vmatpush1.bf16.msra.mxu0 0
  %801 = vmatprep.subr.bf16.mxu0 0
  %802 = vmatpush1.bf16.msra.mxu0 0
  %803 = vmatprep.subr.bf16.mxu0 0
  %804 = vmatpush1.bf16.msra.mxu0 0
  %805 = vmatprep.subr.bf16.mxu0 0
  %806 = vmatpush1.bf16.msra.mxu0 0
  %807 = vmatprep.subr.bf16.mxu0 0
  %808 = vmatpush1.bf16.msra.mxu0 0
  %809 = vmatprep.subr.bf16.mxu0 0
  %810 = vmatpush1.bf16.msra.mxu0 0
  %811 = vmatprep.mubr.bf16.mxu0 0
  %812 = vmatmul.mubr.bf16.gmra.mrb[0].mxu0 %v470
  %v813 = vpop.f32.mrb[0].mxu0
  %v814 = vadd.f32 %v96, %v813
  %v815 = vpop.f32.mrb[0].mxu0
  %v816 = vadd.f32 %v96, %v815
  %v817 = vpop.f32.mrb[0].mxu0
  %v818 = vadd.f32 %v101, %v817
  %v819 = vpop.f32.mrb[0].mxu0
  %v820 = vadd.f32 %v101, %v819
  %821 = vdwg.mxu0
  %822 = vmatprep.subr.bf16.mxu0 %v339
  %823 = vmatpush1.bf16.msra.mxu0 %v338
  %824 = vmatprep.subr.bf16.mxu0 %v355
  %825 = vmatpush1.bf16.msra.mxu0 %v354
  %826 = vmatprep.subr.bf16.mxu0 %v371
  %827 = vmatpush1.bf16.msra.mxu0 %v370
  %828 = vmatprep.subr.bf16.mxu0 %v387
  %829 = vmatpush1.bf16.msra.mxu0 %v386
  %830 = vmatprep.subr.bf16.mxu0 %v519
  %831 = vmatpush1.bf16.msra.mxu0 %v516
  %832 = vmatprep.subr.bf16.mxu0 0
  %833 = vmatpush1.bf16.msra.mxu0 0
  %834 = vmatprep.subr.bf16.mxu0 0
  %835 = vmatpush1.bf16.msra.mxu0 0
  %836 = vmatprep.subr.bf16.mxu0 0
  %837 = vmatpush1.bf16.msra.mxu0 0
  %838 = vmatprep.subr.bf16.mxu0 0
  %839 = vmatpush1.bf16.msra.mxu0 0
  %840 = vmatprep.subr.bf16.mxu0 0
  %841 = vmatpush1.bf16.msra.mxu0 0
  %842 = vmatprep.subr.bf16.mxu0 0
  %843 = vmatpush1.bf16.msra.mxu0 0
  %844 = vmatprep.subr.bf16.mxu0 0
  %845 = vmatpush1.bf16.msra.mxu0 0
  %846 = vmatprep.subr.bf16.mxu0 0
  %847 = vmatpush1.bf16.msra.mxu0 0
  %848 = vmatprep.subr.bf16.mxu0 0
  %849 = vmatpush1.bf16.msra.mxu0 0
  %850 = vmatprep.subr.bf16.mxu0 0
  %851 = vmatpush1.bf16.msra.mxu0 0
  %852 = vmatprep.subr.bf16.mxu0 0
  %853 = vmatpush1.bf16.msra.mxu0 0
  %854 = vmatprep.mubr.bf16.mxu0 0
  %855 = vmatmul.mubr.bf16.gmra.mrb[0].mxu0 %v470
  %v856 = vpop.f32.mrb[0].mxu0
  %v857 = vadd.f32 %v96, %v856
  %v858 = vpop.f32.mrb[0].mxu0
  %v859 = vadd.f32 %v96, %v858
  %v860 = vpop.f32.mrb[0].mxu0
  %v861 = vadd.f32 %v101, %v860
  %v862 = vpop.f32.mrb[0].mxu0
  %v863 = vadd.f32 %v101, %v862
  %864 = vdwg.mxu0
  %v865 = vmax.f32 %v556, 0.0
  %v866 = vmax.f32 %v558, 0.0
  %v867 = vmax.f32 %v599, 0.0
  %v868 = vmax.f32 %v601, 0.0
  %v869 = vmax.f32 %v642, 0.0
  %v870 = vmax.f32 %v644, 0.0
  %v871 = vmax.f32 %v685, 0.0
  %v872 = vmax.f32 %v687, 0.0
  %v873 = vmax.f32 %v728, 0.0
  %v874 = vmax.f32 %v730, 0.0
  %v875 = vmax.f32 %v771, 0.0
  %v876 = vmax.f32 %v773, 0.0
  %v877 = vmax.f32 %v814, 0.0
  %v878 = vmax.f32 %v816, 0.0
  %v879 = vmax.f32 %v857, 0.0
  %v880 = vmax.f32 %v859, 0.0
  %v881 = vmax.f32 %v560, 0.0
  %v882 = vmax.f32 %v562, 0.0
  %v883 = vmax.f32 %v603, 0.0
  %v884 = vmax.f32 %v605, 0.0
  %v885 = vmax.f32 %v646, 0.0
  %v886 = vmax.f32 %v648, 0.0
  %v887 = vmax.f32 %v689, 0.0
  %v888 = vmax.f32 %v691, 0.0
  %v889 = vmax.f32 %v732, 0.0
  %v890 = vmax.f32 %v734, 0.0
  %v891 = vmax.f32 %v775, 0.0
  %v892 = vmax.f32 %v777, 0.0
  %v893 = vmax.f32 %v818, 0.0
  %v894 = vmax.f32 %v820, 0.0
  %v895 = vmax.f32 %v861, 0.0
  %v896 = vmax.f32 %v863, 0.0
  %v897 = vadd.f32 %v865, %v866
  %v898 = vadd.f32 %v897, %v867
  %v899 = vadd.f32 %v898, %v868
  %v900 = vadd.f32 %v899, %v869
  %v901 = vadd.f32 %v900, %v870
  %v902 = vadd.f32 %v901, %v871
  %v903 = vadd.f32 %v902, %v872
  %v904 = vadd.f32 %v903, %v873
  %v905 = vadd.f32 %v904, %v874
  %v906 = vadd.f32 %v905, %v875
  %v907 = vadd.f32 %v906, %v876
  %v908 = vadd.f32 %v907, %v877
  %v909 = vadd.f32 %v908, %v878
  %v910 = vadd.f32 %v909, %v879
  %v911 = vadd.f32 %v910, %v880
  %912 = vadd.xlane.f32.xlu0 %v911
  %v913 = vpop.xlane.xlu0 %912
  %v914 = vadd.f32 %v881, %v882
  %v915 = vadd.f32 %v914, %v883
  %v916 = vadd.f32 %v915, %v884
  %v917 = vadd.f32 %v916, %v885
  %v918 = vadd.f32 %v917, %v886
  %v919 = vadd.f32 %v918, %v887
  %v920 = vadd.f32 %v919, %v888
  %v921 = vadd.f32 %v920, %v889
  %v922 = vadd.f32 %v921, %v890
  %v923 = vadd.f32 %v922, %v891
  %v924 = vadd.f32 %v923, %v892
  %v925 = vadd.f32 %v924, %v893
  %v926 = vadd.f32 %v925, %v894
  %v927 = vadd.f32 %v926, %v895
  %v928 = vadd.f32 %v927, %v896
  %929 = vadd.xlane.f32.xlu0 %v928
  %v930 = vpop.xlane.xlu0 %929
  %v931 = vmul.f32 %v865, %v865
  %v932 = vmul.f32 %v866, %v866
  %v933 = vmul.f32 %v867, %v867
  %v934 = vmul.f32 %v868, %v868
  %v935 = vmul.f32 %v869, %v869
  %v936 = vmul.f32 %v870, %v870
  %v937 = vmul.f32 %v871, %v871
  %v938 = vmul.f32 %v872, %v872
  %v939 = vmul.f32 %v873, %v873
  %v940 = vmul.f32 %v874, %v874
  %v941 = vmul.f32 %v875, %v875
  %v942 = vmul.f32 %v876, %v876
  %v943 = vmul.f32 %v877, %v877
  %v944 = vmul.f32 %v878, %v878
  %v945 = vmul.f32 %v879, %v879
  %v946 = vmul.f32 %v880, %v880
  %v947 = vmul.f32 %v881, %v881
  %v948 = vmul.f32 %v882, %v882
  %v949 = vmul.f32 %v883, %v883
  %v950 = vmul.f32 %v884, %v884
  %v951 = vmul.f32 %v885, %v885
  %v952 = vmul.f32 %v886, %v886
  %v953 = vmul.f32 %v887, %v887
  %v954 = vmul.f32 %v888, %v888
  %v955 = vmul.f32 %v889, %v889
  %v956 = vmul.f32 %v890, %v890
  %v957 = vmul.f32 %v891, %v891
  %v958 = vmul.f32 %v892, %v892
  %v959 = vmul.f32 %v893, %v893
  %v960 = vmul.f32 %v894, %v894
  %v961 = vmul.f32 %v895, %v895
  %v962 = vmul.f32 %v896, %v896
  %v963 = vadd.f32 %v931, %v932
  %v964 = vadd.f32 %v963, %v933
  %v965 = vadd.f32 %v964, %v934
  %v966 = vadd.f32 %v965, %v935
  %v967 = vadd.f32 %v966, %v936
  %v968 = vadd.f32 %v967, %v937
  %v969 = vadd.f32 %v968, %v938
  %v970 = vadd.f32 %v969, %v939
  %v971 = vadd.f32 %v970, %v940
  %v972 = vadd.f32 %v971, %v941
  %v973 = vadd.f32 %v972, %v942
  %v974 = vadd.f32 %v973, %v943
  %v975 = vadd.f32 %v974, %v944
  %v976 = vadd.f32 %v975, %v945
  %v977 = vadd.f32 %v976, %v946
  %978 = vadd.xlane.f32.xlu0 %v977
  %v979 = vpop.xlane.xlu0 %978
  %v980 = vadd.f32 %v947, %v948
  %v981 = vadd.f32 %v980, %v949
  %v982 = vadd.f32 %v981, %v950
  %v983 = vadd.f32 %v982, %v951
  %v984 = vadd.f32 %v983, %v952
  %v985 = vadd.f32 %v984, %v953
  %v986 = vadd.f32 %v985, %v954
  %v987 = vadd.f32 %v986, %v955
  %v988 = vadd.f32 %v987, %v956
  %v989 = vadd.f32 %v988, %v957
  %v990 = vadd.f32 %v989, %v958
  %v991 = vadd.f32 %v990, %v959
  %v992 = vadd.f32 %v991, %v960
  %v993 = vadd.f32 %v992, %v961
  %v994 = vadd.f32 %v993, %v962
  %995 = vadd.xlane.f32.xlu0 %v994
  %v996 = vpop.xlane.xlu0 %995
  %vm997 = vcmask 7168
  %v998 = vsel %vm997, %v913, %v979
  %v999 = vsel %vm997, %v930, %v996
  %vm1000 = vcmask 15360
  %1001 = vst.msk [vmem:[%s4] sm:$0xff] %vm1000, %v998
  %1002 = vst.msk [vmem:[%s4 + $0x8] sm:$0xff] %vm1000, %v999
  %v1003 = vpack.c.bf16 %v881, %v865
  %v1004 = vpack.c.bf16 %v882, %v866
  %v1005 = vpack.c.bf16 %v883, %v867
  %v1006 = vpack.c.bf16 %v884, %v868
  %v1007 = vpack.c.bf16 %v885, %v869
  %v1008 = vpack.c.bf16 %v886, %v870
  %v1009 = vpack.c.bf16 %v887, %v871
  %v1010 = vpack.c.bf16 %v888, %v872
  %v1011 = vpack.c.bf16 %v889, %v873
  %v1012 = vpack.c.bf16 %v890, %v874
  %v1013 = vpack.c.bf16 %v891, %v875
  %v1014 = vpack.c.bf16 %v892, %v876
  %v1015 = vpack.c.bf16 %v893, %v877
  %v1016 = vpack.c.bf16 %v894, %v878
  %v1017 = vpack.c.bf16 %v895, %v879
  %v1018 = vpack.c.bf16 %v896, %v880
  %v1035 = vunpack.c.l.b16 %v1003
  %v1036 = vunpack.c.l.b16 %v1004
  %v1037 = vunpack.c.l.b16 %v1005
  %v1038 = vunpack.c.l.b16 %v1006
  %v1039 = vunpack.c.l.b16 %v1007
  %v1040 = vunpack.c.l.b16 %v1008
  %v1041 = vunpack.c.l.b16 %v1009
  %v1042 = vunpack.c.l.b16 %v1010
  %v1043 = vunpack.c.l.b16 %v1011
  %v1044 = vunpack.c.l.b16 %v1012
  %v1045 = vunpack.c.l.b16 %v1013
  %v1046 = vunpack.c.l.b16 %v1014
  %v1047 = vunpack.c.l.b16 %v1015
  %v1048 = vunpack.c.l.b16 %v1016
  %v1049 = vunpack.c.l.b16 %v1017
  %v1050 = vunpack.c.l.b16 %v1018
  %v1051 = vunpack.c.h.b16 %v1003
  %v1052 = vunpack.c.h.b16 %v1004
  %v1053 = vunpack.c.h.b16 %v1005
  %v1054 = vunpack.c.h.b16 %v1006
  %v1055 = vunpack.c.h.b16 %v1007
  %v1056 = vunpack.c.h.b16 %v1008
  %v1057 = vunpack.c.h.b16 %v1009
  %v1058 = vunpack.c.h.b16 %v1010
  %v1059 = vunpack.c.h.b16 %v1011
  %v1060 = vunpack.c.h.b16 %v1012
  %v1061 = vunpack.c.h.b16 %v1013
  %v1062 = vunpack.c.h.b16 %v1014
  %v1063 = vunpack.c.h.b16 %v1015
  %v1064 = vunpack.c.h.b16 %v1016
  %v1065 = vunpack.c.h.b16 %v1017
  %v1066 = vunpack.c.h.b16 %v1018
  %v1067 = vpack.c.b16 %v1036, %v1035
  %v1068 = vpack.c.b16 %v1038, %v1037
  %v1069 = vpack.c.b16 %v1040, %v1039
  %v1070 = vpack.c.b16 %v1042, %v1041
  %v1071 = vpack.c.b16 %v1044, %v1043
  %v1072 = vpack.c.b16 %v1046, %v1045
  %v1073 = vpack.c.b16 %v1048, %v1047
  %v1074 = vpack.c.b16 %v1050, %v1049
  %v1075 = vpack.c.b16 %v1052, %v1051
  %v1076 = vpack.c.b16 %v1054, %v1053
  %v1077 = vpack.c.b16 %v1056, %v1055
  %v1078 = vpack.c.b16 %v1058, %v1057
  %v1079 = vpack.c.b16 %v1060, %v1059
  %v1080 = vpack.c.b16 %v1062, %v1061
  %v1081 = vpack.c.b16 %v1064, %v1063
  %v1082 = vpack.c.b16 %v1066, %v1065
  %1099 = vst [vmem:[%s3] sm:$0xff] %v1067
  %1100 = vst [vmem:[%s3 + $0x8] sm:$0xff] %v1068
  %1101 = vst [vmem:[%s3 + $0x10] sm:$0xff] %v1069
  %1102 = vst [vmem:[%s3 + $0x18] sm:$0xff] %v1070
  %1103 = vst [vmem:[%s3 + $0x20] sm:$0xff] %v1071
  %1104 = vst [vmem:[%s3 + $0x28] sm:$0xff] %v1072
  %1105 = vst [vmem:[%s3 + $0x30] sm:$0xff] %v1073
  %1106 = vst [vmem:[%s3 + $0x38] sm:$0xff] %v1074
  %1107 = vst [vmem:[%s3 + $0x40] sm:$0xff] %v1075
  %1108 = vst [vmem:[%s3 + $0x48] sm:$0xff] %v1076
  %1109 = vst [vmem:[%s3 + $0x50] sm:$0xff] %v1077
  %1110 = vst [vmem:[%s3 + $0x58] sm:$0xff] %v1078
  %1111 = vst [vmem:[%s3 + $0x60] sm:$0xff] %v1079
  %1112 = vst [vmem:[%s3 + $0x68] sm:$0xff] %v1080
  %1113 = vst [vmem:[%s3 + $0x70] sm:$0xff] %v1081
  %1114 = vst [vmem:[%s3 + $0x78] sm:$0xff] %v1082
  // Predicated region
  $region14: #{net_forward.12} parent=0 // pred_check
    _
  $region15: #{net_forward.12} parent=0 // pred_check_branch
    %1116 = sbr.rel (0) target = $region17
  $region16: #{net_forward.12} parent=0 // pred_region
    _
  $region17: #{net_forward.12} parent=0 // pred_fallthru
    _
  // Predicated region
  $region18: #{net_forward.12} parent=0 // pred_check
    _
  $region19: #{net_forward.12} parent=0 // pred_check_branch
    %1118 = sbr.rel (0) target = $region21
  $region20: #{net_forward.12} parent=0 // pred_region
    _
  $region21: #{net_forward.12} parent=0 // pred_fallthru
    _
  // Predicated region
  $region22: #{net_forward.12} parent=0 // pred_check
    _
  $region23: #{net_forward.12} parent=0 // pred_check_branch
    %1120 = sbr.rel (0) target = $region25
  $region24: #{net_forward.12} parent=0 // pred_region
    _
  $region25: #{net_forward.12} parent=0 // pred_fallthru
    _
  // Predicated region
  $region26: #{net_forward.12} parent=0 // pred_check
    _
  $region27: #{net_forward.12} parent=0 // pred_check_branch
    %1122 = sbr.rel (0) target = $region29
  $region28: #{net_forward.12} parent=0 // pred_region
    _
  $region29: #{net_forward.12} parent=0 // pred_fallthru
    _

// kernel: net_forward.13
$region0: #{net_forward.13}
  #allocation0 [shape = 'u32[]', space=smem, size = 0x4, offset = 0x4, fixed_abs, tag = 'smem constant byte address 0x4 - core index']
  #allocation1 [shape = 'u32[144,128]{1,0:T(1,128)}', space=vmem, size = 0x12000, scoped, tag = 'internal scratch']
  %s0 = inlined_call_operand.vmem [shape: bf16[8,16], index: 0, kind: input, shape index: {}]
  %s1 = inlined_call_operand.vmem [shape: f32[8,1], index: 1, kind: input, shape index: {}]
  %s2 = inlined_call_operand.vmem [shape: bf16[16,2048], index: 2, kind: input, shape index: {}]
  %s3 = inlined_call_operand.vmem [shape: bf16[8,2048], index: 3, kind: output, shape index: {0}]
  %s4 = inlined_call_operand.hbm [shape: f32[1,8,2], index: 4, kind: output, shape index: {1}]
  %5 = xla_tuple %s3, %s4
  %s6 = sld [smem:[#allocation0]]
  $region30: #{net_forward.13} parent=0
    _
  %s8 = ssub.s32 1, %s6
  %s9 = scalar_select 0, %s8, %s6
  $region1: #{net_forward.13} parent=0
    #allocation2 [shape = 'u8[4096]{0}', space=vmem, size = 0x1000, scoped, tag = 'output window, operand 1, single buffered']
    #allocation3 [shape = 's32[1]{0}', space=sflag, size = 0x4, scoped, tag = 'scoped memory for net_forward.13']
    %10 = vsyncpa [#allocation3], 0
    // Predicated region
    $region2: #{net_forward.13} parent=1 // pred_check
      _
    $region3: #{net_forward.13} parent=1 // pred_check_branch
      %12 = sbr.rel (0) target = $region5
    $region4: #{net_forward.13} parent=1 // pred_region
      _
    $region5: #{net_forward.13} parent=1 // pred_fallthru
      _
    // Predicated region
    $region6: #{net_forward.13} parent=1 // pred_check
      _
    $region7: #{net_forward.13} parent=1 // pred_check_branch
      %14 = sbr.rel (0) target = $region9
    $region8: #{net_forward.13} parent=1 // pred_region
      _
    $region9: #{net_forward.13} parent=1 // pred_fallthru
      _
    // Predicated region
    $region10: #{net_forward.13} parent=1 // pred_check
      _
    $region11: #{net_forward.13} parent=1 // pred_check_branch
      %16 = sbr.rel (0) target = $region13
    $region12: #{net_forward.13} parent=1 // pred_region
      _
    $region13: #{net_forward.13} parent=1 // pred_fallthru
      _
    %v18 = vld [vmem:[%s0] sm:$0xf]
    %v19 = vld [vmem:[%s2] sm:$0xff]
    %v20 = vld [vmem:[%s2 + $0x8] sm:$0xff]
    %v21 = vld [vmem:[%s2 + $0x10] sm:$0xff]
    %v22 = vld [vmem:[%s2 + $0x18] sm:$0xff]
    %v23 = vld [vmem:[%s2 + $0x20] sm:$0xff]
    %v24 = vld [vmem:[%s2 + $0x28] sm:$0xff]
    %v25 = vld [vmem:[%s2 + $0x30] sm:$0xff]
    %v26 = vld [vmem:[%s2 + $0x38] sm:$0xff]
    %v27 = vld [vmem:[%s2 + $0x40] sm:$0xff]
    %v28 = vld [vmem:[%s2 + $0x48] sm:$0xff]
    %v29 = vld [vmem:[%s2 + $0x50] sm:$0xff]
    %v30 = vld [vmem:[%s2 + $0x58] sm:$0xff]
    %v31 = vld [vmem:[%s2 + $0x60] sm:$0xff]
    %v32 = vld [vmem:[%s2 + $0x68] sm:$0xff]
    %v33 = vld [vmem:[%s2 + $0x70] sm:$0xff]
    %v34 = vld [vmem:[%s2 + $0x78] sm:$0xff]
    %v35 = vld [vmem:[%s1] sm:$0xff]
    %37 = vset.pattern.permute.xlu0 0
    %38 = vperm.xlu0 %37, %v35
    %v39 = vpop.permute.xlu0 %38
    %v57 = vunpack.c.l.b16 %v19
    %v58 = vunpack.c.h.b16 %v19
    %v59 = vunpack.c.l.b16 %v20
    %v60 = vunpack.c.h.b16 %v20
    %v61 = vunpack.c.l.b16 %v21
    %v62 = vunpack.c.h.b16 %v21
    %v63 = vunpack.c.l.b16 %v22
    %v64 = vunpack.c.h.b16 %v22
    %v65 = vunpack.c.l.b16 %v23
    %v66 = vunpack.c.h.b16 %v23
    %v67 = vunpack.c.l.b16 %v24
    %v68 = vunpack.c.h.b16 %v24
    %v69 = vunpack.c.l.b16 %v25
    %v70 = vunpack.c.h.b16 %v25
    %v71 = vunpack.c.l.b16 %v26
    %v72 = vunpack.c.h.b16 %v26
    %v73 = vunpack.c.l.b16 %v27
    %v74 = vunpack.c.h.b16 %v27
    %v75 = vunpack.c.l.b16 %v28
    %v76 = vunpack.c.h.b16 %v28
    %v77 = vunpack.c.l.b16 %v29
    %v78 = vunpack.c.h.b16 %v29
    %v79 = vunpack.c.l.b16 %v30
    %v80 = vunpack.c.h.b16 %v30
    %v81 = vunpack.c.l.b16 %v31
    %v82 = vunpack.c.h.b16 %v31
    %v83 = vunpack.c.l.b16 %v32
    %v84 = vunpack.c.h.b16 %v32
    %v85 = vunpack.c.l.b16 %v33
    %v86 = vunpack.c.h.b16 %v33
    %v87 = vunpack.c.l.b16 %v34
    %v88 = vunpack.c.h.b16 %v34
    %v89 = vpack.c.b16 %v73, %v57
    %v90 = vpack.c.b16 %v74, %v58
    %v91 = vpack.c.b16 %v75, %v59
    %v92 = vpack.c.b16 %v76, %v60
    %v93 = vpack.c.b16 %v77, %v61
    %v94 = vpack.c.b16 %v78, %v62
    %v95 = vpack.c.b16 %v79, %v63
    %v96 = vpack.c.b16 %v80, %v64
    %v97 = vpack.c.b16 %v81, %v65
    %v98 = vpack.c.b16 %v82, %v66
    %v99 = vpack.c.b16 %v83, %v67
    %v100 = vpack.c.b16 %v84, %v68
    %v101 = vpack.c.b16 %v85, %v69
    %v102 = vpack.c.b16 %v86, %v70
    %v103 = vpack.c.b16 %v87, %v71
    %v104 = vpack.c.b16 %v88, %v72
    %vm121 = vcmask 130048
    %v123 = vsel %vm121, %v18, 0
    %125 = vmatprep.subr.bf16.mxu0 %v90
    %126 = vmatpush1.bf16.msra.mxu0 %v89
    %127 = vmatprep.subr.bf16.mxu0 0
    %128 = vmatpush1.bf16.msra.mxu0 0
    %129 = vmatprep.subr.bf16.mxu0 0
    %130 = vmatpush1.bf16.msra.mxu0 0
    %131 = vmatprep.subr.bf16.mxu0 0
    %132 = vmatpush1.bf16.msra.mxu0 0
    %133 = vmatprep.subr.bf16.mxu0 0
    %134 = vmatpush1.bf16.msra.mxu0 0
    %135 = vmatprep.subr.bf16.mxu0 0
    %136 = vmatpush1.bf16.msra.mxu0 0
    %137 = vmatprep.subr.bf16.mxu0 0
    %138 = vmatpush1.bf16.msra.mxu0 0
    %139 = vmatprep.subr.bf16.mxu0 0
    %140 = vmatpush1.bf16.msra.mxu0 0
    %141 = vmatprep.subr.bf16.mxu0 0
    %142 = vmatpush1.bf16.msra.mxu0 0
    %143 = vmatprep.subr.bf16.mxu0 0
    %144 = vmatpush1.bf16.msra.mxu0 0
    %145 = vmatprep.subr.bf16.mxu0 0
    %146 = vmatpush1.bf16.msra.mxu0 0
    %147 = vmatprep.subr.bf16.mxu0 0
    %148 = vmatpush1.bf16.msra.mxu0 0
    %149 = vmatprep.subr.bf16.mxu0 0
    %150 = vmatpush1.bf16.msra.mxu0 0
    %151 = vmatprep.subr.bf16.mxu0 0
    %152 = vmatpush1.bf16.msra.mxu0 0
    %153 = vmatprep.subr.bf16.mxu0 0
    %154 = vmatpush1.bf16.msra.mxu0 0
    %155 = vmatprep.subr.bf16.mxu0 0
    %156 = vmatpush1.bf16.msra.mxu0 0
    %157 = vmatprep.mubr.bf16.mxu0 0
    %158 = vmatmul.mubr.bf16.gmra.mrb[0].mxu0 %v123
    %v159 = vpop.f32.mrb[0].mxu0
    %v160 = vadd.f32 %v39, %v159
    %v161 = vpop.f32.mrb[0].mxu0
    %v162 = vadd.f32 %v39, %v161
    %v163 = vpop.f32.mrb[0].mxu0
    %v164 = vpop.f32.mrb[0].mxu0
    %165 = vdwg.mxu0
    %166 = vmatprep.subr.bf16.mxu0 %v92
    %167 = vmatpush1.bf16.msra.mxu0 %v91
    %168 = vmatprep.subr.bf16.mxu0 0
    %169 = vmatpush1.bf16.msra.mxu0 0
    %170 = vmatprep.subr.bf16.mxu0 0
    %171 = vmatpush1.bf16.msra.mxu0 0
    %172 = vmatprep.subr.bf16.mxu0 0
    %173 = vmatpush1.bf16.msra.mxu0 0
    %174 = vmatprep.subr.bf16.mxu0 0
    %175 = vmatpush1.bf16.msra.mxu0 0
    %176 = vmatprep.subr.bf16.mxu0 0
    %177 = vmatpush1.bf16.msra.mxu0 0
    %178 = vmatprep.subr.bf16.mxu0 0
    %179 = vmatpush1.bf16.msra.mxu0 0
    %180 = vmatprep.subr.bf16.mxu0 0
    %181 = vmatpush1.bf16.msra.mxu0 0
    %182 = vmatprep.subr.bf16.mxu0 0
    %183 = vmatpush1.bf16.msra.mxu0 0
    %184 = vmatprep.subr.bf16.mxu0 0
    %185 = vmatpush1.bf16.msra.mxu0 0
    %186 = vmatprep.subr.bf16.mxu0 0
    %187 = vmatpush1.bf16.msra.mxu0 0
    %188 = vmatprep.subr.bf16.mxu0 0
    %189 = vmatpush1.bf16.msra.mxu0 0
    %190 = vmatprep.subr.bf16.mxu0 0
    %191 = vmatpush1.bf16.msra.mxu0 0
    %192 = vmatprep.subr.bf16.mxu0 0
    %193 = vmatpush1.bf16.msra.mxu0 0
    %194 = vmatprep.subr.bf16.mxu0 0
    %195 = vmatpush1.bf16.msra.mxu0 0
    %196 = vmatprep.subr.bf16.mxu0 0
    %197 = vmatpush1.bf16.msra.mxu0 0
    %198 = vmatprep.mubr.bf16.mxu0 0
    %199 = vmatmul.mubr.bf16.gmra.mrb[0].mxu0 %v123
    %v200 = vpop.f32.mrb[0].mxu0
    %v201 = vadd.f32 %v39, %v200
    %v202 = vpop.f32.mrb[0].mxu0
    %v203 = vadd.f32 %v39, %v202
    %v204 = vpop.f32.mrb[0].mxu0
    %v205 = vpop.f32.mrb[0].mxu0
    %206 = vdwg.mxu0
    %207 = vmatprep.subr.bf16.mxu0 %v94
    %208 = vmatpush1.bf16.msra.mxu0 %v93
    %209 = vmatprep.subr.bf16.mxu0 0
    %210 = vmatpush1.bf16.msra.mxu0 0
    %211 = vmatprep.subr.bf16.mxu0 0
    %212 = vmatpush1.bf16.msra.mxu0 0
    %213 = vmatprep.subr.bf16.mxu0 0
    %214 = vmatpush1.bf16.msra.mxu0 0
    %215 = vmatprep.subr.bf16.mxu0 0
    %216 = vmatpush1.bf16.msra.mxu0 0
    %217 = vmatprep.subr.bf16.mxu0 0
    %218 = vmatpush1.bf16.msra.mxu0 0
    %219 = vmatprep.subr.bf16.mxu0 0
    %220 = vmatpush1.bf16.msra.mxu0 0
    %221 = vmatprep.subr.bf16.mxu0 0
    %222 = vmatpush1.bf16.msra.mxu0 0
    %223 = vmatprep.subr.bf16.mxu0 0
    %224 = vmatpush1.bf16.msra.mxu0 0
    %225 = vmatprep.subr.bf16.mxu0 0
    %226 = vmatpush1.bf16.msra.mxu0 0
    %227 = vmatprep.subr.bf16.mxu0 0
    %228 = vmatpush1.bf16.msra.mxu0 0
    %229 = vmatprep.subr.bf16.mxu0 0
    %230 = vmatpush1.bf16.msra.mxu0 0
    %231 = vmatprep.subr.bf16.mxu0 0
    %232 = vmatpush1.bf16.msra.mxu0 0
    %233 = vmatprep.subr.bf16.mxu0 0
    %234 = vmatpush1.bf16.msra.mxu0 0
    %235 = vmatprep.subr.bf16.mxu0 0
    %236 = vmatpush1.bf16.msra.mxu0 0
    %237 = vmatprep.subr.bf16.mxu0 0
    %238 = vmatpush1.bf16.msra.mxu0 0
    %239 = vmatprep.mubr.bf16.mxu0 0
    %240 = vmatmul.mubr.bf16.gmra.mrb[0].mxu0 %v123
    %v241 = vpop.f32.mrb[0].mxu0
    %v242 = vadd.f32 %v39, %v241
    %v243 = vpop.f32.mrb[0].mxu0
    %v244 = vadd.f32 %v39, %v243
    %v245 = vpop.f32.mrb[0].mxu0
    %v246 = vpop.f32.mrb[0].mxu0
    %247 = vdwg.mxu0
    %248 = vmatprep.subr.bf16.mxu0 %v96
    %249 = vmatpush1.bf16.msra.mxu0 %v95
    %250 = vmatprep.subr.bf16.mxu0 0
    %251 = vmatpush1.bf16.msra.mxu0 0
    %252 = vmatprep.subr.bf16.mxu0 0
    %253 = vmatpush1.bf16.msra.mxu0 0
    %254 = vmatprep.subr.bf16.mxu0 0
    %255 = vmatpush1.bf16.msra.mxu0 0
    %256 = vmatprep.subr.bf16.mxu0 0
    %257 = vmatpush1.bf16.msra.mxu0 0
    %258 = vmatprep.subr.bf16.mxu0 0
    %259 = vmatpush1.bf16.msra.mxu0 0
    %260 = vmatprep.subr.bf16.mxu0 0
    %261 = vmatpush1.bf16.msra.mxu0 0
    %262 = vmatprep.subr.bf16.mxu0 0
    %263 = vmatpush1.bf16.msra.mxu0 0
    %264 = vmatprep.subr.bf16.mxu0 0
    %265 = vmatpush1.bf16.msra.mxu0 0
    %266 = vmatprep.subr.bf16.mxu0 0
    %267 = vmatpush1.bf16.msra.mxu0 0
    %268 = vmatprep.subr.bf16.mxu0 0
    %269 = vmatpush1.bf16.msra.mxu0 0
    %270 = vmatprep.subr.bf16.mxu0 0
    %271 = vmatpush1.bf16.msra.mxu0 0
    %272 = vmatprep.subr.bf16.mxu0 0
    %273 = vmatpush1.bf16.msra.mxu0 0
    %274 = vmatprep.subr.bf16.mxu0 0
    %275 = vmatpush1.bf16.msra.mxu0 0
    %276 = vmatprep.subr.bf16.mxu0 0
    %277 = vmatpush1.bf16.msra.mxu0 0
    %278 = vmatprep.subr.bf16.mxu0 0
    %279 = vmatpush1.bf16.msra.mxu0 0
    %280 = vmatprep.mubr.bf16.mxu0 0
    %281 = vmatmul.mubr.bf16.gmra.mrb[0].mxu0 %v123
    %v282 = vpop.f32.mrb[0].mxu0
    %v283 = vadd.f32 %v39, %v282
    %v284 = vpop.f32.mrb[0].mxu0
    %v285 = vadd.f32 %v39, %v284
    %v286 = vpop.f32.mrb[0].mxu0
    %v287 = vpop.f32.mrb[0].mxu0
    %288 = vdwg.mxu0
    %289 = vmatprep.subr.bf16.mxu0 %v98
    %290 = vmatpush1.bf16.msra.mxu0 %v97
    %291 = vmatprep.subr.bf16.mxu0 0
    %292 = vmatpush1.bf16.msra.mxu0 0
    %293 = vmatprep.subr.bf16.mxu0 0
    %294 = vmatpush1.bf16.msra.mxu0 0
    %295 = vmatprep.subr.bf16.mxu0 0
    %296 = vmatpush1.bf16.msra.mxu0 0
    %297 = vmatprep.subr.bf16.mxu0 0
    %298 = vmatpush1.bf16.msra.mxu0 0
    %299 = vmatprep.subr.bf16.mxu0 0
    %300 = vmatpush1.bf16.msra.mxu0 0
    %301 = vmatprep.subr.bf16.mxu0 0
    %302 = vmatpush1.bf16.msra.mxu0 0
    %303 = vmatprep.subr.bf16.mxu0 0
    %304 = vmatpush1.bf16.msra.mxu0 0
    %305 = vmatprep.subr.bf16.mxu0 0
    %306 = vmatpush1.bf16.msra.mxu0 0
    %307 = vmatprep.subr.bf16.mxu0 0
    %308 = vmatpush1.bf16.msra.mxu0 0
    %309 = vmatprep.subr.bf16.mxu0 0
    %310 = vmatpush1.bf16.msra.mxu0 0
    %311 = vmatprep.subr.bf16.mxu0 0
    %312 = vmatpush1.bf16.msra.mxu0 0
    %313 = vmatprep.subr.bf16.mxu0 0
    %314 = vmatpush1.bf16.msra.mxu0 0
    %315 = vmatprep.subr.bf16.mxu0 0
    %316 = vmatpush1.bf16.msra.mxu0 0
    %317 = vmatprep.subr.bf16.mxu0 0
    %318 = vmatpush1.bf16.msra.mxu0 0
    %319 = vmatprep.subr.bf16.mxu0 0
    %320 = vmatpush1.bf16.msra.mxu0 0
    %321 = vmatprep.mubr.bf16.mxu0 0
    %322 = vmatmul.mubr.bf16.gmra.mrb[0].mxu0 %v123
    %v323 = vpop.f32.mrb[0].mxu0
    %v324 = vadd.f32 %v39, %v323
    %v325 = vpop.f32.mrb[0].mxu0
    %v326 = vadd.f32 %v39, %v325
    %v327 = vpop.f32.mrb[0].mxu0
    %v328 = vpop.f32.mrb[0].mxu0
    %329 = vdwg.mxu0
    %330 = vmatprep.subr.bf16.mxu0 %v100
    %331 = vmatpush1.bf16.msra.mxu0 %v99
    %332 = vmatprep.subr.bf16.mxu0 0
    %333 = vmatpush1.bf16.msra.mxu0 0
    %334 = vmatprep.subr.bf16.mxu0 0
    %335 = vmatpush1.bf16.msra.mxu0 0
    %336 = vmatprep.subr.bf16.mxu0 0
    %337 = vmatpush1.bf16.msra.mxu0 0
    %338 = vmatprep.subr.bf16.mxu0 0
    %339 = vmatpush1.bf16.msra.mxu0 0
    %340 = vmatprep.subr.bf16.mxu0 0
    %341 = vmatpush1.bf16.msra.mxu0 0
    %342 = vmatprep.subr.bf16.mxu0 0
    %343 = vmatpush1.bf16.msra.mxu0 0
    %344 = vmatprep.subr.bf16.mxu0 0
    %345 = vmatpush1.bf16.msra.mxu0 0
    %346 = vmatprep.subr.bf16.mxu0 0
    %347 = vmatpush1.bf16.msra.mxu0 0
    %348 = vmatprep.subr.bf16.mxu0 0
    %349 = vmatpush1.bf16.msra.mxu0 0
    %350 = vmatprep.subr.bf16.mxu0 0
    %351 = vmatpush1.bf16.msra.mxu0 0
    %352 = vmatprep.subr.bf16.mxu0 0
    %353 = vmatpush1.bf16.msra.mxu0 0
    %354 = vmatprep.subr.bf16.mxu0 0
    %355 = vmatpush1.bf16.msra.mxu0 0
    %356 = vmatprep.subr.bf16.mxu0 0
    %357 = vmatpush1.bf16.msra.mxu0 0
    %358 = vmatprep.subr.bf16.mxu0 0
    %359 = vmatpush1.bf16.msra.mxu0 0
    %360 = vmatprep.subr.bf16.mxu0 0
    %361 = vmatpush1.bf16.msra.mxu0 0
    %362 = vmatprep.mubr.bf16.mxu0 0
    %363 = vmatmul.mubr.bf16.gmra.mrb[0].mxu0 %v123
    %v364 = vpop.f32.mrb[0].mxu0
    %v365 = vadd.f32 %v39, %v364
    %v366 = vpop.f32.mrb[0].mxu0
    %v367 = vadd.f32 %v39, %v366
    %v368 = vpop.f32.mrb[0].mxu0
    %v369 = vpop.f32.mrb[0].mxu0
    %370 = vdwg.mxu0
    %371 = vmatprep.subr.bf16.mxu0 %v102
    %372 = vmatpush1.bf16.msra.mxu0 %v101
    %373 = vmatprep.subr.bf16.mxu0 0
    %374 = vmatpush1.bf16.msra.mxu0 0
    %375 = vmatprep.subr.bf16.mxu0 0
    %376 = vmatpush1.bf16.msra.mxu0 0
    %377 = vmatprep.subr.bf16.mxu0 0
    %378 = vmatpush1.bf16.msra.mxu0 0
    %379 = vmatprep.subr.bf16.mxu0 0
    %380 = vmatpush1.bf16.msra.mxu0 0
    %381 = vmatprep.subr.bf16.mxu0 0
    %382 = vmatpush1.bf16.msra.mxu0 0
    %383 = vmatprep.subr.bf16.mxu0 0
    %384 = vmatpush1.bf16.msra.mxu0 0
    %385 = vmatprep.subr.bf16.mxu0 0
    %386 = vmatpush1.bf16.msra.mxu0 0
    %387 = vmatprep.subr.bf16.mxu0 0
    %388 = vmatpush1.bf16.msra.mxu0 0
    %389 = vmatprep.subr.bf16.mxu0 0
    %390 = vmatpush1.bf16.msra.mxu0 0
    %391 = vmatprep.subr.bf16.mxu0 0
    %392 = vmatpush1.bf16.msra.mxu0 0
    %393 = vmatprep.subr.bf16.mxu0 0
    %394 = vmatpush1.bf16.msra.mxu0 0
    %395 = vmatprep.subr.bf16.mxu0 0
    %396 = vmatpush1.bf16.msra.mxu0 0
    %397 = vmatprep.subr.bf16.mxu0 0
    %398 = vmatpush1.bf16.msra.mxu0 0
    %399 = vmatprep.subr.bf16.mxu0 0
    %400 = vmatpush1.bf16.msra.mxu0 0
    %401 = vmatprep.subr.bf16.mxu0 0
    %402 = vmatpush1.bf16.msra.mxu0 0
    %403 = vmatprep.mubr.bf16.mxu0 0
    %404 = vmatmul.mubr.bf16.gmra.mrb[0].mxu0 %v123
    %v405 = vpop.f32.mrb[0].mxu0
    %v406 = vadd.f32 %v39, %v405
    %v407 = vpop.f32.mrb[0].mxu0
    %v408 = vadd.f32 %v39, %v407
    %v409 = vpop.f32.mrb[0].mxu0
    %v410 = vpop.f32.mrb[0].mxu0
    %411 = vdwg.mxu0
    %412 = vmatprep.subr.bf16.mxu0 %v104
    %413 = vmatpush1.bf16.msra.mxu0 %v103
    %414 = vmatprep.subr.bf16.mxu0 0
    %415 = vmatpush1.bf16.msra.mxu0 0
    %416 = vmatprep.subr.bf16.mxu0 0
    %417 = vmatpush1.bf16.msra.mxu0 0
    %418 = vmatprep.subr.bf16.mxu0 0
    %419 = vmatpush1.bf16.msra.mxu0 0
    %420 = vmatprep.subr.bf16.mxu0 0
    %421 = vmatpush1.bf16.msra.mxu0 0
    %422 = vmatprep.subr.bf16.mxu0 0
    %423 = vmatpush1.bf16.msra.mxu0 0
    %424 = vmatprep.subr.bf16.mxu0 0
    %425 = vmatpush1.bf16.msra.mxu0 0
    %426 = vmatprep.subr.bf16.mxu0 0
    %427 = vmatpush1.bf16.msra.mxu0 0
    %428 = vmatprep.subr.bf16.mxu0 0
    %429 = vmatpush1.bf16.msra.mxu0 0
    %430 = vmatprep.subr.bf16.mxu0 0
    %431 = vmatpush1.bf16.msra.mxu0 0
    %432 = vmatprep.subr.bf16.mxu0 0
    %433 = vmatpush1.bf16.msra.mxu0 0
    %434 = vmatprep.subr.bf16.mxu0 0
    %435 = vmatpush1.bf16.msra.mxu0 0
    %436 = vmatprep.subr.bf16.mxu0 0
    %437 = vmatpush1.bf16.msra.mxu0 0
    %438 = vmatprep.subr.bf16.mxu0 0
    %439 = vmatpush1.bf16.msra.mxu0 0
    %440 = vmatprep.subr.bf16.mxu0 0
    %441 = vmatpush1.bf16.msra.mxu0 0
    %442 = vmatprep.subr.bf16.mxu0 0
    %443 = vmatpush1.bf16.msra.mxu0 0
    %444 = vmatprep.mubr.bf16.mxu0 0
    %445 = vmatmul.mubr.bf16.gmra.mrb[0].mxu0 %v123
    %v446 = vpop.f32.mrb[0].mxu0
    %v447 = vadd.f32 %v39, %v446
    %v448 = vpop.f32.mrb[0].mxu0
    %v449 = vadd.f32 %v39, %v448
    %v450 = vpop.f32.mrb[0].mxu0
    %v451 = vpop.f32.mrb[0].mxu0
    %452 = vdwg.mxu0
    %v453 = vmax.f32 %v160, 0.0
    %v454 = vmax.f32 %v162, 0.0
    %v455 = vmax.f32 %v201, 0.0
    %v456 = vmax.f32 %v203, 0.0
    %v457 = vmax.f32 %v242, 0.0
    %v458 = vmax.f32 %v244, 0.0
    %v459 = vmax.f32 %v283, 0.0
    %v460 = vmax.f32 %v285, 0.0
    %v461 = vmax.f32 %v324, 0.0
    %v462 = vmax.f32 %v326, 0.0
    %v463 = vmax.f32 %v365, 0.0
    %v464 = vmax.f32 %v367, 0.0
    %v465 = vmax.f32 %v406, 0.0
    %v466 = vmax.f32 %v408, 0.0
    %v467 = vmax.f32 %v447, 0.0
    %v468 = vmax.f32 %v449, 0.0
    %v469 = vadd.f32 %v453, %v454
    %v470 = vadd.f32 %v469, %v455
    %v471 = vadd.f32 %v470, %v456
    %v472 = vadd.f32 %v471, %v457
    %v473 = vadd.f32 %v472, %v458
    %v474 = vadd.f32 %v473, %v459
    %v475 = vadd.f32 %v474, %v460
    %v476 = vadd.f32 %v475, %v461
    %v477 = vadd.f32 %v476, %v462
    %v478 = vadd.f32 %v477, %v463
    %v479 = vadd.f32 %v478, %v464
    %v480 = vadd.f32 %v479, %v465
    %v481 = vadd.f32 %v480, %v466
    %v482 = vadd.f32 %v481, %v467
    %v483 = vadd.f32 %v482, %v468
    %484 = vadd.xlane.f32.xlu0 %v483
    %v485 = vpop.xlane.xlu0 %484
    %v486 = vmul.f32 %v453, %v453
    %v487 = vmul.f32 %v454, %v454
    %v488 = vmul.f32 %v455, %v455
    %v489 = vmul.f32 %v456, %v456
    %v490 = vmul.f32 %v457, %v457
    %v491 = vmul.f32 %v458, %v458
    %v492 = vmul.f32 %v459, %v459
    %v493 = vmul.f32 %v460, %v460
    %v494 = vmul.f32 %v461, %v461
    %v495 = vmul.f32 %v462, %v462
    %v496 = vmul.f32 %v463, %v463
    %v497 = vmul.f32 %v464, %v464
    %v498 = vmul.f32 %v465, %v465
    %v499 = vmul.f32 %v466, %v466
    %v500 = vmul.f32 %v467, %v467
    %v501 = vmul.f32 %v468, %v468
    %v502 = vadd.f32 %v486, %v487
    %v503 = vadd.f32 %v502, %v488
    %v504 = vadd.f32 %v503, %v489
    %v505 = vadd.f32 %v504, %v490
    %v506 = vadd.f32 %v505, %v491
    %v507 = vadd.f32 %v506, %v492
    %v508 = vadd.f32 %v507, %v493
    %v509 = vadd.f32 %v508, %v494
    %v510 = vadd.f32 %v509, %v495
    %v511 = vadd.f32 %v510, %v496
    %v512 = vadd.f32 %v511, %v497
    %v513 = vadd.f32 %v512, %v498
    %v514 = vadd.f32 %v513, %v499
    %v515 = vadd.f32 %v514, %v500
    %v516 = vadd.f32 %v515, %v501
    %517 = vadd.xlane.f32.xlu0 %v516
    %v518 = vpop.xlane.xlu0 %517
    %vm519 = vcmask 7168
    %v520 = vsel %vm519, %v485, %v518
    %vm521 = vcmask 15360
    %522 = vst.msk [vmem:[#allocation2] sm:$0xff] %vm521, %v520
    %v523 = vpack.c.bf16 %v453, %v453
    %v524 = vpack.c.bf16 %v454, %v454
    %v525 = vpack.c.bf16 %v455, %v455
    %v526 = vpack.c.bf16 %v456, %v456
    %v527 = vpack.c.bf16 %v457, %v457
    %v528 = vpack.c.bf16 %v458, %v458
    %v529 = vpack.c.bf16 %v459, %v459
    %v530 = vpack.c.bf16 %v460, %v460
    %v531 = vpack.c.bf16 %v461, %v461
    %v532 = vpack.c.bf16 %v462, %v462
    %v533 = vpack.c.bf16 %v463, %v463
    %v534 = vpack.c.bf16 %v464, %v464
    %v535 = vpack.c.bf16 %v465, %v465
    %v536 = vpack.c.bf16 %v466, %v466
    %v537 = vpack.c.bf16 %v467, %v467
    %v538 = vpack.c.bf16 %v468, %v468
    %v555 = vunpack.c.l.b16 %v523
    %v556 = vunpack.c.l.b16 %v524
    %v557 = vunpack.c.l.b16 %v525
    %v558 = vunpack.c.l.b16 %v526
    %v559 = vunpack.c.l.b16 %v527
    %v560 = vunpack.c.l.b16 %v528
    %v561 = vunpack.c.l.b16 %v529
    %v562 = vunpack.c.l.b16 %v530
    %v563 = vunpack.c.l.b16 %v531
    %v564 = vunpack.c.l.b16 %v532
    %v565 = vunpack.c.l.b16 %v533
    %v566 = vunpack.c.l.b16 %v534
    %v567 = vunpack.c.l.b16 %v535
    %v568 = vunpack.c.l.b16 %v536
    %v569 = vunpack.c.l.b16 %v537
    %v570 = vunpack.c.l.b16 %v538
    %v571 = vpack.c.b16 %v556, %v555
    %v572 = vpack.c.b16 %v558, %v557
    %v573 = vpack.c.b16 %v560, %v559
    %v574 = vpack.c.b16 %v562, %v561
    %v575 = vpack.c.b16 %v564, %v563
    %v576 = vpack.c.b16 %v566, %v565
    %v577 = vpack.c.b16 %v568, %v567
    %v578 = vpack.c.b16 %v570, %v569
    %587 = vst [vmem:[%s3] sm:$0xff] %v571
    %588 = vst [vmem:[%s3 + $0x8] sm:$0xff] %v572
    %589 = vst [vmem:[%s3 + $0x10] sm:$0xff] %v573
    %590 = vst [vmem:[%s3 + $0x18] sm:$0xff] %v574
    %591 = vst [vmem:[%s3 + $0x20] sm:$0xff] %v575
    %592 = vst [vmem:[%s3 + $0x28] sm:$0xff] %v576
    %593 = vst [vmem:[%s3 + $0x30] sm:$0xff] %v577
    %594 = vst [vmem:[%s3 + $0x38] sm:$0xff] %v578
    // Predicated region
    $region14: #{net_forward.13} parent=1 // pred_check
      _
    $region15: #{net_forward.13} parent=1 // pred_check_branch
      %596 = sbr.rel (0) target = $region17
    $region16: #{net_forward.13} parent=1 // pred_region
      _
    $region17: #{net_forward.13} parent=1 // pred_fallthru
      _
    // Predicated region
    $region18: #{net_forward.13} parent=1 // pred_check
      _
    $region19: #{net_forward.13} parent=1 // pred_check_branch
      %598 = sbr.rel (0) target = $region21
    $region20: #{net_forward.13} parent=1 // pred_region
      %s600 = ssub.s32 128, 128
      %601 = vsyncadd [#allocation3], %s600
      %s603 = sshll.u32 [#allocation2], 4
      %s604 = int_to_ptr.vmem [resolvable:$true] %s603
      %606 = dma.vmem_to_hbm [thread:$0]  %s604, 128, %s4, [#allocation3]
    $region21: #{net_forward.13} parent=1 // pred_fallthru
      _
    // Predicated region
    $region22: #{net_forward.13} parent=1 // pred_check
      _
    $region23: #{net_forward.13} parent=1 // pred_check_branch
      %608 = sbr.rel (0) target = $region25
    $region24: #{net_forward.13} parent=1 // pred_region
      _
    $region25: #{net_forward.13} parent=1 // pred_fallthru
      _
    // Predicated region
    $region26: #{net_forward.13} parent=1 // pred_check
      _
    $region27: #{net_forward.13} parent=1 // pred_check_branch
      %610 = sbr.rel (0) target = $region29
    $region28: #{net_forward.13} parent=1 // pred_region
      %611 = dma.done [#allocation3], 128
    $region29: #{net_forward.13} parent=1 // pred_fallthru
      _
    %612 = vsyncpa [#allocation3], 1

// kernel: net_forward.14
$region0: #{net_forward.14}
  #allocation0 [shape = 'u32[]', space=smem, size = 0x4, offset = 0x4, fixed_abs, tag = 'smem constant byte address 0x4 - core index']
  #allocation1 [shape = 'u32[144,128]{1,0:T(1,128)}', space=vmem, size = 0x12000, scoped, tag = 'internal scratch']
  %s0 = inlined_call_operand.vmem [shape: bf16[16,72], index: 0, kind: input, shape index: {}]
  %s1 = inlined_call_operand.vmem [shape: f32[16,1], index: 1, kind: input, shape index: {}]
  %s2 = inlined_call_operand.vmem [shape: bf16[72,512], index: 2, kind: input, shape index: {}]
  %s3 = inlined_call_operand.vmem [shape: bf16[16,512], index: 3, kind: output, shape index: {0}]
  %s4 = inlined_call_operand.vmem [shape: f32[1,16,2], index: 4, kind: output, shape index: {1}]
  %5 = xla_tuple %s3, %s4
  %s6 = sld [smem:[#allocation0]]
  $region30: #{net_forward.14} parent=0
    _
  %s8 = ssub.s32 1, %s6
  %s9 = scalar_select 0, %s8, %s6
  // Predicated region
  $region2: #{net_forward.14} parent=0 // pred_check
    _
  $region3: #{net_forward.14} parent=0 // pred_check_branch
    %11 = sbr.rel (0) target = $region5
  $region4: #{net_forward.14} parent=0 // pred_region
    _
  $region5: #{net_forward.14} parent=0 // pred_fallthru
    _
  // Predicated region
  $region6: #{net_forward.14} parent=0 // pred_check
    _
  $region7: #{net_forward.14} parent=0 // pred_check_branch
    %13 = sbr.rel (0) target = $region9
  $region8: #{net_forward.14} parent=0 // pred_region
    _
  $region9: #{net_forward.14} parent=0 // pred_fallthru
    _
  // Predicated region
  $region10: #{net_forward.14} parent=0 // pred_check
    _
  $region11: #{net_forward.14} parent=0 // pred_check_branch
    %15 = sbr.rel (0) target = $region13
  $region12: #{net_forward.14} parent=0 // pred_region
    _
  $region13: #{net_forward.14} parent=0 // pred_fallthru
    _
  %v17 = vld [vmem:[%s0] sm:$0xf]
  %v18 = vld [vmem:[%s0 + $0x4] sm:$0xf]
  %v19 = vld [vmem:[%s2] sm:$0xff]
  %v20 = vld [vmem:[%s2 + $0x8] sm:$0xff]
  %v21 = vld [vmem:[%s2 + $0x10] sm:$0xff]
  %v22 = vld [vmem:[%s2 + $0x18] sm:$0xff]
  %v23 = vld [vmem:[%s2 + $0x20] sm:$0xff]
  %v24 = vld [vmem:[%s2 + $0x28] sm:$0xff]
  %v25 = vld [vmem:[%s2 + $0x30] sm:$0xff]
  %v26 = vld [vmem:[%s2 + $0x38] sm:$0xff]
  %v27 = vld [vmem:[%s2 + $0x40] sm:$0xff]
  %v28 = vld [vmem:[%s2 + $0x48] sm:$0xff]
  %v29 = vld [vmem:[%s2 + $0x50] sm:$0xff]
  %v30 = vld [vmem:[%s2 + $0x58] sm:$0xff]
  %v31 = vld [vmem:[%s2 + $0x60] sm:$0xff]
  %v32 = vld [vmem:[%s2 + $0x68] sm:$0xff]
  %v33 = vld [vmem:[%s2 + $0x70] sm:$0xff]
  %v34 = vld [vmem:[%s2 + $0x78] sm:$0xff]
  %v35 = vld [vmem:[%s2 + $0x80] sm:$0xff]
  %v36 = vld [vmem:[%s2 + $0x88] sm:$0xff]
  %v37 = vld [vmem:[%s1] sm:$0xff]
  %v38 = vld [vmem:[%s1 + $0x8] sm:$0xff]
  %40 = vset.pattern.permute.xlu0 0
  %41 = vperm.xlu0 %40, %v37
  %v42 = vpop.permute.xlu0 %41
  %45 = vset.pattern.permute.xlu0 0
  %46 = vperm.xlu0 %45, %v38
  %v47 = vpop.permute.xlu0 %46
  %v51 = vunpack.c.l.b16 %v17
  %v52 = vunpack.c.l.b16 %v18
  %v53 = vpack.c.b16 %v52, %v51
  %v72 = vunpack.c.l.b16 %v19
  %v73 = vunpack.c.h.b16 %v19
  %v74 = vunpack.c.l.b16 %v20
  %v75 = vunpack.c.h.b16 %v20
  %v76 = vunpack.c.l.b16 %v21
  %v77 = vunpack.c.h.b16 %v21
  %v78 = vunpack.c.l.b16 %v22
  %v79 = vunpack.c.h.b16 %v22
  %v80 = vunpack.c.l.b16 %v23
  %v81 = vunpack.c.h.b16 %v23
  %v82 = vunpack.c.l.b16 %v24
  %v83 = vunpack.c.h.b16 %v24
  %v84 = vunpack.c.l.b16 %v25
  %v85 = vunpack.c.h.b16 %v25
  %v86 = vunpack.c.l.b16 %v26
  %v87 = vunpack.c.h.b16 %v26
  %v88 = vunpack.c.l.b16 %v27
  %v89 = vunpack.c.h.b16 %v27
  %v90 = vunpack.c.l.b16 %v28
  %v91 = vunpack.c.h.b16 %v28
  %v92 = vunpack.c.l.b16 %v29
  %v93 = vunpack.c.h.b16 %v29
  %v94 = vunpack.c.l.b16 %v30
  %v95 = vunpack.c.h.b16 %v30
  %v96 = vunpack.c.l.b16 %v31
  %v97 = vunpack.c.h.b16 %v31
  %v98 = vunpack.c.l.b16 %v32
  %v99 = vunpack.c.h.b16 %v32
  %v100 = vunpack.c.l.b16 %v33
  %v101 = vunpack.c.h.b16 %v33
  %v102 = vunpack.c.l.b16 %v34
  %v103 = vunpack.c.h.b16 %v34
  %v104 = vunpack.c.l.b16 %v35
  %v105 = vunpack.c.h.b16 %v35
  %v106 = vunpack.c.l.b16 %v36
  %v107 = vunpack.c.h.b16 %v36
  %v108 = vpack.c.b16 %v76, %v72
  %v109 = vpack.c.b16 %v77, %v73
  %v110 = vpack.c.b16 %v78, %v74
  %v111 = vpack.c.b16 %v79, %v75
  %v112 = vpack.c.b16 %v84, %v80
  %v113 = vpack.c.b16 %v85, %v81
  %v114 = vpack.c.b16 %v86, %v82
  %v115 = vpack.c.b16 %v87, %v83
  %v116 = vpack.c.b16 %v92, %v88
  %v117 = vpack.c.b16 %v93, %v89
  %v118 = vpack.c.b16 %v94, %v90
  %v119 = vpack.c.b16 %v95, %v91
  %v120 = vpack.c.b16 %v100, %v96
  %v121 = vpack.c.b16 %v101, %v97
  %v122 = vpack.c.b16 %v102, %v98
  %v123 = vpack.c.b16 %v103, %v99
  %v124 = vpack.c.b16 %v104, %v104
  %v125 = vpack.c.b16 %v105, %v105
  %v126 = vpack.c.b16 %v106, %v106
  %v127 = vpack.c.b16 %v107, %v107
  %vm144 = vcmask 588800
  %v146 = vsel %vm144, %v53, 0
  %vm148 = vcmask 1043456
  %v150 = vsel %vm148, %v124, 0
  %v153 = vsel %vm148, %v125, 0
  %v156 = vsel %vm148, %v126, 0
  %v159 = vsel %vm148, %v127, 0
  %161 = vmatprep.subr.bf16.mxu0 %v109
  %162 = vmatpush1.bf16.msra.mxu0 %v108
  %163 = vmatprep.subr.bf16.mxu0 %v113
  %164 = vmatpush1.bf16.msra.mxu0 %v112
  %165 = vmatprep.subr.bf16.mxu0 %v117
  %166 = vmatpush1.bf16.msra.mxu0 %v116
  %167 = vmatprep.subr.bf16.mxu0 %v121
  %168 = vmatpush1.bf16.msra.mxu0 %v120
  %169 = vmatprep.subr.bf16.mxu0 %v153
  %170 = vmatpush1.bf16.msra.mxu0 %v150
  %171 = vmatprep.subr.bf16.mxu0 0
  %172 = vmatpush1.bf16.msra.mxu0 0
  %173 = vmatprep.subr.bf16.mxu0 0
  %174 = vmatpush1.bf16.msra.mxu0 0
  %175 = vmatprep.subr.bf16.mxu0 0
  %176 = vmatpush1.bf16.msra.mxu0 0
  %177 = vmatprep.subr.bf16.mxu0 0
  %178 = vmatpush1.bf16.msra.mxu0 0
  %179 = vmatprep.subr.bf16.mxu0 0
  %180 = vmatpush1.bf16.msra.mxu0 0
  %181 = vmatprep.subr.bf16.mxu0 0
  %182 = vmatpush1.bf16.msra.mxu0 0
  %183 = vmatprep.subr.bf16.mxu0 0
  %184 = vmatpush1.bf16.msra.mxu0 0
  %185 = vmatprep.subr.bf16.mxu0 0
  %186 = vmatpush1.bf16.msra.mxu0 0
  %187 = vmatprep.subr.bf16.mxu0 0
  %188 = vmatpush1.bf16.msra.mxu0 0
  %189 = vmatprep.subr.bf16.mxu0 0
  %190 = vmatpush1.bf16.msra.mxu0 0
  %191 = vmatprep.subr.bf16.mxu0 0
  %192 = vmatpush1.bf16.msra.mxu0 0
  %193 = vmatprep.mubr.bf16.mxu0 0
  %194 = vmatmul.mubr.bf16.gmra.mrb[0].mxu0 %v146
  %v195 = vpop.f32.mrb[0].mxu0
  %v196 = vadd.f32 %v42, %v195
  %v197 = vpop.f32.mrb[0].mxu0
  %v198 = vadd.f32 %v42, %v197
  %v199 = vpop.f32.mrb[0].mxu0
  %v200 = vadd.f32 %v47, %v199
  %v201 = vpop.f32.mrb[0].mxu0
  %v202 = vadd.f32 %v47, %v201
  %203 = vdwg.mxu0
  %204 = vmatprep.subr.bf16.mxu0 %v111
  %205 = vmatpush1.bf16.msra.mxu0 %v110
  %206 = vmatprep.subr.bf16.mxu0 %v115
  %207 = vmatpush1.bf16.msra.mxu0 %v114
  %208 = vmatprep.subr.bf16.mxu0 %v119
  %209 = vmatpush1.bf16.msra.mxu0 %v118
  %210 = vmatprep.subr.bf16.mxu0 %v123
  %211 = vmatpush1.bf16.msra.mxu0 %v122
  %212 = vmatprep.subr.bf16.mxu0 %v159
  %213 = vmatpush1.bf16.msra.mxu0 %v156
  %214 = vmatprep.subr.bf16.mxu0 0
  %215 = vmatpush1.bf16.msra.mxu0 0
  %216 = vmatprep.subr.bf16.mxu0 0
  %217 = vmatpush1.bf16.msra.mxu0 0
  %218 = vmatprep.subr.bf16.mxu0 0
  %219 = vmatpush1.bf16.msra.mxu0 0
  %220 = vmatprep.subr.bf16.mxu0 0
  %221 = vmatpush1.bf16.msra.mxu0 0
  %222 = vmatprep.subr.bf16.mxu0 0
  %223 = vmatpush1.bf16.msra.mxu0 0
  %224 = vmatprep.subr.bf16.mxu0 0
  %225 = vmatpush1.bf16.msra.mxu0 0
  %226 = vmatprep.subr.bf16.mxu0 0
  %227 = vmatpush1.bf16.msra.mxu0 0
  %228 = vmatprep.subr.bf16.mxu0 0
  %229 = vmatpush1.bf16.msra.mxu0 0
  %230 = vmatprep.subr.bf16.mxu0 0
  %231 = vmatpush1.bf16.msra.mxu0 0
  %232 = vmatprep.subr.bf16.mxu0 0
  %233 = vmatpush1.bf16.msra.mxu0 0
  %234 = vmatprep.subr.bf16.mxu0 0
  %235 = vmatpush1.bf16.msra.mxu0 0
  %236 = vmatprep.mubr.bf16.mxu0 0
  %237 = vmatmul.mubr.bf16.gmra.mrb[0].mxu0 %v146
  %v238 = vpop.f32.mrb[0].mxu0
  %v239 = vadd.f32 %v42, %v238
  %v240 = vpop.f32.mrb[0].mxu0
  %v241 = vadd.f32 %v42, %v240
  %v242 = vpop.f32.mrb[0].mxu0
  %v243 = vadd.f32 %v47, %v242
  %v244 = vpop.f32.mrb[0].mxu0
  %v245 = vadd.f32 %v47, %v244
  %246 = vdwg.mxu0
  %v247 = vmax.f32 %v196, 0.0
  %v248 = vmax.f32 %v198, 0.0
  %v249 = vmax.f32 %v239, 0.0
  %v250 = vmax.f32 %v241, 0.0
  %v251 = vmax.f32 %v200, 0.0
  %v252 = vmax.f32 %v202, 0.0
  %v253 = vmax.f32 %v243, 0.0
  %v254 = vmax.f32 %v245, 0.0
  %v255 = vadd.f32 %v247, %v248
  %v256 = vadd.f32 %v255, %v249
  %v257 = vadd.f32 %v256, %v250
  %258 = vadd.xlane.f32.xlu0 %v257
  %v259 = vpop.xlane.xlu0 %258
  %v260 = vadd.f32 %v251, %v252
  %v261 = vadd.f32 %v260, %v253
  %v262 = vadd.f32 %v261, %v254
  %263 = vadd.xlane.f32.xlu0 %v262
  %v264 = vpop.xlane.xlu0 %263
  %v265 = vmul.f32 %v247, %v247
  %v266 = vmul.f32 %v248, %v248
  %v267 = vmul.f32 %v249, %v249
  %v268 = vmul.f32 %v250, %v250
  %v269 = vmul.f32 %v251, %v251
  %v270 = vmul.f32 %v252, %v252
  %v271 = vmul.f32 %v253, %v253
  %v272 = vmul.f32 %v254, %v254
  %v273 = vadd.f32 %v265, %v266
  %v274 = vadd.f32 %v273, %v267
  %v275 = vadd.f32 %v274, %v268
  %276 = vadd.xlane.f32.xlu0 %v275
  %v277 = vpop.xlane.xlu0 %276
  %v278 = vadd.f32 %v269, %v270
  %v279 = vadd.f32 %v278, %v271
  %v280 = vadd.f32 %v279, %v272
  %281 = vadd.xlane.f32.xlu0 %v280
  %v282 = vpop.xlane.xlu0 %281
  %vm283 = vcmask 7168
  %v284 = vsel %vm283, %v259, %v277
  %v285 = vsel %vm283, %v264, %v282
  %vm286 = vcmask 15360
  %287 = vst.msk [vmem:[%s4] sm:$0xff] %vm286, %v284
  %288 = vst.msk [vmem:[%s4 + $0x8] sm:$0xff] %vm286, %v285
  %v289 = vpack.c.bf16 %v251, %v247
  %v290 = vpack.c.bf16 %v252, %v248
  %v291 = vpack.c.bf16 %v253, %v249
  %v292 = vpack.c.bf16 %v254, %v250
  %v297 = vunpack.c.l.b16 %v289
  %v298 = vunpack.c.l.b16 %v290
  %v299 = vunpack.c.l.b16 %v291
  %v300 = vunpack.c.l.b16 %v292
  %v301 = vunpack.c.h.b16 %v289
  %v302 = vunpack.c.h.b16 %v290
  %v303 = vunpack.c.h.b16 %v291
  %v304 = vunpack.c.h.b16 %v292
  %v305 = vpack.c.b16 %v298, %v297
  %v306 = vpack.c.b16 %v300, %v299
  %v307 = vpack.c.b16 %v302, %v301
  %v308 = vpack.c.b16 %v304, %v303
  %313 = vst [vmem:[%s3] sm:$0xff] %v305
  %314 = vst [vmem:[%s3 + $0x8] sm:$0xff] %v306
  %315 = vst [vmem:[%s3 + $0x10] sm:$0xff] %v307
  %316 = vst [vmem:[%s3 + $0x18] sm:$0xff] %v308
  // Predicated region
  $region14: #{net_forward.14} parent=0 // pred_check
    _
  $region15: #{net_forward.14} parent=0 // pred_check_branch
    %318 = sbr.rel (0) target = $region17
  $region16: #{net_forward.14} parent=0 // pred_region
    _
  $region17: #{net_forward.14} parent=0 // pred_fallthru
    _
  // Predicated region
  $region18: #{net_forward.14} parent=0 // pred_check
    _
  $region19: #{net_forward.14} parent=0 // pred_check_branch
    %320 = sbr.rel (0) target = $region21
  $region20: #{net_forward.14} parent=0 // pred_region
    _
  $region21: #{net_forward.14} parent=0 // pred_fallthru
    _
  // Predicated region
  $region22: #{net_forward.14} parent=0 // pred_check
    _
  $region23: #{net_forward.14} parent=0 // pred_check_branch
    %322 = sbr.rel (0) target = $region25
  $region24: #{net_forward.14} parent=0 // pred_region
    _
  $region25: #{net_forward.14} parent=0 // pred_fallthru
    _
  // Predicated region
  $region26: #{net_forward.14} parent=0 // pred_check
    _
  $region27: #{net_forward.14} parent=0 // pred_check_branch
    %324 = sbr.rel (0) target = $region29
  $region28: #{net_forward.14} parent=0 // pred_region
    _
  $region29: #{net_forward.14} parent=0 // pred_fallthru
    _

// kernel: mul.74
$region0: #{mul.74}
  %s0 = inlined_call_operand.vmem [shape: f32[16,9], index: 0, kind: input, shape index: {}]
  %s1 = inlined_call_operand.vmem [shape: f32[144], index: 1, kind: output, shape index: {}]
  $region1: #{mul.74} parent=0
    #allocation0 [shape = 'u8[4096]{0}', space=vmem, size = 0x1000, scoped, tag = 'scoped mem for output reshape']
    %v2 = vld [vmem:[%s0] sm:$0x1]
    %vm3 = vcmask 72704
    %4 = vst.msk [vmem:[#allocation0] sm:$0x1] %vm3, %v2
    %s5 = scalar_lea.vmem %s0, 14
    %v6 = vld [vmem:[%s5] sm:$0x1]
    %s7 = scalar_lea.vmem %s0, 14
    %v8 = vld [vmem:[%s7] sm:$0x1]
    %vm9 = vcmask 15360
    %v10 = vsel %vm9, %v8, %v6
    %11 = vrot.lane.b32.xlu0 %v10, 126
    %v12 = vpop.permute.xlu0 %11
    %vm13 = vcmask 56320
    %s14 = scalar_lea.vmem [#allocation0], 1
    %15 = vst.msk [vmem:[%s14] sm:$0x1] %vm13, %v12
    %vm16 = vcmask 1048560
    %17 = vst.msk [vmem:[#allocation0] sm:$0x1] %vm16, %v12
    %s18 = scalar_lea.vmem %s0, 13
    %v19 = vld [vmem:[%s18] sm:$0x1]
    %20 = vrot.lane.b32.xlu0 %v19, 117
    %v21 = vpop.permute.xlu0 %20
    %vm22 = vcmask 1032104
    %23 = vst.msk [vmem:[#allocation0] sm:$0x1] %vm22, %v21
    %s24 = scalar_lea.vmem %s0, 12
    %v25 = vld [vmem:[%s24] sm:$0x1]
    %26 = vrot.lane.b32.xlu0 %v25, 108
    %v27 = vpop.permute.xlu0 %26
    %vm28 = vcmask 958304
    %29 = vst.msk [vmem:[#allocation0] sm:$0x1] %vm28, %v27
    %s30 = scalar_lea.vmem %s0, 11
    %v31 = vld [vmem:[%s30] sm:$0x1]
    %32 = vrot.lane.b32.xlu0 %v31, 99
    %v33 = vpop.permute.xlu0 %32
    %vm34 = vcmask 884504
    %35 = vst.msk [vmem:[#allocation0] sm:$0x1] %vm34, %v33
    %s36 = scalar_lea.vmem %s0, 10
    %v37 = vld [vmem:[%s36] sm:$0x1]
    %38 = vrot.lane.b32.xlu0 %v37, 90
    %v39 = vpop.permute.xlu0 %38
    %vm40 = vcmask 810704
    %41 = vst.msk [vmem:[#allocation0] sm:$0x1] %vm40, %v39
    %s42 = scalar_lea.vmem %s0, 9
    %v43 = vld [vmem:[%s42] sm:$0x1]
    %44 = vrot.lane.b32.xlu0 %v43, 81
    %v45 = vpop.permute.xlu0 %44
    %vm46 = vcmask 736904
    %47 = vst.msk [vmem:[#allocation0] sm:$0x1] %vm46, %v45
    %s48 = scalar_lea.vmem %s0, 8
    %v49 = vld [vmem:[%s48] sm:$0x1]
    %50 = vrot.lane.b32.xlu0 %v49, 72
    %v51 = vpop.permute.xlu0 %50
    %vm52 = vcmask 663104
    %53 = vst.msk [vmem:[#allocation0] sm:$0x1] %vm52, %v51
    %s54 = scalar_lea.vmem %s0, 7
    %v55 = vld [vmem:[%s54] sm:$0x1]
    %56 = vrot.lane.b32.xlu0 %v55, 63
    %v57 = vpop.permute.xlu0 %56
    %vm58 = vcmask 589304
    %59 = vst.msk [vmem:[#allocation0] sm:$0x1] %vm58, %v57
    %s60 = scalar_lea.vmem %s0, 6
    %v61 = vld [vmem:[%s60] sm:$0x1]
    %62 = vrot.lane.b32.xlu0 %v61, 54
    %v63 = vpop.permute.xlu0 %62
    %vm64 = vcmask 515504
    %65 = vst.msk [vmem:[#allocation0] sm:$0x1] %vm64, %v63
    %s66 = scalar_lea.vmem %s0, 5
    %v67 = vld [vmem:[%s66] sm:$0x1]
    %68 = vrot.lane.b32.xlu0 %v67, 45
    %v69 = vpop.permute.xlu0 %68
    %vm70 = vcmask 441704
    %71 = vst.msk [vmem:[#allocation0] sm:$0x1] %vm70, %v69
    %s72 = scalar_lea.vmem %s0, 4
    %v73 = vld [vmem:[%s72] sm:$0x1]
    %74 = vrot.lane.b32.xlu0 %v73, 36
    %v75 = vpop.permute.xlu0 %74
    %vm76 = vcmask 367904
    %77 = vst.msk [vmem:[#allocation0] sm:$0x1] %vm76, %v75
    %s78 = scalar_lea.vmem %s0, 3
    %v79 = vld [vmem:[%s78] sm:$0x1]
    %80 = vrot.lane.b32.xlu0 %v79, 27
    %v81 = vpop.permute.xlu0 %80
    %vm82 = vcmask 294104
    %83 = vst.msk [vmem:[#allocation0] sm:$0x1] %vm82, %v81
    %s84 = scalar_lea.vmem %s0, 2
    %v85 = vld [vmem:[%s84] sm:$0x1]
    %86 = vrot.lane.b32.xlu0 %v85, 18
    %v87 = vpop.permute.xlu0 %86
    %vm88 = vcmask 220304
    %89 = vst.msk [vmem:[#allocation0] sm:$0x1] %vm88, %v87
    %s90 = scalar_lea.vmem %s0, 1
    %v91 = vld [vmem:[%s90] sm:$0x1]
    %92 = vrot.lane.b32.xlu0 %v91, 9
    %v93 = vpop.permute.xlu0 %92
    %vm94 = vcmask 146504
    %95 = vst.msk [vmem:[#allocation0] sm:$0x1] %vm94, %v93
    %s96 = scalar_lea.vmem %s0, 15
    %v97 = vld [vmem:[%s96] sm:$0x1]
    %98 = vrot.lane.b32.xlu0 %v97, 7
    %v99 = vpop.permute.xlu0 %98
    %vm100 = vcmask 130104
    %s101 = scalar_lea.vmem [#allocation0], 1
    %102 = vst.msk [vmem:[%s101] sm:$0x1] %vm100, %v99
    %s104 = sshllo.u32 0, 2
    %v106 = vld [vmem:[#allocation0] sm:%s104]
    %s107 = sshllo.u32 0, 2
    %108 = vst [vmem:[%s1] sm:%s107] %v106

// kernel: net_forward.15
$region0: #{net_forward.15}
  #allocation0 [shape = 'u32[]', space=smem, size = 0x4, offset = 0x4, fixed_abs, tag = 'smem constant byte address 0x4 - core index']
  #allocation1 [shape = 'u32[144,128]{1,0:T(1,128)}', space=vmem, size = 0x12000, scoped, tag = 'internal scratch']
  %s0 = inlined_call_operand.vmem [shape: bf16[24,144], index: 0, kind: input, shape index: {}]
  %s1 = inlined_call_operand.vmem [shape: f32[24,1], index: 1, kind: input, shape index: {}]
  %s2 = inlined_call_operand.vmem [shape: bf16[144,512], index: 2, kind: input, shape index: {}]
  %s3 = inlined_call_operand.vmem [shape: bf16[24,512], index: 3, kind: output, shape index: {0}]
  %s4 = inlined_call_operand.vmem [shape: f32[1,24,2], index: 4, kind: output, shape index: {1}]
  %5 = xla_tuple %s3, %s4
  %s6 = sld [smem:[#allocation0]]
  $region30: #{net_forward.15} parent=0
    _
  %s8 = ssub.s32 1, %s6
  %s9 = scalar_select 0, %s8, %s6
  // Predicated region
  $region2: #{net_forward.15} parent=0 // pred_check
    _
  $region3: #{net_forward.15} parent=0 // pred_check_branch
    %11 = sbr.rel (0) target = $region5
  $region4: #{net_forward.15} parent=0 // pred_region
    _
  $region5: #{net_forward.15} parent=0 // pred_fallthru
    _
  // Predicated region
  $region6: #{net_forward.15} parent=0 // pred_check
    _
  $region7: #{net_forward.15} parent=0 // pred_check_branch
    %13 = sbr.rel (0) target = $region9
  $region8: #{net_forward.15} parent=0 // pred_region
    _
  $region9: #{net_forward.15} parent=0 // pred_fallthru
    _
  // Predicated region
  $region10: #{net_forward.15} parent=0 // pred_check
    _
  $region11: #{net_forward.15} parent=0 // pred_check_branch
    %15 = sbr.rel (0) target = $region13
  $region12: #{net_forward.15} parent=0 // pred_region
    _
  $region13: #{net_forward.15} parent=0 // pred_fallthru
    _
  %v17 = vld [vmem:[%s0] sm:$0xff]
  %v18 = vld [vmem:[%s0 + $0x8] sm:$0xff]
  %v19 = vld [vmem:[%s0 + $0x10] sm:$0xff]
  %v20 = vld [vmem:[%s2] sm:$0xff]
  %v21 = vld [vmem:[%s2 + $0x8] sm:$0xff]
  %v22 = vld [vmem:[%s2 + $0x10] sm:$0xff]
  %v23 = vld [vmem:[%s2 + $0x18] sm:$0xff]
  %v24 = vld [vmem:[%s2 + $0x20] sm:$0xff]
  %v25 = vld [vmem:[%s2 + $0x28] sm:$0xff]
  %v26 = vld [vmem:[%s2 + $0x30] sm:$0xff]
  %v27 = vld [vmem:[%s2 + $0x38] sm:$0xff]
  %v28 = vld [vmem:[%s2 + $0x40] sm:$0xff]
  %v29 = vld [vmem:[%s2 + $0x48] sm:$0xff]
  %v30 = vld [vmem:[%s2 + $0x50] sm:$0xff]
  %v31 = vld [vmem:[%s2 + $0x58] sm:$0xff]
  %v32 = vld [vmem:[%s2 + $0x60] sm:$0xff]
  %v33 = vld [vmem:[%s2 + $0x68] sm:$0xff]
  %v34 = vld [vmem:[%s2 + $0x70] sm:$0xff]
  %v35 = vld [vmem:[%s2 + $0x78] sm:$0xff]
  %v36 = vld [vmem:[%s2 + $0x80] sm:$0xff]
  %v37 = vld [vmem:[%s2 + $0x88] sm:$0xff]
  %v38 = vld [vmem:[%s2 + $0x90] sm:$0xff]
  %v39 = vld [vmem:[%s2 + $0x98] sm:$0xff]
  %v40 = vld [vmem:[%s2 + $0xa0] sm:$0xff]
  %v41 = vld [vmem:[%s2 + $0xa8] sm:$0xff]
  %v42 = vld [vmem:[%s2 + $0xb0] sm:$0xff]
  %v43 = vld [vmem:[%s2 + $0xb8] sm:$0xff]
  %v44 = vld [vmem:[%s2 + $0xc0] sm:$0xff]
  %v45 = vld [vmem:[%s2 + $0xc8] sm:$0xff]
  %v46 = vld [vmem:[%s2 + $0xd0] sm:$0xff]
  %v47 = vld [vmem:[%s2 + $0xd8] sm:$0xff]
  %v48 = vld [vmem:[%s2 + $0xe0] sm:$0xff]
  %v49 = vld [vmem:[%s2 + $0xe8] sm:$0xff]
  %v50 = vld [vmem:[%s2 + $0xf0] sm:$0xff]
  %v51 = vld [vmem:[%s2 + $0xf8] sm:$0xff]
  %v52 = vld [vmem:[%s2 + $0x100] sm:$0xff]
  %v53 = vld [vmem:[%s2 + $0x108] sm:$0xff]
  %v54 = vld [vmem:[%s2 + $0x110] sm:$0xff]
  %v55 = vld [vmem:[%s2 + $0x118] sm:$0xff]
  %v56 = vld [vmem:[%s1] sm:$0xff]
  %v57 = vld [vmem:[%s1 + $0x8] sm:$0xff]
  %v58 = vld [vmem:[%s1 + $0x10] sm:$0xff]
  %60 = vset.pattern.permute.xlu0 0
  %61 = vperm.xlu0 %60, %v56
  %v62 = vpop.permute.xlu0 %61
  %65 = vset.pattern.permute.xlu0 0
  %66 = vperm.xlu0 %65, %v57
  %v67 = vpop.permute.xlu0 %66
  %70 = vset.pattern.permute.xlu0 0
  %71 = vperm.xlu0 %70, %v58
  %v72 = vpop.permute.xlu0 %71
  %v77 = vunpack.c.l.b16 %v17
  %v78 = vunpack.c.h.b16 %v17
  %v79 = vunpack.c.l.b16 %v18
  %v80 = vunpack.c.h.b16 %v18
  %v81 = vunpack.c.l.b16 %v19
  %v82 = vunpack.c.h.b16 %v19
  %v83 = vpack.c.b16 %v79, %v77
  %v84 = vpack.c.b16 %v80, %v78
  %v85 = vpack.c.b16 %v81, %v81
  %v86 = vpack.c.b16 %v82, %v82
  %v125 = vunpack.c.l.b16 %v20
  %v126 = vunpack.c.h.b16 %v20
  %v127 = vunpack.c.l.b16 %v21
  %v128 = vunpack.c.h.b16 %v21
  %v129 = vunpack.c.l.b16 %v22
  %v130 = vunpack.c.h.b16 %v22
  %v131 = vunpack.c.l.b16 %v23
  %v132 = vunpack.c.h.b16 %v23
  %v133 = vunpack.c.l.b16 %v24
  %v134 = vunpack.c.h.b16 %v24
  %v135 = vunpack.c.l.b16 %v25
  %v136 = vunpack.c.h.b16 %v25
  %v137 = vunpack.c.l.b16 %v26
  %v138 = vunpack.c.h.b16 %v26
  %v139 = vunpack.c.l.b16 %v27
  %v140 = vunpack.c.h.b16 %v27
  %v141 = vunpack.c.l.b16 %v28
  %v142 = vunpack.c.h.b16 %v28
  %v143 = vunpack.c.l.b16 %v29
  %v144 = vunpack.c.h.b16 %v29
  %v145 = vunpack.c.l.b16 %v30
  %v146 = vunpack.c.h.b16 %v30
  %v147 = vunpack.c.l.b16 %v31
  %v148 = vunpack.c.h.b16 %v31
  %v149 = vunpack.c.l.b16 %v32
  %v150 = vunpack.c.h.b16 %v32
  %v151 = vunpack.c.l.b16 %v33
  %v152 = vunpack.c.h.b16 %v33
  %v153 = vunpack.c.l.b16 %v34
  %v154 = vunpack.c.h.b16 %v34
  %v155 = vunpack.c.l.b16 %v35
  %v156 = vunpack.c.h.b16 %v35
  %v157 = vunpack.c.l.b16 %v36
  %v158 = vunpack.c.h.b16 %v36
  %v159 = vunpack.c.l.b16 %v37
  %v160 = vunpack.c.h.b16 %v37
  %v161 = vunpack.c.l.b16 %v38
  %v162 = vunpack.c.h.b16 %v38
  %v163 = vunpack.c.l.b16 %v39
  %v164 = vunpack.c.h.b16 %v39
  %v165 = vunpack.c.l.b16 %v40
  %v166 = vunpack.c.h.b16 %v40
  %v167 = vunpack.c.l.b16 %v41
  %v168 = vunpack.c.h.b16 %v41
  %v169 = vunpack.c.l.b16 %v42
  %v170 = vunpack.c.h.b16 %v42
  %v171 = vunpack.c.l.b16 %v43
  %v172 = vunpack.c.h.b16 %v43
  %v173 = vunpack.c.l.b16 %v44
  %v174 = vunpack.c.h.b16 %v44
  %v175 = vunpack.c.l.b16 %v45
  %v176 = vunpack.c.h.b16 %v45
  %v177 = vunpack.c.l.b16 %v46
  %v178 = vunpack.c.h.b16 %v46
  %v179 = vunpack.c.l.b16 %v47
  %v180 = vunpack.c.h.b16 %v47
  %v181 = vunpack.c.l.b16 %v48
  %v182 = vunpack.c.h.b16 %v48
  %v183 = vunpack.c.l.b16 %v49
  %v184 = vunpack.c.h.b16 %v49
  %v185 = vunpack.c.l.b16 %v50
  %v186 = vunpack.c.h.b16 %v50
  %v187 = vunpack.c.l.b16 %v51
  %v188 = vunpack.c.h.b16 %v51
  %v189 = vunpack.c.l.b16 %v52
  %v190 = vunpack.c.h.b16 %v52
  %v191 = vunpack.c.l.b16 %v53
  %v192 = vunpack.c.h.b16 %v53
  %v193 = vunpack.c.l.b16 %v54
  %v194 = vunpack.c.h.b16 %v54
  %v195 = vunpack.c.l.b16 %v55
  %v196 = vunpack.c.h.b16 %v55
  %v197 = vpack.c.b16 %v129, %v125
  %v198 = vpack.c.b16 %v130, %v126
  %v199 = vpack.c.b16 %v131, %v127
  %v200 = vpack.c.b16 %v132, %v128
  %v201 = vpack.c.b16 %v137, %v133
  %v202 = vpack.c.b16 %v138, %v134
  %v203 = vpack.c.b16 %v139, %v135
  %v204 = vpack.c.b16 %v140, %v136
  %v205 = vpack.c.b16 %v145, %v141
  %v206 = vpack.c.b16 %v146, %v142
  %v207 = vpack.c.b16 %v147, %v143
  %v208 = vpack.c.b16 %v148, %v144
  %v209 = vpack.c.b16 %v153, %v149
  %v210 = vpack.c.b16 %v154, %v150
  %v211 = vpack.c.b16 %v155, %v151
  %v212 = vpack.c.b16 %v156, %v152
  %v213 = vpack.c.b16 %v161, %v157
  %v214 = vpack.c.b16 %v162, %v158
  %v215 = vpack.c.b16 %v163, %v159
  %v216 = vpack.c.b16 %v164, %v160
  %v217 = vpack.c.b16 %v169, %v165
  %v218 = vpack.c.b16 %v170, %v166
  %v219 = vpack.c.b16 %v171, %v167
  %v220 = vpack.c.b16 %v172, %v168
  %v221 = vpack.c.b16 %v177, %v173
  %v222 = vpack.c.b16 %v178, %v174
  %v223 = vpack.c.b16 %v179, %v175
  %v224 = vpack.c.b16 %v180, %v176
  %v225 = vpack.c.b16 %v185, %v181
  %v226 = vpack.c.b16 %v186, %v182
  %v227 = vpack.c.b16 %v187, %v183
  %v228 = vpack.c.b16 %v188, %v184
  %v229 = vpack.c.b16 %v193, %v189
  %v230 = vpack.c.b16 %v194, %v190
  %v231 = vpack.c.b16 %v195, %v191
  %v232 = vpack.c.b16 %v196, %v192
  %vm269 = vcmask 130048
  %v271 = vsel %vm269, %v84, 0
  %v274 = vsel %vm269, %v86, 0
  %276 = vmatprep.subr.bf16.mxu0 %v198
  %277 = vmatpush1.bf16.msra.mxu0 %v197
  %278 = vmatprep.subr.bf16.mxu0 %v202
  %279 = vmatpush1.bf16.msra.mxu0 %v201
  %280 = vmatprep.subr.bf16.mxu0 %v206
  %281 = vmatpush1.bf16.msra.mxu0 %v205
  %282 = vmatprep.subr.bf16.mxu0 %v210
  %283 = vmatpush1.bf16.msra.mxu0 %v209
  %284 = vmatprep.subr.bf16.mxu0 %v214
  %285 = vmatpush1.bf16.msra.mxu0 %v213
  %286 = vmatprep.subr.bf16.mxu0 %v218
  %287 = vmatpush1.bf16.msra.mxu0 %v217
  %288 = vmatprep.subr.bf16.mxu0 %v222
  %289 = vmatpush1.bf16.msra.mxu0 %v221
  %290 = vmatprep.subr.bf16.mxu0 %v226
  %291 = vmatpush1.bf16.msra.mxu0 %v225
  %292 = vmatprep.subr.bf16.mxu0 %v230
  %293 = vmatpush1.bf16.msra.mxu0 %v229
  %294 = vmatprep.subr.bf16.mxu0 0
  %295 = vmatpush1.bf16.msra.mxu0 0
  %296 = vmatprep.subr.bf16.mxu0 0
  %297 = vmatpush1.bf16.msra.mxu0 0
  %298 = vmatprep.subr.bf16.mxu0 0
  %299 = vmatpush1.bf16.msra.mxu0 0
  %300 = vmatprep.subr.bf16.mxu0 0
  %301 = vmatpush1.bf16.msra.mxu0 0
  %302 = vmatprep.subr.bf16.mxu0 0
  %303 = vmatpush1.bf16.msra.mxu0 0
  %304 = vmatprep.subr.bf16.mxu0 0
  %305 = vmatpush1.bf16.msra.mxu0 0
  %306 = vmatprep.subr.bf16.mxu0 0
  %307 = vmatpush1.bf16.msra.mxu0 0
  %308 = vmatprep.mubr.bf16.mxu0 %v271
  %309 = vmatmul.mubr.bf16.gmra.mrb[0].mxu0 %v83
  %v310 = vpop.f32.mrb[0].mxu0
  %v311 = vadd.f32 %v62, %v310
  %v312 = vpop.f32.mrb[0].mxu0
  %v313 = vadd.f32 %v62, %v312
  %v314 = vpop.f32.mrb[0].mxu0
  %v315 = vadd.f32 %v67, %v314
  %v316 = vpop.f32.mrb[0].mxu0
  %v317 = vadd.f32 %v67, %v316
  %318 = vmatprep.mubr.bf16.mxu0 %v274
  %319 = vmatmul.mubr.bf16.gmra.mrb[0].mxu0 %v85
  %v320 = vpop.f32.mrb[0].mxu0
  %v321 = vadd.f32 %v72, %v320
  %v322 = vpop.f32.mrb[0].mxu0
  %v323 = vadd.f32 %v72, %v322
  %v324 = vpop.f32.mrb[0].mxu0
  %v325 = vpop.f32.mrb[0].mxu0
  %326 = vdwg.mxu0
  %327 = vmatprep.subr.bf16.mxu0 %v200
  %328 = vmatpush1.bf16.msra.mxu0 %v199
  %329 = vmatprep.subr.bf16.mxu0 %v204
  %330 = vmatpush1.bf16.msra.mxu0 %v203
  %331 = vmatprep.subr.bf16.mxu0 %v208
  %332 = vmatpush1.bf16.msra.mxu0 %v207
  %333 = vmatprep.subr.bf16.mxu0 %v212
  %334 = vmatpush1.bf16.msra.mxu0 %v211
  %335 = vmatprep.subr.bf16.mxu0 %v216
  %336 = vmatpush1.bf16.msra.mxu0 %v215
  %337 = vmatprep.subr.bf16.mxu0 %v220
  %338 = vmatpush1.bf16.msra.mxu0 %v219
  %339 = vmatprep.subr.bf16.mxu0 %v224
  %340 = vmatpush1.bf16.msra.mxu0 %v223
  %341 = vmatprep.subr.bf16.mxu0 %v228
  %342 = vmatpush1.bf16.msra.mxu0 %v227
  %343 = vmatprep.subr.bf16.mxu0 %v232
  %344 = vmatpush1.bf16.msra.mxu0 %v231
  %345 = vmatprep.subr.bf16.mxu0 0
  %346 = vmatpush1.bf16.msra.mxu0 0
  %347 = vmatprep.subr.bf16.mxu0 0
  %348 = vmatpush1.bf16.msra.mxu0 0
  %349 = vmatprep.subr.bf16.mxu0 0
  %350 = vmatpush1.bf16.msra.mxu0 0
  %351 = vmatprep.subr.bf16.mxu0 0
  %352 = vmatpush1.bf16.msra.mxu0 0
  %353 = vmatprep.subr.bf16.mxu0 0
  %354 = vmatpush1.bf16.msra.mxu0 0
  %355 = vmatprep.subr.bf16.mxu0 0
  %356 = vmatpush1.bf16.msra.mxu0 0
  %357 = vmatprep.subr.bf16.mxu0 0
  %358 = vmatpush1.bf16.msra.mxu0 0
  %359 = vmatprep.mubr.bf16.mxu0 %v271
  %360 = vmatmul.mubr.bf16.gmra.mrb[0].mxu0 %v83
  %v361 = vpop.f32.mrb[0].mxu0
  %v362 = vadd.f32 %v62, %v361
  %v363 = vpop.f32.mrb[0].mxu0
  %v364 = vadd.f32 %v62, %v363
  %v365 = vpop.f32.mrb[0].mxu0
  %v366 = vadd.f32 %v67, %v365
  %v367 = vpop.f32.mrb[0].mxu0
  %v368 = vadd.f32 %v67, %v367
  %369 = vmatprep.mubr.bf16.mxu0 %v274
  %370 = vmatmul.mubr.bf16.gmra.mrb[0].mxu0 %v85
  %v371 = vpop.f32.mrb[0].mxu0
  %v372 = vadd.f32 %v72, %v371
  %v373 = vpop.f32.mrb[0].mxu0
  %v374 = vadd.f32 %v72, %v373
  %v375 = vpop.f32.mrb[0].mxu0
  %v376 = vpop.f32.mrb[0].mxu0
  %377 = vdwg.mxu0
  %v378 = vmax.f32 %v311, 0.0
  %v379 = vmax.f32 %v313, 0.0
  %v380 = vmax.f32 %v362, 0.0
  %v381 = vmax.f32 %v364, 0.0
  %v382 = vmax.f32 %v315, 0.0
  %v383 = vmax.f32 %v317, 0.0
  %v384 = vmax.f32 %v366, 0.0
  %v385 = vmax.f32 %v368, 0.0
  %v386 = vmax.f32 %v321, 0.0
  %v387 = vmax.f32 %v323, 0.0
  %v388 = vmax.f32 %v372, 0.0
  %v389 = vmax.f32 %v374, 0.0
  %v390 = vadd.f32 %v378, %v379
  %v391 = vadd.f32 %v390, %v380
  %v392 = vadd.f32 %v391, %v381
  %393 = vadd.xlane.f32.xlu0 %v392
  %v394 = vpop.xlane.xlu0 %393
  %v395 = vadd.f32 %v382, %v383
  %v396 = vadd.f32 %v395, %v384
  %v397 = vadd.f32 %v396, %v385
  %398 = vadd.xlane.f32.xlu0 %v397
  %v399 = vpop.xlane.xlu0 %398
  %v400 = vadd.f32 %v386, %v387
  %v401 = vadd.f32 %v400, %v388
  %v402 = vadd.f32 %v401, %v389
  %403 = vadd.xlane.f32.xlu0 %v402
  %v404 = vpop.xlane.xlu0 %403
  %v405 = vmul.f32 %v378, %v378
  %v406 = vmul.f32 %v379, %v379
  %v407 = vmul.f32 %v380, %v380
  %v408 = vmul.f32 %v381, %v381
  %v409 = vmul.f32 %v382, %v382
  %v410 = vmul.f32 %v383, %v383
  %v411 = vmul.f32 %v384, %v384
  %v412 = vmul.f32 %v385, %v385
  %v413 = vmul.f32 %v386, %v386
  %v414 = vmul.f32 %v387, %v387
  %v415 = vmul.f32 %v388, %v388
  %v416 = vmul.f32 %v389, %v389
  %v417 = vadd.f32 %v405, %v406
  %v418 = vadd.f32 %v417, %v407
  %v419 = vadd.f32 %v418, %v408
  %420 = vadd.xlane.f32.xlu0 %v419
  %v421 = vpop.xlane.xlu0 %420
  %v422 = vadd.f32 %v409, %v410
  %v423 = vadd.f32 %v422, %v411
  %v424 = vadd.f32 %v423, %v412
  %425 = vadd.xlane.f32.xlu0 %v424
  %v426 = vpop.xlane.xlu0 %425
  %v427 = vadd.f32 %v413, %v414
  %v428 = vadd.f32 %v427, %v415
  %v429 = vadd.f32 %v428, %v416
  %430 = vadd.xlane.f32.xlu0 %v429
  %v431 = vpop.xlane.xlu0 %430
  %vm432 = vcmask 7168
  %v433 = vsel %vm432, %v394, %v421
  %v434 = vsel %vm432, %v399, %v426
  %v435 = vsel %vm432, %v404, %v431
  %vm436 = vcmask 15360
  %437 = vst.msk [vmem:[%s4] sm:$0xff] %vm436, %v433
  %438 = vst.msk [vmem:[%s4 + $0x8] sm:$0xff] %vm436, %v434
  %439 = vst.msk [vmem:[%s4 + $0x10] sm:$0xff] %vm436, %v435
  %v440 = vpack.c.bf16 %v382, %v378
  %v441 = vpack.c.bf16 %v383, %v379
  %v442 = vpack.c.bf16 %v384, %v380
  %v443 = vpack.c.bf16 %v385, %v381
  %v444 = vpack.c.bf16 %v386, %v386
  %v445 = vpack.c.bf16 %v387, %v387
  %v446 = vpack.c.bf16 %v388, %v388
  %v447 = vpack.c.bf16 %v389, %v389
  %v456 = vunpack.c.l.b16 %v440
  %v457 = vunpack.c.l.b16 %v441
  %v458 = vunpack.c.l.b16 %v442
  %v459 = vunpack.c.l.b16 %v443
  %v460 = vunpack.c.h.b16 %v440
  %v461 = vunpack.c.h.b16 %v441
  %v462 = vunpack.c.h.b16 %v442
  %v463 = vunpack.c.h.b16 %v443
  %v464 = vunpack.c.l.b16 %v444
  %v465 = vunpack.c.l.b16 %v445
  %v466 = vunpack.c.l.b16 %v446
  %v467 = vunpack.c.l.b16 %v447
  %v468 = vpack.c.b16 %v457, %v456
  %v469 = vpack.c.b16 %v459, %v458
  %v470 = vpack.c.b16 %v461, %v460
  %v471 = vpack.c.b16 %v463, %v462
  %v472 = vpack.c.b16 %v465, %v464
  %v473 = vpack.c.b16 %v467, %v466
  %480 = vst [vmem:[%s3] sm:$0xff] %v468
  %481 = vst [vmem:[%s3 + $0x8] sm:$0xff] %v469
  %482 = vst [vmem:[%s3 + $0x10] sm:$0xff] %v470
  %483 = vst [vmem:[%s3 + $0x18] sm:$0xff] %v471
  %484 = vst [vmem:[%s3 + $0x20] sm:$0xff] %v472
  %485 = vst [vmem:[%s3 + $0x28] sm:$0xff] %v473
  // Predicated region
  $region14: #{net_forward.15} parent=0 // pred_check
    _
  $region15: #{net_forward.15} parent=0 // pred_check_branch
    %487 = sbr.rel (0) target = $region17
  $region16: #{net_forward.15} parent=0 // pred_region
    _
  $region17: #{net_forward.15} parent=0 // pred_fallthru
    _
  // Predicated region
  $region18: #{net_forward.15} parent=0 // pred_check
    _
  $region19: #{net_forward.15} parent=0 // pred_check_branch
    %489 = sbr.rel (0) target = $region21
  $region20: #{net_forward.15} parent=0 // pred_region
    _
  $region21: #{net_forward.15} parent=0 // pred_fallthru
    _
  // Predicated region
  $region22: #{net_forward.15} parent=0 // pred_check
    _
  $region23: #{net_forward.15} parent=0 // pred_check_branch
    %491 = sbr.rel (0) target = $region25
  $region24: #{net_forward.15} parent=0 // pred_region
    _
  $region25: #{net_forward.15} parent=0 // pred_fallthru
    _
  // Predicated region
  $region26: #{net_forward.15} parent=0 // pred_check
    _
  $region27: #{net_forward.15} parent=0 // pred_check_branch
    %493 = sbr.rel (0) target = $region29
  $region28: #{net_forward.15} parent=0 // pred_region
    _
  $region29: #{net_forward.15} parent=0 // pred_fallthru
    _

// kernel: mul.81
$region0: #{mul.81}
  %s0 = inlined_call_operand.vmem [shape: f32[24,9], index: 0, kind: input, shape index: {}]
  %s1 = inlined_call_operand.vmem [shape: f32[216], index: 1, kind: output, shape index: {}]
  $region1: #{mul.81} parent=0
    #allocation0 [shape = 'u8[4096]{0}', space=vmem, size = 0x1000, scoped, tag = 'scoped mem for output reshape']
    %v2 = vld [vmem:[%s0] sm:$0x1]
    %vm3 = vcmask 72704
    %4 = vst.msk [vmem:[#allocation0] sm:$0x1] %vm3, %v2
    %s5 = scalar_lea.vmem %s0, 14
    %v6 = vld [vmem:[%s5] sm:$0x1]
    %s7 = scalar_lea.vmem %s0, 14
    %v8 = vld [vmem:[%s7] sm:$0x1]
    %vm9 = vcmask 15360
    %v10 = vsel %vm9, %v8, %v6
    %11 = vrot.lane.b32.xlu0 %v10, 126
    %v12 = vpop.permute.xlu0 %11
    %vm13 = vcmask 56320
    %s14 = scalar_lea.vmem [#allocation0], 1
    %15 = vst.msk [vmem:[%s14] sm:$0x1] %vm13, %v12
    %vm16 = vcmask 1048560
    %17 = vst.msk [vmem:[#allocation0] sm:$0x1] %vm16, %v12
    %s18 = scalar_lea.vmem %s0, 13
    %v19 = vld [vmem:[%s18] sm:$0x1]
    %20 = vrot.lane.b32.xlu0 %v19, 117
    %v21 = vpop.permute.xlu0 %20
    %vm22 = vcmask 1032104
    %23 = vst.msk [vmem:[#allocation0] sm:$0x1] %vm22, %v21
    %s24 = scalar_lea.vmem %s0, 12
    %v25 = vld [vmem:[%s24] sm:$0x1]
    %26 = vrot.lane.b32.xlu0 %v25, 108
    %v27 = vpop.permute.xlu0 %26
    %vm28 = vcmask 958304
    %29 = vst.msk [vmem:[#allocation0] sm:$0x1] %vm28, %v27
    %s30 = scalar_lea.vmem %s0, 11
    %v31 = vld [vmem:[%s30] sm:$0x1]
    %32 = vrot.lane.b32.xlu0 %v31, 99
    %v33 = vpop.permute.xlu0 %32
    %vm34 = vcmask 884504
    %35 = vst.msk [vmem:[#allocation0] sm:$0x1] %vm34, %v33
    %s36 = scalar_lea.vmem %s0, 10
    %v37 = vld [vmem:[%s36] sm:$0x1]
    %38 = vrot.lane.b32.xlu0 %v37, 90
    %v39 = vpop.permute.xlu0 %38
    %vm40 = vcmask 810704
    %41 = vst.msk [vmem:[#allocation0] sm:$0x1] %vm40, %v39
    %s42 = scalar_lea.vmem %s0, 9
    %v43 = vld [vmem:[%s42] sm:$0x1]
    %44 = vrot.lane.b32.xlu0 %v43, 81
    %v45 = vpop.permute.xlu0 %44
    %vm46 = vcmask 736904
    %47 = vst.msk [vmem:[#allocation0] sm:$0x1] %vm46, %v45
    %s48 = scalar_lea.vmem %s0, 23
    %v49 = vld [vmem:[%s48] sm:$0x1]
    %50 = vrot.lane.b32.xlu0 %v49, 79
    %v51 = vpop.permute.xlu0 %50
    %vm52 = vcmask 720504
    %s53 = scalar_lea.vmem [#allocation0], 1
    %54 = vst.msk [vmem:[%s53] sm:$0x1] %vm52, %v51
    %s55 = scalar_lea.vmem %s0, 8
    %v56 = vld [vmem:[%s55] sm:$0x1]
    %57 = vrot.lane.b32.xlu0 %v56, 72
    %v58 = vpop.permute.xlu0 %57
    %vm59 = vcmask 663104
    %60 = vst.msk [vmem:[#allocation0] sm:$0x1] %vm59, %v58
    %s61 = scalar_lea.vmem %s0, 22
    %v62 = vld [vmem:[%s61] sm:$0x1]
    %63 = vrot.lane.b32.xlu0 %v62, 70
    %v64 = vpop.permute.xlu0 %63
    %vm65 = vcmask 646704
    %s66 = scalar_lea.vmem [#allocation0], 1
    %67 = vst.msk [vmem:[%s66] sm:$0x1] %vm65, %v64
    %s68 = scalar_lea.vmem %s0, 7
    %v69 = vld [vmem:[%s68] sm:$0x1]
    %70 = vrot.lane.b32.xlu0 %v69, 63
    %v71 = vpop.permute.xlu0 %70
    %vm72 = vcmask 589304
    %73 = vst.msk [vmem:[#allocation0] sm:$0x1] %vm72, %v71
    %s74 = scalar_lea.vmem %s0, 21
    %v75 = vld [vmem:[%s74] sm:$0x1]
    %76 = vrot.lane.b32.xlu0 %v75, 61
    %v77 = vpop.permute.xlu0 %76
    %vm78 = vcmask 572904
    %s79 = scalar_lea.vmem [#allocation0], 1
    %80 = vst.msk [vmem:[%s79] sm:$0x1] %vm78, %v77
    %s81 = scalar_lea.vmem %s0, 6
    %v82 = vld [vmem:[%s81] sm:$0x1]
    %83 = vrot.lane.b32.xlu0 %v82, 54
    %v84 = vpop.permute.xlu0 %83
    %vm85 = vcmask 515504
    %86 = vst.msk [vmem:[#allocation0] sm:$0x1] %vm85, %v84
    %s87 = scalar_lea.vmem %s0, 20
    %v88 = vld [vmem:[%s87] sm:$0x1]
    %89 = vrot.lane.b32.xlu0 %v88, 52
    %v90 = vpop.permute.xlu0 %89
    %vm91 = vcmask 499104
    %s92 = scalar_lea.vmem [#allocation0], 1
    %93 = vst.msk [vmem:[%s92] sm:$0x1] %vm91, %v90
    %s94 = scalar_lea.vmem %s0, 5
    %v95 = vld [vmem:[%s94] sm:$0x1]
    %96 = vrot.lane.b32.xlu0 %v95, 45
    %v97 = vpop.permute.xlu0 %96
    %vm98 = vcmask 441704
    %99 = vst.msk [vmem:[#allocation0] sm:$0x1] %vm98, %v97
    %s100 = scalar_lea.vmem %s0, 19
    %v101 = vld [vmem:[%s100] sm:$0x1]
    %102 = vrot.lane.b32.xlu0 %v101, 43
    %v103 = vpop.permute.xlu0 %102
    %vm104 = vcmask 425304
    %s105 = scalar_lea.vmem [#allocation0], 1
    %106 = vst.msk [vmem:[%s105] sm:$0x1] %vm104, %v103
    %s107 = scalar_lea.vmem %s0, 4
    %v108 = vld [vmem:[%s107] sm:$0x1]
    %109 = vrot.lane.b32.xlu0 %v108, 36
    %v110 = vpop.permute.xlu0 %109
    %vm111 = vcmask 367904
    %112 = vst.msk [vmem:[#allocation0] sm:$0x1] %vm111, %v110
    %s113 = scalar_lea.vmem %s0, 18
    %v114 = vld [vmem:[%s113] sm:$0x1]
    %115 = vrot.lane.b32.xlu0 %v114, 34
    %v116 = vpop.permute.xlu0 %115
    %vm117 = vcmask 351504
    %s118 = scalar_lea.vmem [#allocation0], 1
    %119 = vst.msk [vmem:[%s118] sm:$0x1] %vm117, %v116
    %s120 = scalar_lea.vmem %s0, 3
    %v121 = vld [vmem:[%s120] sm:$0x1]
    %122 = vrot.lane.b32.xlu0 %v121, 27
    %v123 = vpop.permute.xlu0 %122
    %vm124 = vcmask 294104
    %125 = vst.msk [vmem:[#allocation0] sm:$0x1] %vm124, %v123
    %s126 = scalar_lea.vmem %s0, 17
    %v127 = vld [vmem:[%s126] sm:$0x1]
    %128 = vrot.lane.b32.xlu0 %v127, 25
    %v129 = vpop.permute.xlu0 %128
    %vm130 = vcmask 277704
    %s131 = scalar_lea.vmem [#allocation0], 1
    %132 = vst.msk [vmem:[%s131] sm:$0x1] %vm130, %v129
    %s133 = scalar_lea.vmem %s0, 2
    %v134 = vld [vmem:[%s133] sm:$0x1]
    %135 = vrot.lane.b32.xlu0 %v134, 18
    %v136 = vpop.permute.xlu0 %135
    %vm137 = vcmask 220304
    %138 = vst.msk [vmem:[#allocation0] sm:$0x1] %vm137, %v136
    %s139 = scalar_lea.vmem %s0, 16
    %v140 = vld [vmem:[%s139] sm:$0x1]
    %141 = vrot.lane.b32.xlu0 %v140, 16
    %v142 = vpop.permute.xlu0 %141
    %vm143 = vcmask 203904
    %s144 = scalar_lea.vmem [#allocation0], 1
    %145 = vst.msk [vmem:[%s144] sm:$0x1] %vm143, %v142
    %s146 = scalar_lea.vmem %s0, 1
    %v147 = vld [vmem:[%s146] sm:$0x1]
    %148 = vrot.lane.b32.xlu0 %v147, 9
    %v149 = vpop.permute.xlu0 %148
    %vm150 = vcmask 146504
    %151 = vst.msk [vmem:[#allocation0] sm:$0x1] %vm150, %v149
    %s152 = scalar_lea.vmem %s0, 15
    %v153 = vld [vmem:[%s152] sm:$0x1]
    %154 = vrot.lane.b32.xlu0 %v153, 7
    %v155 = vpop.permute.xlu0 %154
    %vm156 = vcmask 130104
    %s157 = scalar_lea.vmem [#allocation0], 1
    %158 = vst.msk [vmem:[%s157] sm:$0x1] %vm156, %v155
    %s160 = sshllo.u32 0, 2
    %v162 = vld [vmem:[#allocation0] sm:%s160]
    %s163 = sshllo.u32 0, 2
    %164 = vst [vmem:[%s1] sm:%s163] %v162

// kernel: net_forward.16
$region0: #{net_forward.16}
  #allocation0 [shape = 'u32[]', space=smem, size = 0x4, offset = 0x4, fixed_abs, tag = 'smem constant byte address 0x4 - core index']
  #allocation1 [shape = 'u32[144,128]{1,0:T(1,128)}', space=vmem, size = 0x12000, scoped, tag = 'internal scratch']
  %s0 = inlined_call_operand.vmem [shape: bf16[32,216], index: 0, kind: input, shape index: {}]
  %s1 = inlined_call_operand.vmem [shape: f32[32,1], index: 1, kind: input, shape index: {}]
  %s2 = inlined_call_operand.vmem [shape: bf16[216,512], index: 2, kind: input, shape index: {}]
  %s3 = inlined_call_operand.vmem [shape: bf16[32,512], index: 3, kind: output, shape index: {0}]
  %s4 = inlined_call_operand.vmem [shape: f32[1,32,2], index: 4, kind: output, shape index: {1}]
  %5 = xla_tuple %s3, %s4
  %s6 = sld [smem:[#allocation0]]
  $region30: #{net_forward.16} parent=0
    _
  %s8 = ssub.s32 1, %s6
  %s9 = scalar_select 0, %s8, %s6
  // Predicated region
  $region2: #{net_forward.16} parent=0 // pred_check
    _
  $region3: #{net_forward.16} parent=0 // pred_check_branch
    %11 = sbr.rel (0) target = $region5
  $region4: #{net_forward.16} parent=0 // pred_region
    _
  $region5: #{net_forward.16} parent=0 // pred_fallthru
    _
  // Predicated region
  $region6: #{net_forward.16} parent=0 // pred_check
    _
  $region7: #{net_forward.16} parent=0 // pred_check_branch
    %13 = sbr.rel (0) target = $region9
  $region8: #{net_forward.16} parent=0 // pred_region
    _
  $region9: #{net_forward.16} parent=0 // pred_fallthru
    _
  // Predicated region
  $region10: #{net_forward.16} parent=0 // pred_check
    _
  $region11: #{net_forward.16} parent=0 // pred_check_branch
    %15 = sbr.rel (0) target = $region13
  $region12: #{net_forward.16} parent=0 // pred_region
    _
  $region13: #{net_forward.16} parent=0 // pred_fallthru
    _
  %v17 = vld [vmem:[%s0] sm:$0xff]
  %v18 = vld [vmem:[%s0 + $0x8] sm:$0xff]
  %v19 = vld [vmem:[%s0 + $0x10] sm:$0xff]
  %v20 = vld [vmem:[%s0 + $0x18] sm:$0xff]
  %v21 = vld [vmem:[%s2] sm:$0xff]
  %v22 = vld [vmem:[%s2 + $0x8] sm:$0xff]
  %v23 = vld [vmem:[%s2 + $0x10] sm:$0xff]
  %v24 = vld [vmem:[%s2 + $0x18] sm:$0xff]
  %v25 = vld [vmem:[%s2 + $0x20] sm:$0xff]
  %v26 = vld [vmem:[%s2 + $0x28] sm:$0xff]
  %v27 = vld [vmem:[%s2 + $0x30] sm:$0xff]
  %v28 = vld [vmem:[%s2 + $0x38] sm:$0xff]
  %v29 = vld [vmem:[%s2 + $0x40] sm:$0xff]
  %v30 = vld [vmem:[%s2 + $0x48] sm:$0xff]
  %v31 = vld [vmem:[%s2 + $0x50] sm:$0xff]
  %v32 = vld [vmem:[%s2 + $0x58] sm:$0xff]
  %v33 = vld [vmem:[%s2 + $0x60] sm:$0xff]
  %v34 = vld [vmem:[%s2 + $0x68] sm:$0xff]
  %v35 = vld [vmem:[%s2 + $0x70] sm:$0xff]
  %v36 = vld [vmem:[%s2 + $0x78] sm:$0xff]
  %v37 = vld [vmem:[%s2 + $0x80] sm:$0xff]
  %v38 = vld [vmem:[%s2 + $0x88] sm:$0xff]
  %v39 = vld [vmem:[%s2 + $0x90] sm:$0xff]
  %v40 = vld [vmem:[%s2 + $0x98] sm:$0xff]
  %v41 = vld [vmem:[%s2 + $0xa0] sm:$0xff]
  %v42 = vld [vmem:[%s2 + $0xa8] sm:$0xff]
  %v43 = vld [vmem:[%s2 + $0xb0] sm:$0xff]
  %v44 = vld [vmem:[%s2 + $0xb8] sm:$0xff]
  %v45 = vld [vmem:[%s2 + $0xc0] sm:$0xff]
  %v46 = vld [vmem:[%s2 + $0xc8] sm:$0xff]
  %v47 = vld [vmem:[%s2 + $0xd0] sm:$0xff]
  %v48 = vld [vmem:[%s2 + $0xd8] sm:$0xff]
  %v49 = vld [vmem:[%s2 + $0xe0] sm:$0xff]
  %v50 = vld [vmem:[%s2 + $0xe8] sm:$0xff]
  %v51 = vld [vmem:[%s2 + $0xf0] sm:$0xff]
  %v52 = vld [vmem:[%s2 + $0xf8] sm:$0xff]
  %v53 = vld [vmem:[%s2 + $0x100] sm:$0xff]
  %v54 = vld [vmem:[%s2 + $0x108] sm:$0xff]
  %v55 = vld [vmem:[%s2 + $0x110] sm:$0xff]
  %v56 = vld [vmem:[%s2 + $0x118] sm:$0xff]
  %v57 = vld [vmem:[%s2 + $0x120] sm:$0xff]
  %v58 = vld [vmem:[%s2 + $0x128] sm:$0xff]
  %v59 = vld [vmem:[%s2 + $0x130] sm:$0xff]
  %v60 = vld [vmem:[%s2 + $0x138] sm:$0xff]
  %v61 = vld [vmem:[%s2 + $0x140] sm:$0xff]
  %v62 = vld [vmem:[%s2 + $0x148] sm:$0xff]
  %v63 = vld [vmem:[%s2 + $0x150] sm:$0xff]
  %v64 = vld [vmem:[%s2 + $0x158] sm:$0xff]
  %v65 = vld [vmem:[%s2 + $0x160] sm:$0xff]
  %v66 = vld [vmem:[%s2 + $0x168] sm:$0xff]
  %v67 = vld [vmem:[%s2 + $0x170] sm:$0xff]
  %v68 = vld [vmem:[%s2 + $0x178] sm:$0xff]
  %v69 = vld [vmem:[%s2 + $0x180] sm:$0xff]
  %v70 = vld [vmem:[%s2 + $0x188] sm:$0xff]
  %v71 = vld [vmem:[%s2 + $0x190] sm:$0xff]
  %v72 = vld [vmem:[%s2 + $0x198] sm:$0xff]
  %v73 = vld [vmem:[%s2 + $0x1a0] sm:$0xff]
  %v74 = vld [vmem:[%s2 + $0x1a8] sm:$0xff]
  %v75 = vld [vmem:[%s1] sm:$0xff]
  %v76 = vld [vmem:[%s1 + $0x8] sm:$0xff]
  %v77 = vld [vmem:[%s1 + $0x10] sm:$0xff]
  %v78 = vld [vmem:[%s1 + $0x18] sm:$0xff]
  %80 = vset.pattern.permute.xlu0 0
  %81 = vperm.xlu0 %80, %v75
  %v82 = vpop.permute.xlu0 %81
  %85 = vset.pattern.permute.xlu0 0
  %86 = vperm.xlu0 %85, %v76
  %v87 = vpop.permute.xlu0 %86
  %90 = vset.pattern.permute.xlu0 0
  %91 = vperm.xlu0 %90, %v77
  %v92 = vpop.permute.xlu0 %91
  %95 = vset.pattern.permute.xlu0 0
  %96 = vperm.xlu0 %95, %v78
  %v97 = vpop.permute.xlu0 %96
  %v103 = vunpack.c.l.b16 %v17
  %v104 = vunpack.c.h.b16 %v17
  %v105 = vunpack.c.l.b16 %v18
  %v106 = vunpack.c.h.b16 %v18
  %v107 = vunpack.c.l.b16 %v19
  %v108 = vunpack.c.h.b16 %v19
  %v109 = vunpack.c.l.b16 %v20
  %v110 = vunpack.c.h.b16 %v20
  %v111 = vpack.c.b16 %v105, %v103
  %v112 = vpack.c.b16 %v106, %v104
  %v113 = vpack.c.b16 %v109, %v107
  %v114 = vpack.c.b16 %v110, %v108
  %v171 = vunpack.c.l.b16 %v21
  %v172 = vunpack.c.h.b16 %v21
  %v173 = vunpack.c.l.b16 %v22
  %v174 = vunpack.c.h.b16 %v22
  %v175 = vunpack.c.l.b16 %v23
  %v176 = vunpack.c.h.b16 %v23
  %v177 = vunpack.c.l.b16 %v24
  %v178 = vunpack.c.h.b16 %v24
  %v179 = vunpack.c.l.b16 %v25
  %v180 = vunpack.c.h.b16 %v25
  %v181 = vunpack.c.l.b16 %v26
  %v182 = vunpack.c.h.b16 %v26
  %v183 = vunpack.c.l.b16 %v27
  %v184 = vunpack.c.h.b16 %v27
  %v185 = vunpack.c.l.b16 %v28
  %v186 = vunpack.c.h.b16 %v28
  %v187 = vunpack.c.l.b16 %v29
  %v188 = vunpack.c.h.b16 %v29
  %v189 = vunpack.c.l.b16 %v30
  %v190 = vunpack.c.h.b16 %v30
  %v191 = vunpack.c.l.b16 %v31
  %v192 = vunpack.c.h.b16 %v31
  %v193 = vunpack.c.l.b16 %v32
  %v194 = vunpack.c.h.b16 %v32
  %v195 = vunpack.c.l.b16 %v33
  %v196 = vunpack.c.h.b16 %v33
  %v197 = vunpack.c.l.b16 %v34
  %v198 = vunpack.c.h.b16 %v34
  %v199 = vunpack.c.l.b16 %v35
  %v200 = vunpack.c.h.b16 %v35
  %v201 = vunpack.c.l.b16 %v36
  %v202 = vunpack.c.h.b16 %v36
  %v203 = vunpack.c.l.b16 %v37
  %v204 = vunpack.c.h.b16 %v37
  %v205 = vunpack.c.l.b16 %v38
  %v206 = vunpack.c.h.b16 %v38
  %v207 = vunpack.c.l.b16 %v39
  %v208 = vunpack.c.h.b16 %v39
  %v209 = vunpack.c.l.b16 %v40
  %v210 = vunpack.c.h.b16 %v40
  %v211 = vunpack.c.l.b16 %v41
  %v212 = vunpack.c.h.b16 %v41
  %v213 = vunpack.c.l.b16 %v42
  %v214 = vunpack.c.h.b16 %v42
  %v215 = vunpack.c.l.b16 %v43
  %v216 = vunpack.c.h.b16 %v43
  %v217 = vunpack.c.l.b16 %v44
  %v218 = vunpack.c.h.b16 %v44
  %v219 = vunpack.c.l.b16 %v45
  %v220 = vunpack.c.h.b16 %v45
  %v221 = vunpack.c.l.b16 %v46
  %v222 = vunpack.c.h.b16 %v46
  %v223 = vunpack.c.l.b16 %v47
  %v224 = vunpack.c.h.b16 %v47
  %v225 = vunpack.c.l.b16 %v48
  %v226 = vunpack.c.h.b16 %v48
  %v227 = vunpack.c.l.b16 %v49
  %v228 = vunpack.c.h.b16 %v49
  %v229 = vunpack.c.l.b16 %v50
  %v230 = vunpack.c.h.b16 %v50
  %v231 = vunpack.c.l.b16 %v51
  %v232 = vunpack.c.h.b16 %v51
  %v233 = vunpack.c.l.b16 %v52
  %v234 = vunpack.c.h.b16 %v52
  %v235 = vunpack.c.l.b16 %v53
  %v236 = vunpack.c.h.b16 %v53
  %v237 = vunpack.c.l.b16 %v54
  %v238 = vunpack.c.h.b16 %v54
  %v239 = vunpack.c.l.b16 %v55
  %v240 = vunpack.c.h.b16 %v55
  %v241 = vunpack.c.l.b16 %v56
  %v242 = vunpack.c.h.b16 %v56
  %v243 = vunpack.c.l.b16 %v57
  %v244 = vunpack.c.h.b16 %v57
  %v245 = vunpack.c.l.b16 %v58
  %v246 = vunpack.c.h.b16 %v58
  %v247 = vunpack.c.l.b16 %v59
  %v248 = vunpack.c.h.b16 %v59
  %v249 = vunpack.c.l.b16 %v60
  %v250 = vunpack.c.h.b16 %v60
  %v251 = vunpack.c.l.b16 %v61
  %v252 = vunpack.c.h.b16 %v61
  %v253 = vunpack.c.l.b16 %v62
  %v254 = vunpack.c.h.b16 %v62
  %v255 = vunpack.c.l.b16 %v63
  %v256 = vunpack.c.h.b16 %v63
  %v257 = vunpack.c.l.b16 %v64
  %v258 = vunpack.c.h.b16 %v64
  %v259 = vunpack.c.l.b16 %v65
  %v260 = vunpack.c.h.b16 %v65
  %v261 = vunpack.c.l.b16 %v66
  %v262 = vunpack.c.h.b16 %v66
  %v263 = vunpack.c.l.b16 %v67
  %v264 = vunpack.c.h.b16 %v67
  %v265 = vunpack.c.l.b16 %v68
  %v266 = vunpack.c.h.b16 %v68
  %v267 = vunpack.c.l.b16 %v69
  %v268 = vunpack.c.h.b16 %v69
  %v269 = vunpack.c.l.b16 %v70
  %v270 = vunpack.c.h.b16 %v70
  %v271 = vunpack.c.l.b16 %v71
  %v272 = vunpack.c.h.b16 %v71
  %v273 = vunpack.c.l.b16 %v72
  %v274 = vunpack.c.h.b16 %v72
  %v275 = vunpack.c.l.b16 %v73
  %v276 = vunpack.c.h.b16 %v73
  %v277 = vunpack.c.l.b16 %v74
  %v278 = vunpack.c.h.b16 %v74
  %v279 = vpack.c.b16 %v175, %v171
  %v280 = vpack.c.b16 %v176, %v172
  %v281 = vpack.c.b16 %v177, %v173
  %v282 = vpack.c.b16 %v178, %v174
  %v283 = vpack.c.b16 %v183, %v179
  %v284 = vpack.c.b16 %v184, %v180
  %v285 = vpack.c.b16 %v185, %v181
  %v286 = vpack.c.b16 %v186, %v182
  %v287 = vpack.c.b16 %v191, %v187
  %v288 = vpack.c.b16 %v192, %v188
  %v289 = vpack.c.b16 %v193, %v189
  %v290 = vpack.c.b16 %v194, %v190
  %v291 = vpack.c.b16 %v199, %v195
  %v292 = vpack.c.b16 %v200, %v196
  %v293 = vpack.c.b16 %v201, %v197
  %v294 = vpack.c.b16 %v202, %v198
  %v295 = vpack.c.b16 %v207, %v203
  %v296 = vpack.c.b16 %v208, %v204
  %v297 = vpack.c.b16 %v209, %v205
  %v298 = vpack.c.b16 %v210, %v206
  %v299 = vpack.c.b16 %v215, %v211
  %v300 = vpack.c.b16 %v216, %v212
  %v301 = vpack.c.b16 %v217, %v213
  %v302 = vpack.c.b16 %v218, %v214
  %v303 = vpack.c.b16 %v223, %v219
  %v304 = vpack.c.b16 %v224, %v220
  %v305 = vpack.c.b16 %v225, %v221
  %v306 = vpack.c.b16 %v226, %v222
  %v307 = vpack.c.b16 %v231, %v227
  %v308 = vpack.c.b16 %v232, %v228
  %v309 = vpack.c.b16 %v233, %v229
  %v310 = vpack.c.b16 %v234, %v230
  %v311 = vpack.c.b16 %v239, %v235
  %v312 = vpack.c.b16 %v240, %v236
  %v313 = vpack.c.b16 %v241, %v237
  %v314 = vpack.c.b16 %v242, %v238
  %v315 = vpack.c.b16 %v247, %v243
  %v316 = vpack.c.b16 %v248, %v244
  %v317 = vpack.c.b16 %v249, %v245
  %v318 = vpack.c.b16 %v250, %v246
  %v319 = vpack.c.b16 %v255, %v251
  %v320 = vpack.c.b16 %v256, %v252
  %v321 = vpack.c.b16 %v257, %v253
  %v322 = vpack.c.b16 %v258, %v254
  %v323 = vpack.c.b16 %v263, %v259
  %v324 = vpack.c.b16 %v264, %v260
  %v325 = vpack.c.b16 %v265, %v261
  %v326 = vpack.c.b16 %v266, %v262
  %v327 = vpack.c.b16 %v271, %v267
  %v328 = vpack.c.b16 %v272, %v268
  %v329 = vpack.c.b16 %v273, %v269
  %v330 = vpack.c.b16 %v274, %v270
  %v331 = vpack.c.b16 %v275, %v275
  %v332 = vpack.c.b16 %v276, %v276
  %v333 = vpack.c.b16 %v277, %v277
  %v334 = vpack.c.b16 %v278, %v278
  %vm387 = vcmask 719872
  %v389 = vsel %vm387, %v112, 0
  %v392 = vsel %vm387, %v114, 0
  %vm394 = vcmask 1043456
  %v396 = vsel %vm394, %v331, 0
  %v399 = vsel %vm394, %v332, 0
  %v402 = vsel %vm394, %v333, 0
  %v405 = vsel %vm394, %v334, 0
  %407 = vmatprep.subr.bf16.mxu0 %v280
  %408 = vmatpush1.bf16.msra.mxu0 %v279
  %409 = vmatprep.subr.bf16.mxu0 %v284
  %410 = vmatpush1.bf16.msra.mxu0 %v283
  %411 = vmatprep.subr.bf16.mxu0 %v288
  %412 = vmatpush1.bf16.msra.mxu0 %v287
  %413 = vmatprep.subr.bf16.mxu0 %v292
  %414 = vmatpush1.bf16.msra.mxu0 %v291
  %415 = vmatprep.subr.bf16.mxu0 %v296
  %416 = vmatpush1.bf16.msra.mxu0 %v295
  %417 = vmatprep.subr.bf16.mxu0 %v300
  %418 = vmatpush1.bf16.msra.mxu0 %v299
  %419 = vmatprep.subr.bf16.mxu0 %v304
  %420 = vmatpush1.bf16.msra.mxu0 %v303
  %421 = vmatprep.subr.bf16.mxu0 %v308
  %422 = vmatpush1.bf16.msra.mxu0 %v307
  %423 = vmatprep.subr.bf16.mxu0 %v312
  %424 = vmatpush1.bf16.msra.mxu0 %v311
  %425 = vmatprep.subr.bf16.mxu0 %v316
  %426 = vmatpush1.bf16.msra.mxu0 %v315
  %427 = vmatprep.subr.bf16.mxu0 %v320
  %428 = vmatpush1.bf16.msra.mxu0 %v319
  %429 = vmatprep.subr.bf16.mxu0 %v324
  %430 = vmatpush1.bf16.msra.mxu0 %v323
  %431 = vmatprep.subr.bf16.mxu0 %v328
  %432 = vmatpush1.bf16.msra.mxu0 %v327
  %433 = vmatprep.subr.bf16.mxu0 %v399
  %434 = vmatpush1.bf16.msra.mxu0 %v396
  %435 = vmatprep.subr.bf16.mxu0 0
  %436 = vmatpush1.bf16.msra.mxu0 0
  %437 = vmatprep.subr.bf16.mxu0 0
  %438 = vmatpush1.bf16.msra.mxu0 0
  %439 = vmatprep.mubr.bf16.mxu0 %v389
  %440 = vmatmul.mubr.bf16.gmra.mrb[0].mxu0 %v111
  %v441 = vpop.f32.mrb[0].mxu0
  %v442 = vadd.f32 %v82, %v441
  %v443 = vpop.f32.mrb[0].mxu0
  %v444 = vadd.f32 %v82, %v443
  %v445 = vpop.f32.mrb[0].mxu0
  %v446 = vadd.f32 %v87, %v445
  %v447 = vpop.f32.mrb[0].mxu0
  %v448 = vadd.f32 %v87, %v447
  %449 = vmatprep.mubr.bf16.mxu0 %v392
  %450 = vmatmul.mubr.bf16.gmra.mrb[0].mxu0 %v113
  %v451 = vpop.f32.mrb[0].mxu0
  %v452 = vadd.f32 %v92, %v451
  %v453 = vpop.f32.mrb[0].mxu0
  %v454 = vadd.f32 %v92, %v453
  %v455 = vpop.f32.mrb[0].mxu0
  %v456 = vadd.f32 %v97, %v455
  %v457 = vpop.f32.mrb[0].mxu0
  %v458 = vadd.f32 %v97, %v457
  %459 = vdwg.mxu0
  %460 = vmatprep.subr.bf16.mxu0 %v282
  %461 = vmatpush1.bf16.msra.mxu0 %v281
  %462 = vmatprep.subr.bf16.mxu0 %v286
  %463 = vmatpush1.bf16.msra.mxu0 %v285
  %464 = vmatprep.subr.bf16.mxu0 %v290
  %465 = vmatpush1.bf16.msra.mxu0 %v289
  %466 = vmatprep.subr.bf16.mxu0 %v294
  %467 = vmatpush1.bf16.msra.mxu0 %v293
  %468 = vmatprep.subr.bf16.mxu0 %v298
  %469 = vmatpush1.bf16.msra.mxu0 %v297
  %470 = vmatprep.subr.bf16.mxu0 %v302
  %471 = vmatpush1.bf16.msra.mxu0 %v301
  %472 = vmatprep.subr.bf16.mxu0 %v306
  %473 = vmatpush1.bf16.msra.mxu0 %v305
  %474 = vmatprep.subr.bf16.mxu0 %v310
  %475 = vmatpush1.bf16.msra.mxu0 %v309
  %476 = vmatprep.subr.bf16.mxu0 %v314
  %477 = vmatpush1.bf16.msra.mxu0 %v313
  %478 = vmatprep.subr.bf16.mxu0 %v318
  %479 = vmatpush1.bf16.msra.mxu0 %v317
  %480 = vmatprep.subr.bf16.mxu0 %v322
  %481 = vmatpush1.bf16.msra.mxu0 %v321
  %482 = vmatprep.subr.bf16.mxu0 %v326
  %483 = vmatpush1.bf16.msra.mxu0 %v325
  %484 = vmatprep.subr.bf16.mxu0 %v330
  %485 = vmatpush1.bf16.msra.mxu0 %v329
  %486 = vmatprep.subr.bf16.mxu0 %v405
  %487 = vmatpush1.bf16.msra.mxu0 %v402
  %488 = vmatprep.subr.bf16.mxu0 0
  %489 = vmatpush1.bf16.msra.mxu0 0
  %490 = vmatprep.subr.bf16.mxu0 0
  %491 = vmatpush1.bf16.msra.mxu0 0
  %492 = vmatprep.mubr.bf16.mxu0 %v389
  %493 = vmatmul.mubr.bf16.gmra.mrb[0].mxu0 %v111
  %v494 = vpop.f32.mrb[0].mxu0
  %v495 = vadd.f32 %v82, %v494
  %v496 = vpop.f32.mrb[0].mxu0
  %v497 = vadd.f32 %v82, %v496
  %v498 = vpop.f32.mrb[0].mxu0
  %v499 = vadd.f32 %v87, %v498
  %v500 = vpop.f32.mrb[0].mxu0
  %v501 = vadd.f32 %v87, %v500
  %502 = vmatprep.mubr.bf16.mxu0 %v392
  %503 = vmatmul.mubr.bf16.gmra.mrb[0].mxu0 %v113
  %v504 = vpop.f32.mrb[0].mxu0
  %v505 = vadd.f32 %v92, %v504
  %v506 = vpop.f32.mrb[0].mxu0
  %v507 = vadd.f32 %v92, %v506
  %v508 = vpop.f32.mrb[0].mxu0
  %v509 = vadd.f32 %v97, %v508
  %v510 = vpop.f32.mrb[0].mxu0
  %v511 = vadd.f32 %v97, %v510
  %512 = vdwg.mxu0
  %v513 = vmax.f32 %v442, 0.0
  %v514 = vmax.f32 %v444, 0.0
  %v515 = vmax.f32 %v495, 0.0
  %v516 = vmax.f32 %v497, 0.0
  %v517 = vmax.f32 %v446, 0.0
  %v518 = vmax.f32 %v448, 0.0
  %v519 = vmax.f32 %v499, 0.0
  %v520 = vmax.f32 %v501, 0.0
  %v521 = vmax.f32 %v452, 0.0
  %v522 = vmax.f32 %v454, 0.0
  %v523 = vmax.f32 %v505, 0.0
  %v524 = vmax.f32 %v507, 0.0
  %v525 = vmax.f32 %v456, 0.0
  %v526 = vmax.f32 %v458, 0.0
  %v527 = vmax.f32 %v509, 0.0
  %v528 = vmax.f32 %v511, 0.0
  %v529 = vadd.f32 %v513, %v514
  %v530 = vadd.f32 %v529, %v515
  %v531 = vadd.f32 %v530, %v516
  %532 = vadd.xlane.f32.xlu0 %v531
  %v533 = vpop.xlane.xlu0 %532
  %v534 = vadd.f32 %v517, %v518
  %v535 = vadd.f32 %v534, %v519
  %v536 = vadd.f32 %v535, %v520
  %537 = vadd.xlane.f32.xlu0 %v536
  %v538 = vpop.xlane.xlu0 %537
  %v539 = vadd.f32 %v521, %v522
  %v540 = vadd.f32 %v539, %v523
  %v541 = vadd.f32 %v540, %v524
  %542 = vadd.xlane.f32.xlu0 %v541
  %v543 = vpop.xlane.xlu0 %542
  %v544 = vadd.f32 %v525, %v526
  %v545 = vadd.f32 %v544, %v527
  %v546 = vadd.f32 %v545, %v528
  %547 = vadd.xlane.f32.xlu0 %v546
  %v548 = vpop.xlane.xlu0 %547
  %v549 = vmul.f32 %v513, %v513
  %v550 = vmul.f32 %v514, %v514
  %v551 = vmul.f32 %v515, %v515
  %v552 = vmul.f32 %v516, %v516
  %v553 = vmul.f32 %v517, %v517
  %v554 = vmul.f32 %v518, %v518
  %v555 = vmul.f32 %v519, %v519
  %v556 = vmul.f32 %v520, %v520
  %v557 = vmul.f32 %v521, %v521
  %v558 = vmul.f32 %v522, %v522
  %v559 = vmul.f32 %v523, %v523
  %v560 = vmul.f32 %v524, %v524
  %v561 = vmul.f32 %v525, %v525
  %v562 = vmul.f32 %v526, %v526
  %v563 = vmul.f32 %v527, %v527
  %v564 = vmul.f32 %v528, %v528
  %v565 = vadd.f32 %v549, %v550
  %v566 = vadd.f32 %v565, %v551
  %v567 = vadd.f32 %v566, %v552
  %568 = vadd.xlane.f32.xlu0 %v567
  %v569 = vpop.xlane.xlu0 %568
  %v570 = vadd.f32 %v553, %v554
  %v571 = vadd.f32 %v570, %v555
  %v572 = vadd.f32 %v571, %v556
  %573 = vadd.xlane.f32.xlu0 %v572
  %v574 = vpop.xlane.xlu0 %573
  %v575 = vadd.f32 %v557, %v558
  %v576 = vadd.f32 %v575, %v559
  %v577 = vadd.f32 %v576, %v560
  %578 = vadd.xlane.f32.xlu0 %v577
  %v579 = vpop.xlane.xlu0 %578
  %v580 = vadd.f32 %v561, %v562
  %v581 = vadd.f32 %v580, %v563
  %v582 = vadd.f32 %v581, %v564
  %583 = vadd.xlane.f32.xlu0 %v582
  %v584 = vpop.xlane.xlu0 %583
  %vm585 = vcmask 7168
  %v586 = vsel %vm585, %v533, %v569
  %v587 = vsel %vm585, %v538, %v574
  %v588 = vsel %vm585, %v543, %v579
  %v589 = vsel %vm585, %v548, %v584
  %vm590 = vcmask 15360
  %591 = vst.msk [vmem:[%s4] sm:$0xff] %vm590, %v586
  %592 = vst.msk [vmem:[%s4 + $0x8] sm:$0xff] %vm590, %v587
  %593 = vst.msk [vmem:[%s4 + $0x10] sm:$0xff] %vm590, %v588
  %594 = vst.msk [vmem:[%s4 + $0x18] sm:$0xff] %vm590, %v589
  %v595 = vpack.c.bf16 %v517, %v513
  %v596 = vpack.c.bf16 %v518, %v514
  %v597 = vpack.c.bf16 %v519, %v515
  %v598 = vpack.c.bf16 %v520, %v516
  %v599 = vpack.c.bf16 %v525, %v521
  %v600 = vpack.c.bf16 %v526, %v522
  %v601 = vpack.c.bf16 %v527, %v523
  %v602 = vpack.c.bf16 %v528, %v524
  %v611 = vunpack.c.l.b16 %v595
  %v612 = vunpack.c.l.b16 %v596
  %v613 = vunpack.c.l.b16 %v597
  %v614 = vunpack.c.l.b16 %v598
  %v615 = vunpack.c.h.b16 %v595
  %v616 = vunpack.c.h.b16 %v596
  %v617 = vunpack.c.h.b16 %v597
  %v618 = vunpack.c.h.b16 %v598
  %v619 = vunpack.c.l.b16 %v599
  %v620 = vunpack.c.l.b16 %v600
  %v621 = vunpack.c.l.b16 %v601
  %v622 = vunpack.c.l.b16 %v602
  %v623 = vunpack.c.h.b16 %v599
  %v624 = vunpack.c.h.b16 %v600
  %v625 = vunpack.c.h.b16 %v601
  %v626 = vunpack.c.h.b16 %v602
  %v627 = vpack.c.b16 %v612, %v611
  %v628 = vpack.c.b16 %v614, %v613
  %v629 = vpack.c.b16 %v616, %v615
  %v630 = vpack.c.b16 %v618, %v617
  %v631 = vpack.c.b16 %v620, %v619
  %v632 = vpack.c.b16 %v622, %v621
  %v633 = vpack.c.b16 %v624, %v623
  %v634 = vpack.c.b16 %v626, %v625
  %643 = vst [vmem:[%s3] sm:$0xff] %v627
  %644 = vst [vmem:[%s3 + $0x8] sm:$0xff] %v628
  %645 = vst [vmem:[%s3 + $0x10] sm:$0xff] %v629
  %646 = vst [vmem:[%s3 + $0x18] sm:$0xff] %v630
  %647 = vst [vmem:[%s3 + $0x20] sm:$0xff] %v631
  %648 = vst [vmem:[%s3 + $0x28] sm:$0xff] %v632
  %649 = vst [vmem:[%s3 + $0x30] sm:$0xff] %v633
  %650 = vst [vmem:[%s3 + $0x38] sm:$0xff] %v634
  // Predicated region
  $region14: #{net_forward.16} parent=0 // pred_check
    _
  $region15: #{net_forward.16} parent=0 // pred_check_branch
    %652 = sbr.rel (0) target = $region17
  $region16: #{net_forward.16} parent=0 // pred_region
    _
  $region17: #{net_forward.16} parent=0 // pred_fallthru
    _
  // Predicated region
  $region18: #{net_forward.16} parent=0 // pred_check
    _
  $region19: #{net_forward.16} parent=0 // pred_check_branch
    %654 = sbr.rel (0) target = $region21
  $region20: #{net_forward.16} parent=0 // pred_region
    _
  $region21: #{net_forward.16} parent=0 // pred_fallthru
    _
  // Predicated region
  $region22: #{net_forward.16} parent=0 // pred_check
    _
  $region23: #{net_forward.16} parent=0 // pred_check_branch
    %656 = sbr.rel (0) target = $region25
  $region24: #{net_forward.16} parent=0 // pred_region
    _
  $region25: #{net_forward.16} parent=0 // pred_fallthru
    _
  // Predicated region
  $region26: #{net_forward.16} parent=0 // pred_check
    _
  $region27: #{net_forward.16} parent=0 // pred_check_branch
    %658 = sbr.rel (0) target = $region29
  $region28: #{net_forward.16} parent=0 // pred_region
    _
  $region29: #{net_forward.16} parent=0 // pred_fallthru
    _

// kernel: net_forward.17
$region0: #{net_forward.17}
  #allocation0 [shape = 'u32[]', space=smem, size = 0x4, offset = 0x4, fixed_abs, tag = 'smem constant byte address 0x4 - core index']
  #allocation1 [shape = 'u32[144,128]{1,0:T(1,128)}', space=vmem, size = 0x12000, scoped, tag = 'internal scratch']
  %s0 = inlined_call_operand.vmem [shape: bf16[8,32], index: 0, kind: input, shape index: {}]
  %s1 = inlined_call_operand.vmem [shape: f32[8,1], index: 1, kind: input, shape index: {}]
  %s2 = inlined_call_operand.vmem [shape: bf16[32,512], index: 2, kind: input, shape index: {}]
  %s3 = inlined_call_operand.vmem [shape: bf16[8,512], index: 3, kind: output, shape index: {0}]
  %s4 = inlined_call_operand.hbm [shape: f32[1,8,2], index: 4, kind: output, shape index: {1}]
  %5 = xla_tuple %s3, %s4
  %s6 = sld [smem:[#allocation0]]
  $region30: #{net_forward.17} parent=0
    _
  %s8 = ssub.s32 1, %s6
  %s9 = scalar_select 0, %s8, %s6
  $region1: #{net_forward.17} parent=0
    #allocation2 [shape = 'u8[4096]{0}', space=vmem, size = 0x1000, scoped, tag = 'output window, operand 1, single buffered']
    #allocation3 [shape = 's32[1]{0}', space=sflag, size = 0x4, scoped, tag = 'scoped memory for net_forward.17']
    %10 = vsyncpa [#allocation3], 0
    // Predicated region
    $region2: #{net_forward.17} parent=1 // pred_check
      _
    $region3: #{net_forward.17} parent=1 // pred_check_branch
      %12 = sbr.rel (0) target = $region5
    $region4: #{net_forward.17} parent=1 // pred_region
      _
    $region5: #{net_forward.17} parent=1 // pred_fallthru
      _
    // Predicated region
    $region6: #{net_forward.17} parent=1 // pred_check
      _
    $region7: #{net_forward.17} parent=1 // pred_check_branch
      %14 = sbr.rel (0) target = $region9
    $region8: #{net_forward.17} parent=1 // pred_region
      _
    $region9: #{net_forward.17} parent=1 // pred_fallthru
      _
    // Predicated region
    $region10: #{net_forward.17} parent=1 // pred_check
      _
    $region11: #{net_forward.17} parent=1 // pred_check_branch
      %16 = sbr.rel (0) target = $region13
    $region12: #{net_forward.17} parent=1 // pred_region
      _
    $region13: #{net_forward.17} parent=1 // pred_fallthru
      _
    %v18 = vld [vmem:[%s0] sm:$0xf]
    %v19 = vld [vmem:[%s2] sm:$0xff]
    %v20 = vld [vmem:[%s2 + $0x8] sm:$0xff]
    %v21 = vld [vmem:[%s2 + $0x10] sm:$0xff]
    %v22 = vld [vmem:[%s2 + $0x18] sm:$0xff]
    %v23 = vld [vmem:[%s2 + $0x20] sm:$0xff]
    %v24 = vld [vmem:[%s2 + $0x28] sm:$0xff]
    %v25 = vld [vmem:[%s2 + $0x30] sm:$0xff]
    %v26 = vld [vmem:[%s2 + $0x38] sm:$0xff]
    %v27 = vld [vmem:[%s1] sm:$0xff]
    %29 = vset.pattern.permute.xlu0 0
    %30 = vperm.xlu0 %29, %v27
    %v31 = vpop.permute.xlu0 %30
    %v41 = vunpack.c.l.b16 %v19
    %v42 = vunpack.c.h.b16 %v19
    %v43 = vunpack.c.l.b16 %v20
    %v44 = vunpack.c.h.b16 %v20
    %v45 = vunpack.c.l.b16 %v21
    %v46 = vunpack.c.h.b16 %v21
    %v47 = vunpack.c.l.b16 %v22
    %v48 = vunpack.c.h.b16 %v22
    %v49 = vunpack.c.l.b16 %v23
    %v50 = vunpack.c.h.b16 %v23
    %v51 = vunpack.c.l.b16 %v24
    %v52 = vunpack.c.h.b16 %v24
    %v53 = vunpack.c.l.b16 %v25
    %v54 = vunpack.c.h.b16 %v25
    %v55 = vunpack.c.l.b16 %v26
    %v56 = vunpack.c.h.b16 %v26
    %v57 = vpack.c.b16 %v45, %v41
    %v58 = vpack.c.b16 %v46, %v42
    %v59 = vpack.c.b16 %v47, %v43
    %v60 = vpack.c.b16 %v48, %v44
    %v61 = vpack.c.b16 %v53, %v49
    %v62 = vpack.c.b16 %v54, %v50
    %v63 = vpack.c.b16 %v55, %v51
    %v64 = vpack.c.b16 %v56, %v52
    %vm73 = vcmask 261120
    %v75 = vsel %vm73, %v18, 0
    %77 = vmatprep.subr.bf16.mxu0 %v58
    %78 = vmatpush1.bf16.msra.mxu0 %v57
    %79 = vmatprep.subr.bf16.mxu0 %v62
    %80 = vmatpush1.bf16.msra.mxu0 %v61
    %81 = vmatprep.subr.bf16.mxu0 0
    %82 = vmatpush1.bf16.msra.mxu0 0
    %83 = vmatprep.subr.bf16.mxu0 0
    %84 = vmatpush1.bf16.msra.mxu0 0
    %85 = vmatprep.subr.bf16.mxu0 0
    %86 = vmatpush1.bf16.msra.mxu0 0
    %87 = vmatprep.subr.bf16.mxu0 0
    %88 = vmatpush1.bf16.msra.mxu0 0
    %89 = vmatprep.subr.bf16.mxu0 0
    %90 = vmatpush1.bf16.msra.mxu0 0
    %91 = vmatprep.subr.bf16.mxu0 0
    %92 = vmatpush1.bf16.msra.mxu0 0
    %93 = vmatprep.subr.bf16.mxu0 0
    %94 = vmatpush1.bf16.msra.mxu0 0
    %95 = vmatprep.subr.bf16.mxu0 0
    %96 = vmatpush1.bf16.msra.mxu0 0
    %97 = vmatprep.subr.bf16.mxu0 0
    %98 = vmatpush1.bf16.msra.mxu0 0
    %99 = vmatprep.subr.bf16.mxu0 0
    %100 = vmatpush1.bf16.msra.mxu0 0
    %101 = vmatprep.subr.bf16.mxu0 0
    %102 = vmatpush1.bf16.msra.mxu0 0
    %103 = vmatprep.subr.bf16.mxu0 0
    %104 = vmatpush1.bf16.msra.mxu0 0
    %105 = vmatprep.subr.bf16.mxu0 0
    %106 = vmatpush1.bf16.msra.mxu0 0
    %107 = vmatprep.subr.bf16.mxu0 0
    %108 = vmatpush1.bf16.msra.mxu0 0
    %109 = vmatprep.mubr.bf16.mxu0 0
    %110 = vmatmul.mubr.bf16.gmra.mrb[0].mxu0 %v75
    %v111 = vpop.f32.mrb[0].mxu0
    %v112 = vadd.f32 %v31, %v111
    %v113 = vpop.f32.mrb[0].mxu0
    %v114 = vadd.f32 %v31, %v113
    %v115 = vpop.f32.mrb[0].mxu0
    %v116 = vpop.f32.mrb[0].mxu0
    %117 = vdwg.mxu0
    %118 = vmatprep.subr.bf16.mxu0 %v60
    %119 = vmatpush1.bf16.msra.mxu0 %v59
    %120 = vmatprep.subr.bf16.mxu0 %v64
    %121 = vmatpush1.bf16.msra.mxu0 %v63
    %122 = vmatprep.subr.bf16.mxu0 0
    %123 = vmatpush1.bf16.msra.mxu0 0
    %124 = vmatprep.subr.bf16.mxu0 0
    %125 = vmatpush1.bf16.msra.mxu0 0
    %126 = vmatprep.subr.bf16.mxu0 0
    %127 = vmatpush1.bf16.msra.mxu0 0
    %128 = vmatprep.subr.bf16.mxu0 0
    %129 = vmatpush1.bf16.msra.mxu0 0
    %130 = vmatprep.subr.bf16.mxu0 0
    %131 = vmatpush1.bf16.msra.mxu0 0
    %132 = vmatprep.subr.bf16.mxu0 0
    %133 = vmatpush1.bf16.msra.mxu0 0
    %134 = vmatprep.subr.bf16.mxu0 0
    %135 = vmatpush1.bf16.msra.mxu0 0
    %136 = vmatprep.subr.bf16.mxu0 0
    %137 = vmatpush1.bf16.msra.mxu0 0
    %138 = vmatprep.subr.bf16.mxu0 0
    %139 = vmatpush1.bf16.msra.mxu0 0
    %140 = vmatprep.subr.bf16.mxu0 0
    %141 = vmatpush1.bf16.msra.mxu0 0
    %142 = vmatprep.subr.bf16.mxu0 0
    %143 = vmatpush1.bf16.msra.mxu0 0
    %144 = vmatprep.subr.bf16.mxu0 0
    %145 = vmatpush1.bf16.msra.mxu0 0
    %146 = vmatprep.subr.bf16.mxu0 0
    %147 = vmatpush1.bf16.msra.mxu0 0
    %148 = vmatprep.subr.bf16.mxu0 0
    %149 = vmatpush1.bf16.msra.mxu0 0
    %150 = vmatprep.mubr.bf16.mxu0 0
    %151 = vmatmul.mubr.bf16.gmra.mrb[0].mxu0 %v75
    %v152 = vpop.f32.mrb[0].mxu0
    %v153 = vadd.f32 %v31, %v152
    %v154 = vpop.f32.mrb[0].mxu0
    %v155 = vadd.f32 %v31, %v154
    %v156 = vpop.f32.mrb[0].mxu0
    %v157 = vpop.f32.mrb[0].mxu0
    %158 = vdwg.mxu0
    %v159 = vmax.f32 %v112, 0.0
    %v160 = vmax.f32 %v114, 0.0
    %v161 = vmax.f32 %v153, 0.0
    %v162 = vmax.f32 %v155, 0.0
    %v163 = vadd.f32 %v159, %v160
    %v164 = vadd.f32 %v163, %v161
    %v165 = vadd.f32 %v164, %v162
    %166 = vadd.xlane.f32.xlu0 %v165
    %v167 = vpop.xlane.xlu0 %166
    %v168 = vmul.f32 %v159, %v159
    %v169 = vmul.f32 %v160, %v160
    %v170 = vmul.f32 %v161, %v161
    %v171 = vmul.f32 %v162, %v162
    %v172 = vadd.f32 %v168, %v169
    %v173 = vadd.f32 %v172, %v170
    %v174 = vadd.f32 %v173, %v171
    %175 = vadd.xlane.f32.xlu0 %v174
    %v176 = vpop.xlane.xlu0 %175
    %vm177 = vcmask 7168
    %v178 = vsel %vm177, %v167, %v176
    %vm179 = vcmask 15360
    %180 = vst.msk [vmem:[#allocation2] sm:$0xff] %vm179, %v178
    %v181 = vpack.c.bf16 %v159, %v159
    %v182 = vpack.c.bf16 %v160, %v160
    %v183 = vpack.c.bf16 %v161, %v161
    %v184 = vpack.c.bf16 %v162, %v162
    %v189 = vunpack.c.l.b16 %v181
    %v190 = vunpack.c.l.b16 %v182
    %v191 = vunpack.c.l.b16 %v183
    %v192 = vunpack.c.l.b16 %v184
    %v193 = vpack.c.b16 %v190, %v189
    %v194 = vpack.c.b16 %v192, %v191
    %197 = vst [vmem:[%s3] sm:$0xff] %v193
    %198 = vst [vmem:[%s3 + $0x8] sm:$0xff] %v194
    // Predicated region
    $region14: #{net_forward.17} parent=1 // pred_check
      _
    $region15: #{net_forward.17} parent=1 // pred_check_branch
      %200 = sbr.rel (0) target = $region17
    $region16: #{net_forward.17} parent=1 // pred_region
      _
    $region17: #{net_forward.17} parent=1 // pred_fallthru
      _
    // Predicated region
    $region18: #{net_forward.17} parent=1 // pred_check
      _
    $region19: #{net_forward.17} parent=1 // pred_check_branch
      %202 = sbr.rel (0) target = $region21
    $region20: #{net_forward.17} parent=1 // pred_region
      %s204 = ssub.s32 128, 128
      %205 = vsyncadd [#allocation3], %s204
      %s207 = sshll.u32 [#allocation2], 4
      %s208 = int_to_ptr.vmem [resolvable:$true] %s207
      %210 = dma.vmem_to_hbm [thread:$0]  %s208, 128, %s4, [#allocation3]
    $region21: #{net_forward.17} parent=1 // pred_fallthru
      _
    // Predicated region
    $region22: #{net_forward.17} parent=1 // pred_check
      _
    $region23: #{net_forward.17} parent=1 // pred_check_branch
      %212 = sbr.rel (0) target = $region25
    $region24: #{net_forward.17} parent=1 // pred_region
      _
    $region25: #{net_forward.17} parent=1 // pred_fallthru
      _
    // Predicated region
    $region26: #{net_forward.17} parent=1 // pred_check
      _
    $region27: #{net_forward.17} parent=1 // pred_check_branch
      %214 = sbr.rel (0) target = $region29
    $region28: #{net_forward.17} parent=1 // pred_region
      %215 = dma.done [#allocation3], 128
    $region29: #{net_forward.17} parent=1 // pred_fallthru
      _
    %216 = vsyncpa [#allocation3], 1

// kernel: net_forward.18
$region0: #{net_forward.18}
  #allocation0 [shape = 'u32[]', space=smem, size = 0x4, offset = 0x4, fixed_abs, tag = 'smem constant byte address 0x4 - core index']
  #allocation1 [shape = 'u32[144,128]{1,0:T(1,128)}', space=vmem, size = 0x12000, scoped, tag = 'internal scratch']
  %s0 = inlined_call_operand.vmem [shape: bf16[16,72], index: 0, kind: input, shape index: {}]
  %s1 = inlined_call_operand.vmem [shape: f32[16,1], index: 1, kind: input, shape index: {}]
  %s2 = inlined_call_operand.vmem [shape: bf16[72,128], index: 2, kind: input, shape index: {}]
  %s3 = inlined_call_operand.vmem [shape: bf16[16,128], index: 3, kind: output, shape index: {0}]
  %s4 = inlined_call_operand.vmem [shape: f32[1,16,2], index: 4, kind: output, shape index: {1}]
  %5 = xla_tuple %s3, %s4
  %s6 = sld [smem:[#allocation0]]
  $region30: #{net_forward.18} parent=0
    _
  %s8 = ssub.s32 1, %s6
  %s9 = scalar_select 0, %s8, %s6
  // Predicated region
  $region2: #{net_forward.18} parent=0 // pred_check
    _
  $region3: #{net_forward.18} parent=0 // pred_check_branch
    %11 = sbr.rel (0) target = $region5
  $region4: #{net_forward.18} parent=0 // pred_region
    _
  $region5: #{net_forward.18} parent=0 // pred_fallthru
    _
  // Predicated region
  $region6: #{net_forward.18} parent=0 // pred_check
    _
  $region7: #{net_forward.18} parent=0 // pred_check_branch
    %13 = sbr.rel (0) target = $region9
  $region8: #{net_forward.18} parent=0 // pred_region
    _
  $region9: #{net_forward.18} parent=0 // pred_fallthru
    _
  // Predicated region
  $region10: #{net_forward.18} parent=0 // pred_check
    _
  $region11: #{net_forward.18} parent=0 // pred_check_branch
    %15 = sbr.rel (0) target = $region13
  $region12: #{net_forward.18} parent=0 // pred_region
    _
  $region13: #{net_forward.18} parent=0 // pred_fallthru
    _
  %v17 = vld [vmem:[%s0] sm:$0xf]
  %v18 = vld [vmem:[%s0 + $0x4] sm:$0xf]
  %v19 = vld [vmem:[%s2] sm:$0xf]
  %v20 = vld [vmem:[%s2 + $0x4] sm:$0xf]
  %v21 = vld [vmem:[%s2 + $0x8] sm:$0xf]
  %v22 = vld [vmem:[%s2 + $0xc] sm:$0xf]
  %v23 = vld [vmem:[%s2 + $0x10] sm:$0xf]
  %v24 = vld [vmem:[%s2 + $0x14] sm:$0xf]
  %v25 = vld [vmem:[%s2 + $0x18] sm:$0xf]
  %v26 = vld [vmem:[%s2 + $0x1c] sm:$0xf]
  %v27 = vld [vmem:[%s2 + $0x20] sm:$0xf]
  %v28 = vld [vmem:[%s1] sm:$0xff]
  %v29 = vld [vmem:[%s1 + $0x8] sm:$0xff]
  %31 = vset.pattern.permute.xlu0 0
  %32 = vperm.xlu0 %31, %v28
  %v33 = vpop.permute.xlu0 %32
  %36 = vset.pattern.permute.xlu0 0
  %37 = vperm.xlu0 %36, %v29
  %v38 = vpop.permute.xlu0 %37
  %v42 = vunpack.c.l.b16 %v17
  %v43 = vunpack.c.l.b16 %v18
  %v44 = vpack.c.b16 %v43, %v42
  %v54 = vunpack.c.l.b16 %v19
  %v55 = vunpack.c.l.b16 %v20
  %v56 = vunpack.c.l.b16 %v21
  %v57 = vunpack.c.l.b16 %v22
  %v58 = vunpack.c.l.b16 %v23
  %v59 = vunpack.c.l.b16 %v24
  %v60 = vunpack.c.l.b16 %v25
  %v61 = vunpack.c.l.b16 %v26
  %v62 = vunpack.c.l.b16 %v27
  %v63 = vpack.c.b16 %v55, %v54
  %v64 = vpack.c.b16 %v57, %v56
  %v65 = vpack.c.b16 %v59, %v58
  %v66 = vpack.c.b16 %v61, %v60
  %v67 = vpack.c.b16 %v62, %v62
  %vm72 = vcmask 588800
  %v74 = vsel %vm72, %v44, 0
  %vm76 = vcmask 1043456
  %v78 = vsel %vm76, %v67, 0
  %80 = vmatprep.subr.bf16.mxu0 0
  %81 = vmatpush1.bf16.msra.mxu0 %v63
  %82 = vmatprep.subr.bf16.mxu0 0
  %83 = vmatpush1.bf16.msra.mxu0 %v64
  %84 = vmatprep.subr.bf16.mxu0 0
  %85 = vmatpush1.bf16.msra.mxu0 %v65
  %86 = vmatprep.subr.bf16.mxu0 0
  %87 = vmatpush1.bf16.msra.mxu0 %v66
  %88 = vmatprep.subr.bf16.mxu0 0
  %89 = vmatpush1.bf16.msra.mxu0 %v78
  %90 = vmatprep.subr.bf16.mxu0 0
  %91 = vmatpush1.bf16.msra.mxu0 0
  %92 = vmatprep.subr.bf16.mxu0 0
  %93 = vmatpush1.bf16.msra.mxu0 0
  %94 = vmatprep.subr.bf16.mxu0 0
  %95 = vmatpush1.bf16.msra.mxu0 0
  %96 = vmatprep.subr.bf16.mxu0 0
  %97 = vmatpush1.bf16.msra.mxu0 0
  %98 = vmatprep.subr.bf16.mxu0 0
  %99 = vmatpush1.bf16.msra.mxu0 0
  %100 = vmatprep.subr.bf16.mxu0 0
  %101 = vmatpush1.bf16.msra.mxu0 0
  %102 = vmatprep.subr.bf16.mxu0 0
  %103 = vmatpush1.bf16.msra.mxu0 0
  %104 = vmatprep.subr.bf16.mxu0 0
  %105 = vmatpush1.bf16.msra.mxu0 0
  %106 = vmatprep.subr.bf16.mxu0 0
  %107 = vmatpush1.bf16.msra.mxu0 0
  %108 = vmatprep.subr.bf16.mxu0 0
  %109 = vmatpush1.bf16.msra.mxu0 0
  %110 = vmatprep.subr.bf16.mxu0 0
  %111 = vmatpush1.bf16.msra.mxu0 0
  %112 = vmatprep.mubr.bf16.mxu0 0
  %113 = vmatmul.mubr.bf16.gmra.mrb[0].mxu0 %v74
  %v114 = vpop.f32.mrb[0].mxu0
  %v115 = vadd.f32 %v33, %v114
  %v116 = vpop.f32.mrb[0].mxu0
  %v117 = vpop.f32.mrb[0].mxu0
  %v118 = vadd.f32 %v38, %v117
  %v119 = vpop.f32.mrb[0].mxu0
  %120 = vdwg.mxu0
  %v121 = vmax.f32 %v115, 0.0
  %v122 = vmax.f32 %v118, 0.0
  %123 = vadd.xlane.f32.xlu0 %v121
  %v124 = vpop.xlane.xlu0 %123
  %125 = vadd.xlane.f32.xlu0 %v122
  %v126 = vpop.xlane.xlu0 %125
  %v127 = vmul.f32 %v121, %v121
  %v128 = vmul.f32 %v122, %v122
  %129 = vadd.xlane.f32.xlu0 %v127
  %v130 = vpop.xlane.xlu0 %129
  %131 = vadd.xlane.f32.xlu0 %v128
  %v132 = vpop.xlane.xlu0 %131
  %vm133 = vcmask 7168
  %v134 = vsel %vm133, %v124, %v130
  %v135 = vsel %vm133, %v126, %v132
  %vm136 = vcmask 15360
  %137 = vst.msk [vmem:[%s4] sm:$0xff] %vm136, %v134
  %138 = vst.msk [vmem:[%s4 + $0x8] sm:$0xff] %vm136, %v135
  %v139 = vpack.c.bf16 %v122, %v121
  %v141 = vunpack.c.l.b16 %v139
  %v142 = vunpack.c.h.b16 %v139
  %v143 = vpack.c.b16 %v141, %v141
  %v144 = vpack.c.b16 %v142, %v142
  %147 = vst [vmem:[%s3] sm:$0xf] %v143
  %148 = vst [vmem:[%s3 + $0x4] sm:$0xf] %v144
  // Predicated region
  $region14: #{net_forward.18} parent=0 // pred_check
    _
  $region15: #{net_forward.18} parent=0 // pred_check_branch
    %150 = sbr.rel (0) target = $region17
  $region16: #{net_forward.18} parent=0 // pred_region
    _
  $region17: #{net_forward.18} parent=0 // pred_fallthru
    _
  // Predicated region
  $region18: #{net_forward.18} parent=0 // pred_check
    _
  $region19: #{net_forward.18} parent=0 // pred_check_branch
    %152 = sbr.rel (0) target = $region21
  $region20: #{net_forward.18} parent=0 // pred_region
    _
  $region21: #{net_forward.18} parent=0 // pred_fallthru
    _
  // Predicated region
  $region22: #{net_forward.18} parent=0 // pred_check
    _
  $region23: #{net_forward.18} parent=0 // pred_check_branch
    %154 = sbr.rel (0) target = $region25
  $region24: #{net_forward.18} parent=0 // pred_region
    _
  $region25: #{net_forward.18} parent=0 // pred_fallthru
    _
  // Predicated region
  $region26: #{net_forward.18} parent=0 // pred_check
    _
  $region27: #{net_forward.18} parent=0 // pred_check_branch
    %156 = sbr.rel (0) target = $region29
  $region28: #{net_forward.18} parent=0 // pred_region
    _
  $region29: #{net_forward.18} parent=0 // pred_fallthru
    _

// kernel: net_forward.19
$region0: #{net_forward.19}
  #allocation0 [shape = 'u32[]', space=smem, size = 0x4, offset = 0x4, fixed_abs, tag = 'smem constant byte address 0x4 - core index']
  #allocation1 [shape = 'u32[144,128]{1,0:T(1,128)}', space=vmem, size = 0x12000, scoped, tag = 'internal scratch']
  %s0 = inlined_call_operand.vmem [shape: bf16[32,144], index: 0, kind: input, shape index: {}]
  %s1 = inlined_call_operand.vmem [shape: f32[32,1], index: 1, kind: input, shape index: {}]
  %s2 = inlined_call_operand.vmem [shape: bf16[144,128], index: 2, kind: input, shape index: {}]
  %s3 = inlined_call_operand.vmem [shape: bf16[32,128], index: 3, kind: output, shape index: {0}]
  %s4 = inlined_call_operand.vmem [shape: f32[1,32,2], index: 4, kind: output, shape index: {1}]
  %5 = xla_tuple %s3, %s4
  %s6 = sld [smem:[#allocation0]]
  $region30: #{net_forward.19} parent=0
    _
  %s8 = ssub.s32 1, %s6
  %s9 = scalar_select 0, %s8, %s6
  // Predicated region
  $region2: #{net_forward.19} parent=0 // pred_check
    _
  $region3: #{net_forward.19} parent=0 // pred_check_branch
    %11 = sbr.rel (0) target = $region5
  $region4: #{net_forward.19} parent=0 // pred_region
    _
  $region5: #{net_forward.19} parent=0 // pred_fallthru
    _
  // Predicated region
  $region6: #{net_forward.19} parent=0 // pred_check
    _
  $region7: #{net_forward.19} parent=0 // pred_check_branch
    %13 = sbr.rel (0) target = $region9
  $region8: #{net_forward.19} parent=0 // pred_region
    _
  $region9: #{net_forward.19} parent=0 // pred_fallthru
    _
  // Predicated region
  $region10: #{net_forward.19} parent=0 // pred_check
    _
  $region11: #{net_forward.19} parent=0 // pred_check_branch
    %15 = sbr.rel (0) target = $region13
  $region12: #{net_forward.19} parent=0 // pred_region
    _
  $region13: #{net_forward.19} parent=0 // pred_fallthru
    _
  %v17 = vld [vmem:[%s0] sm:$0xff]
  %v18 = vld [vmem:[%s0 + $0x8] sm:$0xff]
  %v19 = vld [vmem:[%s0 + $0x10] sm:$0xff]
  %v20 = vld [vmem:[%s0 + $0x18] sm:$0xff]
  %v21 = vld [vmem:[%s2] sm:$0xf]
  %v22 = vld [vmem:[%s2 + $0x4] sm:$0xf]
  %v23 = vld [vmem:[%s2 + $0x8] sm:$0xf]
  %v24 = vld [vmem:[%s2 + $0xc] sm:$0xf]
  %v25 = vld [vmem:[%s2 + $0x10] sm:$0xf]
  %v26 = vld [vmem:[%s2 + $0x14] sm:$0xf]
  %v27 = vld [vmem:[%s2 + $0x18] sm:$0xf]
  %v28 = vld [vmem:[%s2 + $0x1c] sm:$0xf]
  %v29 = vld [vmem:[%s2 + $0x20] sm:$0xf]
  %v30 = vld [vmem:[%s2 + $0x24] sm:$0xf]
  %v31 = vld [vmem:[%s2 + $0x28] sm:$0xf]
  %v32 = vld [vmem:[%s2 + $0x2c] sm:$0xf]
  %v33 = vld [vmem:[%s2 + $0x30] sm:$0xf]
  %v34 = vld [vmem:[%s2 + $0x34] sm:$0xf]
  %v35 = vld [vmem:[%s2 + $0x38] sm:$0xf]
  %v36 = vld [vmem:[%s2 + $0x3c] sm:$0xf]
  %v37 = vld [vmem:[%s2 + $0x40] sm:$0xf]
  %v38 = vld [vmem:[%s2 + $0x44] sm:$0xf]
  %v39 = vld [vmem:[%s1] sm:$0xff]
  %v40 = vld [vmem:[%s1 + $0x8] sm:$0xff]
  %v41 = vld [vmem:[%s1 + $0x10] sm:$0xff]
  %v42 = vld [vmem:[%s1 + $0x18] sm:$0xff]
  %44 = vset.pattern.permute.xlu0 0
  %45 = vperm.xlu0 %44, %v39
  %v46 = vpop.permute.xlu0 %45
  %49 = vset.pattern.permute.xlu0 0
  %50 = vperm.xlu0 %49, %v40
  %v51 = vpop.permute.xlu0 %50
  %54 = vset.pattern.permute.xlu0 0
  %55 = vperm.xlu0 %54, %v41
  %v56 = vpop.permute.xlu0 %55
  %59 = vset.pattern.permute.xlu0 0
  %60 = vperm.xlu0 %59, %v42
  %v61 = vpop.permute.xlu0 %60
  %v67 = vunpack.c.l.b16 %v17
  %v68 = vunpack.c.h.b16 %v17
  %v69 = vunpack.c.l.b16 %v18
  %v70 = vunpack.c.h.b16 %v18
  %v71 = vunpack.c.l.b16 %v19
  %v72 = vunpack.c.h.b16 %v19
  %v73 = vunpack.c.l.b16 %v20
  %v74 = vunpack.c.h.b16 %v20
  %v75 = vpack.c.b16 %v69, %v67
  %v76 = vpack.c.b16 %v70, %v68
  %v77 = vpack.c.b16 %v73, %v71
  %v78 = vpack.c.b16 %v74, %v72
  %v99 = vunpack.c.l.b16 %v21
  %v100 = vunpack.c.l.b16 %v22
  %v101 = vunpack.c.l.b16 %v23
  %v102 = vunpack.c.l.b16 %v24
  %v103 = vunpack.c.l.b16 %v25
  %v104 = vunpack.c.l.b16 %v26
  %v105 = vunpack.c.l.b16 %v27
  %v106 = vunpack.c.l.b16 %v28
  %v107 = vunpack.c.l.b16 %v29
  %v108 = vunpack.c.l.b16 %v30
  %v109 = vunpack.c.l.b16 %v31
  %v110 = vunpack.c.l.b16 %v32
  %v111 = vunpack.c.l.b16 %v33
  %v112 = vunpack.c.l.b16 %v34
  %v113 = vunpack.c.l.b16 %v35
  %v114 = vunpack.c.l.b16 %v36
  %v115 = vunpack.c.l.b16 %v37
  %v116 = vunpack.c.l.b16 %v38
  %v117 = vpack.c.b16 %v100, %v99
  %v118 = vpack.c.b16 %v102, %v101
  %v119 = vpack.c.b16 %v104, %v103
  %v120 = vpack.c.b16 %v106, %v105
  %v121 = vpack.c.b16 %v108, %v107
  %v122 = vpack.c.b16 %v110, %v109
  %v123 = vpack.c.b16 %v112, %v111
  %v124 = vpack.c.b16 %v114, %v113
  %v125 = vpack.c.b16 %v116, %v115
  %vm135 = vcmask 130048
  %v137 = vsel %vm135, %v76, 0
  %v140 = vsel %vm135, %v78, 0
  %142 = vmatprep.subr.bf16.mxu0 0
  %143 = vmatpush1.bf16.msra.mxu0 %v117
  %144 = vmatprep.subr.bf16.mxu0 0
  %145 = vmatpush1.bf16.msra.mxu0 %v118
  %146 = vmatprep.subr.bf16.mxu0 0
  %147 = vmatpush1.bf16.msra.mxu0 %v119
  %148 = vmatprep.subr.bf16.mxu0 0
  %149 = vmatpush1.bf16.msra.mxu0 %v120
  %150 = vmatprep.subr.bf16.mxu0 0
  %151 = vmatpush1.bf16.msra.mxu0 %v121
  %152 = vmatprep.subr.bf16.mxu0 0
  %153 = vmatpush1.bf16.msra.mxu0 %v122
  %154 = vmatprep.subr.bf16.mxu0 0
  %155 = vmatpush1.bf16.msra.mxu0 %v123
  %156 = vmatprep.subr.bf16.mxu0 0
  %157 = vmatpush1.bf16.msra.mxu0 %v124
  %158 = vmatprep.subr.bf16.mxu0 0
  %159 = vmatpush1.bf16.msra.mxu0 %v125
  %160 = vmatprep.subr.bf16.mxu0 0
  %161 = vmatpush1.bf16.msra.mxu0 0
  %162 = vmatprep.subr.bf16.mxu0 0
  %163 = vmatpush1.bf16.msra.mxu0 0
  %164 = vmatprep.subr.bf16.mxu0 0
  %165 = vmatpush1.bf16.msra.mxu0 0
  %166 = vmatprep.subr.bf16.mxu0 0
  %167 = vmatpush1.bf16.msra.mxu0 0
  %168 = vmatprep.subr.bf16.mxu0 0
  %169 = vmatpush1.bf16.msra.mxu0 0
  %170 = vmatprep.subr.bf16.mxu0 0
  %171 = vmatpush1.bf16.msra.mxu0 0
  %172 = vmatprep.subr.bf16.mxu0 0
  %173 = vmatpush1.bf16.msra.mxu0 0
  %174 = vmatprep.mubr.bf16.mxu0 %v137
  %175 = vmatmul.mubr.bf16.gmra.mrb[0].mxu0 %v75
  %v176 = vpop.f32.mrb[0].mxu0
  %v177 = vadd.f32 %v46, %v176
  %v178 = vpop.f32.mrb[0].mxu0
  %v179 = vpop.f32.mrb[0].mxu0
  %v180 = vadd.f32 %v51, %v179
  %v181 = vpop.f32.mrb[0].mxu0
  %182 = vmatprep.mubr.bf16.mxu0 %v140
  %183 = vmatmul.mubr.bf16.gmra.mrb[0].mxu0 %v77
  %v184 = vpop.f32.mrb[0].mxu0
  %v185 = vadd.f32 %v56, %v184
  %v186 = vpop.f32.mrb[0].mxu0
  %v187 = vpop.f32.mrb[0].mxu0
  %v188 = vadd.f32 %v61, %v187
  %v189 = vpop.f32.mrb[0].mxu0
  %190 = vdwg.mxu0
  %v191 = vmax.f32 %v177, 0.0
  %v192 = vmax.f32 %v180, 0.0
  %v193 = vmax.f32 %v185, 0.0
  %v194 = vmax.f32 %v188, 0.0
  %195 = vadd.xlane.f32.xlu0 %v191
  %v196 = vpop.xlane.xlu0 %195
  %197 = vadd.xlane.f32.xlu0 %v192
  %v198 = vpop.xlane.xlu0 %197
  %199 = vadd.xlane.f32.xlu0 %v193
  %v200 = vpop.xlane.xlu0 %199
  %201 = vadd.xlane.f32.xlu0 %v194
  %v202 = vpop.xlane.xlu0 %201
  %v203 = vmul.f32 %v191, %v191
  %v204 = vmul.f32 %v192, %v192
  %v205 = vmul.f32 %v193, %v193
  %v206 = vmul.f32 %v194, %v194
  %207 = vadd.xlane.f32.xlu0 %v203
  %v208 = vpop.xlane.xlu0 %207
  %209 = vadd.xlane.f32.xlu0 %v204
  %v210 = vpop.xlane.xlu0 %209
  %211 = vadd.xlane.f32.xlu0 %v205
  %v212 = vpop.xlane.xlu0 %211
  %213 = vadd.xlane.f32.xlu0 %v206
  %v214 = vpop.xlane.xlu0 %213
  %vm215 = vcmask 7168
  %v216 = vsel %vm215, %v196, %v208
  %v217 = vsel %vm215, %v198, %v210
  %v218 = vsel %vm215, %v200, %v212
  %v219 = vsel %vm215, %v202, %v214
  %vm220 = vcmask 15360
  %221 = vst.msk [vmem:[%s4] sm:$0xff] %vm220, %v216
  %222 = vst.msk [vmem:[%s4 + $0x8] sm:$0xff] %vm220, %v217
  %223 = vst.msk [vmem:[%s4 + $0x10] sm:$0xff] %vm220, %v218
  %224 = vst.msk [vmem:[%s4 + $0x18] sm:$0xff] %vm220, %v219
  %v225 = vpack.c.bf16 %v192, %v191
  %v226 = vpack.c.bf16 %v194, %v193
  %v229 = vunpack.c.l.b16 %v225
  %v230 = vunpack.c.h.b16 %v225
  %v231 = vunpack.c.l.b16 %v226
  %v232 = vunpack.c.h.b16 %v226
  %v233 = vpack.c.b16 %v229, %v229
  %v234 = vpack.c.b16 %v230, %v230
  %v235 = vpack.c.b16 %v231, %v231
  %v236 = vpack.c.b16 %v232, %v232
  %241 = vst [vmem:[%s3] sm:$0xf] %v233
  %242 = vst [vmem:[%s3 + $0x4] sm:$0xf] %v234
  %243 = vst [vmem:[%s3 + $0x8] sm:$0xf] %v235
  %244 = vst [vmem:[%s3 + $0xc] sm:$0xf] %v236
  // Predicated region
  $region14: #{net_forward.19} parent=0 // pred_check
    _
  $region15: #{net_forward.19} parent=0 // pred_check_branch
    %246 = sbr.rel (0) target = $region17
  $region16: #{net_forward.19} parent=0 // pred_region
    _
  $region17: #{net_forward.19} parent=0 // pred_fallthru
    _
  // Predicated region
  $region18: #{net_forward.19} parent=0 // pred_check
    _
  $region19: #{net_forward.19} parent=0 // pred_check_branch
    %248 = sbr.rel (0) target = $region21
  $region20: #{net_forward.19} parent=0 // pred_region
    _
  $region21: #{net_forward.19} parent=0 // pred_fallthru
    _
  // Predicated region
  $region22: #{net_forward.19} parent=0 // pred_check
    _
  $region23: #{net_forward.19} parent=0 // pred_check_branch
    %250 = sbr.rel (0) target = $region25
  $region24: #{net_forward.19} parent=0 // pred_region
    _
  $region25: #{net_forward.19} parent=0 // pred_fallthru
    _
  // Predicated region
  $region26: #{net_forward.19} parent=0 // pred_check
    _
  $region27: #{net_forward.19} parent=0 // pred_check_branch
    %252 = sbr.rel (0) target = $region29
  $region28: #{net_forward.19} parent=0 // pred_region
    _
  $region29: #{net_forward.19} parent=0 // pred_fallthru
    _

// kernel: mul.102
$region0: #{mul.102}
  %s0 = inlined_call_operand.vmem [shape: f32[32,9], index: 0, kind: input, shape index: {}]
  %s1 = inlined_call_operand.vmem [shape: f32[288], index: 1, kind: output, shape index: {}]
  $region1: #{mul.102} parent=0
    #allocation0 [shape = 'u8[4096]{0}', space=vmem, size = 0x1000, scoped, tag = 'scoped mem for output reshape']
    %v2 = vld [vmem:[%s0] sm:$0x1]
    %vm3 = vcmask 72704
    %4 = vst.msk [vmem:[#allocation0] sm:$0x1] %vm3, %v2
    %s5 = scalar_lea.vmem %s0, 14
    %v6 = vld [vmem:[%s5] sm:$0x1]
    %s7 = scalar_lea.vmem %s0, 14
    %v8 = vld [vmem:[%s7] sm:$0x1]
    %vm9 = vcmask 15360
    %v10 = vsel %vm9, %v8, %v6
    %11 = vrot.lane.b32.xlu0 %v10, 126
    %v12 = vpop.permute.xlu0 %11
    %vm13 = vcmask 56320
    %s14 = scalar_lea.vmem [#allocation0], 1
    %15 = vst.msk [vmem:[%s14] sm:$0x1] %vm13, %v12
    %vm16 = vcmask 1048560
    %17 = vst.msk [vmem:[#allocation0] sm:$0x1] %vm16, %v12
    %s18 = scalar_lea.vmem %s0, 28
    %v19 = vld [vmem:[%s18] sm:$0x1]
    %s20 = scalar_lea.vmem %s0, 28
    %v21 = vld [vmem:[%s20] sm:$0x1]
    %vm22 = vcmask 31744
    %v23 = vsel %vm22, %v21, %v19
    %24 = vrot.lane.b32.xlu0 %v23, 124
    %v25 = vpop.permute.xlu0 %24
    %vm26 = vcmask 39936
    %s27 = scalar_lea.vmem [#allocation0], 2
    %28 = vst.msk [vmem:[%s27] sm:$0x1] %vm26, %v25
    %vm29 = vcmask 1048544
    %s30 = scalar_lea.vmem [#allocation0], 1
    %31 = vst.msk [vmem:[%s30] sm:$0x1] %vm29, %v25
    %s32 = scalar_lea.vmem %s0, 13
    %v33 = vld [vmem:[%s32] sm:$0x1]
    %34 = vrot.lane.b32.xlu0 %v33, 117
    %v35 = vpop.permute.xlu0 %34
    %vm36 = vcmask 1032104
    %37 = vst.msk [vmem:[#allocation0] sm:$0x1] %vm36, %v35
    %s38 = scalar_lea.vmem %s0, 27
    %v39 = vld [vmem:[%s38] sm:$0x1]
    %40 = vrot.lane.b32.xlu0 %v39, 115
    %v41 = vpop.permute.xlu0 %40
    %vm42 = vcmask 1015704
    %s43 = scalar_lea.vmem [#allocation0], 1
    %44 = vst.msk [vmem:[%s43] sm:$0x1] %vm42, %v41
    %s45 = scalar_lea.vmem %s0, 12
    %v46 = vld [vmem:[%s45] sm:$0x1]
    %47 = vrot.lane.b32.xlu0 %v46, 108
    %v48 = vpop.permute.xlu0 %47
    %vm49 = vcmask 958304
    %50 = vst.msk [vmem:[#allocation0] sm:$0x1] %vm49, %v48
    %s51 = scalar_lea.vmem %s0, 26
    %v52 = vld [vmem:[%s51] sm:$0x1]
    %53 = vrot.lane.b32.xlu0 %v52, 106
    %v54 = vpop.permute.xlu0 %53
    %vm55 = vcmask 941904
    %s56 = scalar_lea.vmem [#allocation0], 1
    %57 = vst.msk [vmem:[%s56] sm:$0x1] %vm55, %v54
    %s58 = scalar_lea.vmem %s0, 11
    %v59 = vld [vmem:[%s58] sm:$0x1]
    %60 = vrot.lane.b32.xlu0 %v59, 99
    %v61 = vpop.permute.xlu0 %60
    %vm62 = vcmask 884504
    %63 = vst.msk [vmem:[#allocation0] sm:$0x1] %vm62, %v61
    %s64 = scalar_lea.vmem %s0, 25
    %v65 = vld [vmem:[%s64] sm:$0x1]
    %66 = vrot.lane.b32.xlu0 %v65, 97
    %v67 = vpop.permute.xlu0 %66
    %vm68 = vcmask 868104
    %s69 = scalar_lea.vmem [#allocation0], 1
    %70 = vst.msk [vmem:[%s69] sm:$0x1] %vm68, %v67
    %s71 = scalar_lea.vmem %s0, 10
    %v72 = vld [vmem:[%s71] sm:$0x1]
    %73 = vrot.lane.b32.xlu0 %v72, 90
    %v74 = vpop.permute.xlu0 %73
    %vm75 = vcmask 810704
    %76 = vst.msk [vmem:[#allocation0] sm:$0x1] %vm75, %v74
    %s77 = scalar_lea.vmem %s0, 24
    %v78 = vld [vmem:[%s77] sm:$0x1]
    %79 = vrot.lane.b32.xlu0 %v78, 88
    %v80 = vpop.permute.xlu0 %79
    %vm81 = vcmask 794304
    %s82 = scalar_lea.vmem [#allocation0], 1
    %83 = vst.msk [vmem:[%s82] sm:$0x1] %vm81, %v80
    %s84 = scalar_lea.vmem %s0, 9
    %v85 = vld [vmem:[%s84] sm:$0x1]
    %86 = vrot.lane.b32.xlu0 %v85, 81
    %v87 = vpop.permute.xlu0 %86
    %vm88 = vcmask 736904
    %89 = vst.msk [vmem:[#allocation0] sm:$0x1] %vm88, %v87
    %s90 = scalar_lea.vmem %s0, 23
    %v91 = vld [vmem:[%s90] sm:$0x1]
    %92 = vrot.lane.b32.xlu0 %v91, 79
    %v93 = vpop.permute.xlu0 %92
    %vm94 = vcmask 720504
    %s95 = scalar_lea.vmem [#allocation0], 1
    %96 = vst.msk [vmem:[%s95] sm:$0x1] %vm94, %v93
    %s97 = scalar_lea.vmem %s0, 8
    %v98 = vld [vmem:[%s97] sm:$0x1]
    %99 = vrot.lane.b32.xlu0 %v98, 72
    %v100 = vpop.permute.xlu0 %99
    %vm101 = vcmask 663104
    %102 = vst.msk [vmem:[#allocation0] sm:$0x1] %vm101, %v100
    %s103 = scalar_lea.vmem %s0, 22
    %v104 = vld [vmem:[%s103] sm:$0x1]
    %105 = vrot.lane.b32.xlu0 %v104, 70
    %v106 = vpop.permute.xlu0 %105
    %vm107 = vcmask 646704
    %s108 = scalar_lea.vmem [#allocation0], 1
    %109 = vst.msk [vmem:[%s108] sm:$0x1] %vm107, %v106
    %s110 = scalar_lea.vmem %s0, 7
    %v111 = vld [vmem:[%s110] sm:$0x1]
    %112 = vrot.lane.b32.xlu0 %v111, 63
    %v113 = vpop.permute.xlu0 %112
    %vm114 = vcmask 589304
    %115 = vst.msk [vmem:[#allocation0] sm:$0x1] %vm114, %v113
    %s116 = scalar_lea.vmem %s0, 21
    %v117 = vld [vmem:[%s116] sm:$0x1]
    %118 = vrot.lane.b32.xlu0 %v117, 61
    %v119 = vpop.permute.xlu0 %118
    %vm120 = vcmask 572904
    %s121 = scalar_lea.vmem [#allocation0], 1
    %122 = vst.msk [vmem:[%s121] sm:$0x1] %vm120, %v119
    %s123 = scalar_lea.vmem %s0, 6
    %v124 = vld [vmem:[%s123] sm:$0x1]
    %125 = vrot.lane.b32.xlu0 %v124, 54
    %v126 = vpop.permute.xlu0 %125
    %vm127 = vcmask 515504
    %128 = vst.msk [vmem:[#allocation0] sm:$0x1] %vm127, %v126
    %s129 = scalar_lea.vmem %s0, 20
    %v130 = vld [vmem:[%s129] sm:$0x1]
    %131 = vrot.lane.b32.xlu0 %v130, 52
    %v132 = vpop.permute.xlu0 %131
    %vm133 = vcmask 499104
    %s134 = scalar_lea.vmem [#allocation0], 1
    %135 = vst.msk [vmem:[%s134] sm:$0x1] %vm133, %v132
    %s136 = scalar_lea.vmem %s0, 5
    %v137 = vld [vmem:[%s136] sm:$0x1]
    %138 = vrot.lane.b32.xlu0 %v137, 45
    %v139 = vpop.permute.xlu0 %138
    %vm140 = vcmask 441704
    %141 = vst.msk [vmem:[#allocation0] sm:$0x1] %vm140, %v139
    %s142 = scalar_lea.vmem %s0, 19
    %v143 = vld [vmem:[%s142] sm:$0x1]
    %144 = vrot.lane.b32.xlu0 %v143, 43
    %v145 = vpop.permute.xlu0 %144
    %vm146 = vcmask 425304
    %s147 = scalar_lea.vmem [#allocation0], 1
    %148 = vst.msk [vmem:[%s147] sm:$0x1] %vm146, %v145
    %s149 = scalar_lea.vmem %s0, 4
    %v150 = vld [vmem:[%s149] sm:$0x1]
    %151 = vrot.lane.b32.xlu0 %v150, 36
    %v152 = vpop.permute.xlu0 %151
    %vm153 = vcmask 367904
    %154 = vst.msk [vmem:[#allocation0] sm:$0x1] %vm153, %v152
    %s155 = scalar_lea.vmem %s0, 18
    %v156 = vld [vmem:[%s155] sm:$0x1]
    %157 = vrot.lane.b32.xlu0 %v156, 34
    %v158 = vpop.permute.xlu0 %157
    %vm159 = vcmask 351504
    %s160 = scalar_lea.vmem [#allocation0], 1
    %161 = vst.msk [vmem:[%s160] sm:$0x1] %vm159, %v158
    %s162 = scalar_lea.vmem %s0, 3
    %v163 = vld [vmem:[%s162] sm:$0x1]
    %164 = vrot.lane.b32.xlu0 %v163, 27
    %v165 = vpop.permute.xlu0 %164
    %vm166 = vcmask 294104
    %167 = vst.msk [vmem:[#allocation0] sm:$0x1] %vm166, %v165
    %s168 = scalar_lea.vmem %s0, 17
    %v169 = vld [vmem:[%s168] sm:$0x1]
    %170 = vrot.lane.b32.xlu0 %v169, 25
    %v171 = vpop.permute.xlu0 %170
    %vm172 = vcmask 277704
    %s173 = scalar_lea.vmem [#allocation0], 1
    %174 = vst.msk [vmem:[%s173] sm:$0x1] %vm172, %v171
    %s175 = scalar_lea.vmem %s0, 31
    %v176 = vld [vmem:[%s175] sm:$0x1]
    %177 = vrot.lane.b32.xlu0 %v176, 23
    %v178 = vpop.permute.xlu0 %177
    %vm179 = vcmask 261304
    %s180 = scalar_lea.vmem [#allocation0], 2
    %181 = vst.msk [vmem:[%s180] sm:$0x1] %vm179, %v178
    %s182 = scalar_lea.vmem %s0, 2
    %v183 = vld [vmem:[%s182] sm:$0x1]
    %184 = vrot.lane.b32.xlu0 %v183, 18
    %v185 = vpop.permute.xlu0 %184
    %vm186 = vcmask 220304
    %187 = vst.msk [vmem:[#allocation0] sm:$0x1] %vm186, %v185
    %s188 = scalar_lea.vmem %s0, 16
    %v189 = vld [vmem:[%s188] sm:$0x1]
    %190 = vrot.lane.b32.xlu0 %v189, 16
    %v191 = vpop.permute.xlu0 %190
    %vm192 = vcmask 203904
    %s193 = scalar_lea.vmem [#allocation0], 1
    %194 = vst.msk [vmem:[%s193] sm:$0x1] %vm192, %v191
    %s195 = scalar_lea.vmem %s0, 30
    %v196 = vld [vmem:[%s195] sm:$0x1]
    %197 = vrot.lane.b32.xlu0 %v196, 14
    %v198 = vpop.permute.xlu0 %197
    %vm199 = vcmask 187504
    %s200 = scalar_lea.vmem [#allocation0], 2
    %201 = vst.msk [vmem:[%s200] sm:$0x1] %vm199, %v198
    %s202 = scalar_lea.vmem %s0, 1
    %v203 = vld [vmem:[%s202] sm:$0x1]
    %204 = vrot.lane.b32.xlu0 %v203, 9
    %v205 = vpop.permute.xlu0 %204
    %vm206 = vcmask 146504
    %207 = vst.msk [vmem:[#allocation0] sm:$0x1] %vm206, %v205
    %s208 = scalar_lea.vmem %s0, 15
    %v209 = vld [vmem:[%s208] sm:$0x1]
    %210 = vrot.lane.b32.xlu0 %v209, 7
    %v211 = vpop.permute.xlu0 %210
    %vm212 = vcmask 130104
    %s213 = scalar_lea.vmem [#allocation0], 1
    %214 = vst.msk [vmem:[%s213] sm:$0x1] %vm212, %v211
    %s215 = scalar_lea.vmem %s0, 29
    %v216 = vld [vmem:[%s215] sm:$0x1]
    %217 = vrot.lane.b32.xlu0 %v216, 5
    %v218 = vpop.permute.xlu0 %217
    %vm219 = vcmask 113704
    %s220 = scalar_lea.vmem [#allocation0], 2
    %221 = vst.msk [vmem:[%s220] sm:$0x1] %vm219, %v218
    %s223 = sshllo.u32 0, 4
    %v225 = vld [vmem:[#allocation0] sm:%s223]
    %s226 = sshllo.u32 0, 4
    %227 = vst [vmem:[%s1] sm:%s226] %v225

// kernel: net_forward.20
$region0: #{net_forward.20}
  #allocation0 [shape = 'u32[]', space=smem, size = 0x4, offset = 0x4, fixed_abs, tag = 'smem constant byte address 0x4 - core index']
  #allocation1 [shape = 'u32[144,128]{1,0:T(1,128)}', space=vmem, size = 0x12000, scoped, tag = 'internal scratch']
  %s0 = inlined_call_operand.vmem [shape: bf16[48,288], index: 0, kind: input, shape index: {}]
  %s1 = inlined_call_operand.vmem [shape: f32[48,1], index: 1, kind: input, shape index: {}]
  %s2 = inlined_call_operand.vmem [shape: bf16[288,72], index: 2, kind: input, shape index: {}]
  %s3 = inlined_call_operand.vmem [shape: bf16[48,72], index: 3, kind: output, shape index: {0}]
  %s4 = inlined_call_operand.vmem [shape: f32[1,48,2], index: 4, kind: output, shape index: {1}]
  %5 = xla_tuple %s3, %s4
  %s6 = sld [smem:[#allocation0]]
  $region30: #{net_forward.20} parent=0
    _
  %s8 = ssub.s32 1, %s6
  %s9 = scalar_select 0, %s8, %s6
  // Predicated region
  $region2: #{net_forward.20} parent=0 // pred_check
    _
  $region3: #{net_forward.20} parent=0 // pred_check_branch
    %11 = sbr.rel (0) target = $region5
  $region4: #{net_forward.20} parent=0 // pred_region
    _
  $region5: #{net_forward.20} parent=0 // pred_fallthru
    _
  // Predicated region
  $region6: #{net_forward.20} parent=0 // pred_check
    _
  $region7: #{net_forward.20} parent=0 // pred_check_branch
    %13 = sbr.rel (0) target = $region9
  $region8: #{net_forward.20} parent=0 // pred_region
    _
  $region9: #{net_forward.20} parent=0 // pred_fallthru
    _
  // Predicated region
  $region10: #{net_forward.20} parent=0 // pred_check
    _
  $region11: #{net_forward.20} parent=0 // pred_check_branch
    %15 = sbr.rel (0) target = $region13
  $region12: #{net_forward.20} parent=0 // pred_region
    _
  $region13: #{net_forward.20} parent=0 // pred_fallthru
    _
  %v17 = vld [vmem:[%s0] sm:$0xff]
  %v18 = vld [vmem:[%s0 + $0x8] sm:$0xf]
  %v19 = vld [vmem:[%s0 + $0xc] sm:$0xff]
  %v20 = vld [vmem:[%s0 + $0x14] sm:$0xf]
  %v21 = vld [vmem:[%s0 + $0x18] sm:$0xff]
  %v22 = vld [vmem:[%s0 + $0x20] sm:$0xf]
  %v23 = vld [vmem:[%s0 + $0x24] sm:$0xff]
  %v24 = vld [vmem:[%s0 + $0x2c] sm:$0xf]
  %v25 = vld [vmem:[%s0 + $0x30] sm:$0xff]
  %v26 = vld [vmem:[%s0 + $0x38] sm:$0xf]
  %v27 = vld [vmem:[%s0 + $0x3c] sm:$0xff]
  %v28 = vld [vmem:[%s0 + $0x44] sm:$0xf]
  %v29 = vld [vmem:[%s2] sm:$0xf]
  %v30 = vld [vmem:[%s2 + $0x4] sm:$0xf]
  %v31 = vld [vmem:[%s2 + $0x8] sm:$0xf]
  %v32 = vld [vmem:[%s2 + $0xc] sm:$0xf]
  %v33 = vld [vmem:[%s2 + $0x10] sm:$0xf]
  %v34 = vld [vmem:[%s2 + $0x14] sm:$0xf]
  %v35 = vld [vmem:[%s2 + $0x18] sm:$0xf]
  %v36 = vld [vmem:[%s2 + $0x1c] sm:$0xf]
  %v37 = vld [vmem:[%s2 + $0x20] sm:$0xf]
  %v38 = vld [vmem:[%s2 + $0x24] sm:$0xf]
  %v39 = vld [vmem:[%s2 + $0x28] sm:$0xf]
  %v40 = vld [vmem:[%s2 + $0x2c] sm:$0xf]
  %v41 = vld [vmem:[%s2 + $0x30] sm:$0xf]
  %v42 = vld [vmem:[%s2 + $0x34] sm:$0xf]
  %v43 = vld [vmem:[%s2 + $0x38] sm:$0xf]
  %v44 = vld [vmem:[%s2 + $0x3c] sm:$0xf]
  %v45 = vld [vmem:[%s2 + $0x40] sm:$0xf]
  %v46 = vld [vmem:[%s2 + $0x44] sm:$0xf]
  %v47 = vld [vmem:[%s2 + $0x48] sm:$0xf]
  %v48 = vld [vmem:[%s2 + $0x4c] sm:$0xf]
  %v49 = vld [vmem:[%s2 + $0x50] sm:$0xf]
  %v50 = vld [vmem:[%s2 + $0x54] sm:$0xf]
  %v51 = vld [vmem:[%s2 + $0x58] sm:$0xf]
  %v52 = vld [vmem:[%s2 + $0x5c] sm:$0xf]
  %v53 = vld [vmem:[%s2 + $0x60] sm:$0xf]
  %v54 = vld [vmem:[%s2 + $0x64] sm:$0xf]
  %v55 = vld [vmem:[%s2 + $0x68] sm:$0xf]
  %v56 = vld [vmem:[%s2 + $0x6c] sm:$0xf]
  %v57 = vld [vmem:[%s2 + $0x70] sm:$0xf]
  %v58 = vld [vmem:[%s2 + $0x74] sm:$0xf]
  %v59 = vld [vmem:[%s2 + $0x78] sm:$0xf]
  %v60 = vld [vmem:[%s2 + $0x7c] sm:$0xf]
  %v61 = vld [vmem:[%s2 + $0x80] sm:$0xf]
  %v62 = vld [vmem:[%s2 + $0x84] sm:$0xf]
  %v63 = vld [vmem:[%s2 + $0x88] sm:$0xf]
  %v64 = vld [vmem:[%s2 + $0x8c] sm:$0xf]
  %v65 = vld [vmem:[%s1] sm:$0xff]
  %v66 = vld [vmem:[%s1 + $0x8] sm:$0xff]
  %v67 = vld [vmem:[%s1 + $0x10] sm:$0xff]
  %v68 = vld [vmem:[%s1 + $0x18] sm:$0xff]
  %v69 = vld [vmem:[%s1 + $0x20] sm:$0xff]
  %v70 = vld [vmem:[%s1 + $0x28] sm:$0xff]
  %72 = vset.pattern.permute.xlu0 0
  %73 = vperm.xlu0 %72, %v65
  %v74 = vpop.permute.xlu0 %73
  %77 = vset.pattern.permute.xlu0 0
  %78 = vperm.xlu0 %77, %v66
  %v79 = vpop.permute.xlu0 %78
  %82 = vset.pattern.permute.xlu0 0
  %83 = vperm.xlu0 %82, %v67
  %v84 = vpop.permute.xlu0 %83
  %87 = vset.pattern.permute.xlu0 0
  %88 = vperm.xlu0 %87, %v68
  %v89 = vpop.permute.xlu0 %88
  %92 = vset.pattern.permute.xlu0 0
  %93 = vperm.xlu0 %92, %v69
  %v94 = vpop.permute.xlu0 %93
  %97 = vset.pattern.permute.xlu0 0
  %98 = vperm.xlu0 %97, %v70
  %v99 = vpop.permute.xlu0 %98
  %v113 = vunpack.c.l.b16 %v17
  %v114 = vunpack.c.h.b16 %v17
  %v115 = vunpack.c.l.b16 %v18
  %v116 = vunpack.c.l.b16 %v19
  %v117 = vunpack.c.h.b16 %v19
  %v118 = vunpack.c.l.b16 %v20
  %v119 = vunpack.c.l.b16 %v21
  %v120 = vunpack.c.h.b16 %v21
  %v121 = vunpack.c.l.b16 %v22
  %v122 = vunpack.c.l.b16 %v23
  %v123 = vunpack.c.h.b16 %v23
  %v124 = vunpack.c.l.b16 %v24
  %v125 = vunpack.c.l.b16 %v25
  %v126 = vunpack.c.h.b16 %v25
  %v127 = vunpack.c.l.b16 %v26
  %v128 = vunpack.c.l.b16 %v27
  %v129 = vunpack.c.h.b16 %v27
  %v130 = vunpack.c.l.b16 %v28
  %v131 = vpack.c.b16 %v116, %v113
  %v132 = vpack.c.b16 %v117, %v114
  %v133 = vpack.c.b16 %v118, %v115
  %v134 = vpack.c.b16 %v122, %v119
  %v135 = vpack.c.b16 %v123, %v120
  %v136 = vpack.c.b16 %v124, %v121
  %v137 = vpack.c.b16 %v128, %v125
  %v138 = vpack.c.b16 %v129, %v126
  %v139 = vpack.c.b16 %v130, %v127
  %v182 = vunpack.c.l.b16 %v29
  %v183 = vunpack.c.l.b16 %v30
  %v184 = vunpack.c.l.b16 %v31
  %v185 = vunpack.c.l.b16 %v32
  %v186 = vunpack.c.l.b16 %v33
  %v187 = vunpack.c.l.b16 %v34
  %v188 = vunpack.c.l.b16 %v35
  %v189 = vunpack.c.l.b16 %v36
  %v190 = vunpack.c.l.b16 %v37
  %v191 = vunpack.c.l.b16 %v38
  %v192 = vunpack.c.l.b16 %v39
  %v193 = vunpack.c.l.b16 %v40
  %v194 = vunpack.c.l.b16 %v41
  %v195 = vunpack.c.l.b16 %v42
  %v196 = vunpack.c.l.b16 %v43
  %v197 = vunpack.c.l.b16 %v44
  %v198 = vunpack.c.l.b16 %v45
  %v199 = vunpack.c.l.b16 %v46
  %v200 = vunpack.c.l.b16 %v47
  %v201 = vunpack.c.l.b16 %v48
  %v202 = vunpack.c.l.b16 %v49
  %v203 = vunpack.c.l.b16 %v50
  %v204 = vunpack.c.l.b16 %v51
  %v205 = vunpack.c.l.b16 %v52
  %v206 = vunpack.c.l.b16 %v53
  %v207 = vunpack.c.l.b16 %v54
  %v208 = vunpack.c.l.b16 %v55
  %v209 = vunpack.c.l.b16 %v56
  %v210 = vunpack.c.l.b16 %v57
  %v211 = vunpack.c.l.b16 %v58
  %v212 = vunpack.c.l.b16 %v59
  %v213 = vunpack.c.l.b16 %v60
  %v214 = vunpack.c.l.b16 %v61
  %v215 = vunpack.c.l.b16 %v62
  %v216 = vunpack.c.l.b16 %v63
  %v217 = vunpack.c.l.b16 %v64
  %v218 = vpack.c.b16 %v183, %v182
  %v219 = vpack.c.b16 %v185, %v184
  %v220 = vpack.c.b16 %v187, %v186
  %v221 = vpack.c.b16 %v189, %v188
  %v222 = vpack.c.b16 %v191, %v190
  %v223 = vpack.c.b16 %v193, %v192
  %v224 = vpack.c.b16 %v195, %v194
  %v225 = vpack.c.b16 %v197, %v196
  %v226 = vpack.c.b16 %v199, %v198
  %v227 = vpack.c.b16 %v201, %v200
  %v228 = vpack.c.b16 %v203, %v202
  %v229 = vpack.c.b16 %v205, %v204
  %v230 = vpack.c.b16 %v207, %v206
  %v231 = vpack.c.b16 %v209, %v208
  %v232 = vpack.c.b16 %v211, %v210
  %v233 = vpack.c.b16 %v213, %v212
  %v234 = vpack.c.b16 %v215, %v214
  %v235 = vpack.c.b16 %v217, %v216
  %vm254 = vcmask 261120
  %v256 = vsel %vm254, %v133, 0
  %v259 = vsel %vm254, %v136, 0
  %v262 = vsel %vm254, %v139, 0
  %264 = vmatprep.subr.bf16.mxu0 0
  %265 = vmatpush1.bf16.msra.mxu0 %v218
  %266 = vmatprep.subr.bf16.mxu0 0
  %267 = vmatpush1.bf16.msra.mxu0 %v219
  %268 = vmatprep.subr.bf16.mxu0 0
  %269 = vmatpush1.bf16.msra.mxu0 %v220
  %270 = vmatprep.subr.bf16.mxu0 0
  %271 = vmatpush1.bf16.msra.mxu0 %v221
  %272 = vmatprep.subr.bf16.mxu0 0
  %273 = vmatpush1.bf16.msra.mxu0 %v222
  %274 = vmatprep.subr.bf16.mxu0 0
  %275 = vmatpush1.bf16.msra.mxu0 %v223
  %276 = vmatprep.subr.bf16.mxu0 0
  %277 = vmatpush1.bf16.msra.mxu0 %v224
  %278 = vmatprep.subr.bf16.mxu0 0
  %279 = vmatpush1.bf16.msra.mxu0 %v225
  %280 = vmatprep.subr.bf16.mxu0 0
  %281 = vmatpush1.bf16.msra.mxu0 %v226
  %282 = vmatprep.subr.bf16.mxu0 0
  %283 = vmatpush1.bf16.msra.mxu0 %v227
  %284 = vmatprep.subr.bf16.mxu0 0
  %285 = vmatpush1.bf16.msra.mxu0 %v228
  %286 = vmatprep.subr.bf16.mxu0 0
  %287 = vmatpush1.bf16.msra.mxu0 %v229
  %288 = vmatprep.subr.bf16.mxu0 0
  %289 = vmatpush1.bf16.msra.mxu0 %v230
  %290 = vmatprep.subr.bf16.mxu0 0
  %291 = vmatpush1.bf16.msra.mxu0 %v231
  %292 = vmatprep.subr.bf16.mxu0 0
  %293 = vmatpush1.bf16.msra.mxu0 %v232
  %294 = vmatprep.subr.bf16.mxu0 0
  %295 = vmatpush1.bf16.msra.mxu0 %v233
  %296 = vmatprep.mubr.bf16.mxu0 %v132
  %297 = vmatmul.mubr.bf16.gmra.mrb[0].mxu0 %v131
  %v298 = vpop.f32.mrb[0].mxu0
  %v299 = vadd.f32 %v74, %v298
  %v300 = vpop.f32.mrb[0].mxu0
  %v301 = vpop.f32.mrb[0].mxu0
  %v302 = vadd.f32 %v79, %v301
  %v303 = vpop.f32.mrb[0].mxu0
  %304 = vmatprep.mubr.bf16.mxu0 %v135
  %305 = vmatmul.mubr.bf16.gmra.mrb[0].mxu0 %v134
  %v306 = vpop.f32.mrb[0].mxu0
  %v307 = vadd.f32 %v84, %v306
  %v308 = vpop.f32.mrb[0].mxu0
  %v309 = vpop.f32.mrb[0].mxu0
  %v310 = vadd.f32 %v89, %v309
  %v311 = vpop.f32.mrb[0].mxu0
  %312 = vmatprep.mubr.bf16.mxu0 %v138
  %313 = vmatmul.mubr.bf16.gmra.mrb[0].mxu0 %v137
  %v314 = vpop.f32.mrb[0].mxu0
  %v315 = vadd.f32 %v94, %v314
  %v316 = vpop.f32.mrb[0].mxu0
  %v317 = vpop.f32.mrb[0].mxu0
  %v318 = vadd.f32 %v99, %v317
  %v319 = vpop.f32.mrb[0].mxu0
  %320 = vdwg.mxu0
  %321 = vmatprep.subr.bf16.mxu0 0
  %322 = vmatpush1.bf16.msra.mxu0 %v234
  %323 = vmatprep.subr.bf16.mxu0 0
  %324 = vmatpush1.bf16.msra.mxu0 %v235
  %325 = vmatprep.subr.bf16.mxu0 0
  %326 = vmatpush1.bf16.msra.mxu0 0
  %327 = vmatprep.subr.bf16.mxu0 0
  %328 = vmatpush1.bf16.msra.mxu0 0
  %329 = vmatprep.subr.bf16.mxu0 0
  %330 = vmatpush1.bf16.msra.mxu0 0
  %331 = vmatprep.subr.bf16.mxu0 0
  %332 = vmatpush1.bf16.msra.mxu0 0
  %333 = vmatprep.subr.bf16.mxu0 0
  %334 = vmatpush1.bf16.msra.mxu0 0
  %335 = vmatprep.subr.bf16.mxu0 0
  %336 = vmatpush1.bf16.msra.mxu0 0
  %337 = vmatprep.subr.bf16.mxu0 0
  %338 = vmatpush1.bf16.msra.mxu0 0
  %339 = vmatprep.subr.bf16.mxu0 0
  %340 = vmatpush1.bf16.msra.mxu0 0
  %341 = vmatprep.subr.bf16.mxu0 0
  %342 = vmatpush1.bf16.msra.mxu0 0
  %343 = vmatprep.subr.bf16.mxu0 0
  %344 = vmatpush1.bf16.msra.mxu0 0
  %345 = vmatprep.subr.bf16.mxu0 0
  %346 = vmatpush1.bf16.msra.mxu0 0
  %347 = vmatprep.subr.bf16.mxu0 0
  %348 = vmatpush1.bf16.msra.mxu0 0
  %349 = vmatprep.subr.bf16.mxu0 0
  %350 = vmatpush1.bf16.msra.mxu0 0
  %351 = vmatprep.subr.bf16.mxu0 0
  %352 = vmatpush1.bf16.msra.mxu0 0
  %353 = vmatprep.mubr.bf16.mxu0 0
  %354 = vmatmul.mubr.bf16.gmra.mrb[0].mxu0 %v256
  %v355 = vpop.f32.mrb[0].mxu0
  %v356 = vadd.f32 %v299, %v355
  %v357 = vpop.f32.mrb[0].mxu0
  %v358 = vpop.f32.mrb[0].mxu0
  %v359 = vadd.f32 %v302, %v358
  %v360 = vpop.f32.mrb[0].mxu0
  %361 = vmatprep.mubr.bf16.mxu0 0
  %362 = vmatmul.mubr.bf16.gmra.mrb[0].mxu0 %v259
  %v363 = vpop.f32.mrb[0].mxu0
  %v364 = vadd.f32 %v307, %v363
  %v365 = vpop.f32.mrb[0].mxu0
  %v366 = vpop.f32.mrb[0].mxu0
  %v367 = vadd.f32 %v310, %v366
  %v368 = vpop.f32.mrb[0].mxu0
  %369 = vmatprep.mubr.bf16.mxu0 0
  %370 = vmatmul.mubr.bf16.gmra.mrb[0].mxu0 %v262
  %v371 = vpop.f32.mrb[0].mxu0
  %v372 = vadd.f32 %v315, %v371
  %v373 = vpop.f32.mrb[0].mxu0
  %v374 = vpop.f32.mrb[0].mxu0
  %v375 = vadd.f32 %v318, %v374
  %v376 = vpop.f32.mrb[0].mxu0
  %377 = vdwg.mxu0
  %v378 = vmax.f32 %v356, 0.0
  %v379 = vmax.f32 %v359, 0.0
  %v380 = vmax.f32 %v364, 0.0
  %v381 = vmax.f32 %v367, 0.0
  %v382 = vmax.f32 %v372, 0.0
  %v383 = vmax.f32 %v375, 0.0
  %vm384 = vcmask 588800
  %v385 = vsel %vm384, %v378, 0.0
  %386 = vadd.xlane.f32.xlu0 %v385
  %v387 = vpop.xlane.xlu0 %386
  %v388 = vsel %vm384, %v379, 0.0
  %389 = vadd.xlane.f32.xlu0 %v388
  %v390 = vpop.xlane.xlu0 %389
  %v391 = vsel %vm384, %v380, 0.0
  %392 = vadd.xlane.f32.xlu0 %v391
  %v393 = vpop.xlane.xlu0 %392
  %v394 = vsel %vm384, %v381, 0.0
  %395 = vadd.xlane.f32.xlu0 %v394
  %v396 = vpop.xlane.xlu0 %395
  %v397 = vsel %vm384, %v382, 0.0
  %398 = vadd.xlane.f32.xlu0 %v397
  %v399 = vpop.xlane.xlu0 %398
  %v400 = vsel %vm384, %v383, 0.0
  %401 = vadd.xlane.f32.xlu0 %v400
  %v402 = vpop.xlane.xlu0 %401
  %v403 = vmul.f32 %v378, %v378
  %v404 = vmul.f32 %v379, %v379
  %v405 = vmul.f32 %v380, %v380
  %v406 = vmul.f32 %v381, %v381
  %v407 = vmul.f32 %v382, %v382
  %v408 = vmul.f32 %v383, %v383
  %v409 = vsel %vm384, %v403, 0.0
  %410 = vadd.xlane.f32.xlu0 %v409
  %v411 = vpop.xlane.xlu0 %410
  %v412 = vsel %vm384, %v404, 0.0
  %413 = vadd.xlane.f32.xlu0 %v412
  %v414 = vpop.xlane.xlu0 %413
  %v415 = vsel %vm384, %v405, 0.0
  %416 = vadd.xlane.f32.xlu0 %v415
  %v417 = vpop.xlane.xlu0 %416
  %v418 = vsel %vm384, %v406, 0.0
  %419 = vadd.xlane.f32.xlu0 %v418
  %v420 = vpop.xlane.xlu0 %419
  %v421 = vsel %vm384, %v407, 0.0
  %422 = vadd.xlane.f32.xlu0 %v421
  %v423 = vpop.xlane.xlu0 %422
  %v424 = vsel %vm384, %v408, 0.0
  %425 = vadd.xlane.f32.xlu0 %v424
  %v426 = vpop.xlane.xlu0 %425
  %vm427 = vcmask 7168
  %v428 = vsel %vm427, %v387, %v411
  %v429 = vsel %vm427, %v390, %v414
  %v430 = vsel %vm427, %v393, %v417
  %v431 = vsel %vm427, %v396, %v420
  %v432 = vsel %vm427, %v399, %v423
  %v433 = vsel %vm427, %v402, %v426
  %vm434 = vcmask 15360
  %435 = vst.msk [vmem:[%s4] sm:$0xff] %vm434, %v428
  %436 = vst.msk [vmem:[%s4 + $0x8] sm:$0xff] %vm434, %v429
  %437 = vst.msk [vmem:[%s4 + $0x10] sm:$0xff] %vm434, %v430
  %438 = vst.msk [vmem:[%s4 + $0x18] sm:$0xff] %vm434, %v431
  %439 = vst.msk [vmem:[%s4 + $0x20] sm:$0xff] %vm434, %v432
  %440 = vst.msk [vmem:[%s4 + $0x28] sm:$0xff] %vm434, %v433
  %v441 = vpack.c.bf16 %v379, %v378
  %v442 = vpack.c.bf16 %v381, %v380
  %v443 = vpack.c.bf16 %v383, %v382
  %v447 = vunpack.c.l.b16 %v441
  %v448 = vunpack.c.h.b16 %v441
  %v449 = vunpack.c.l.b16 %v442
  %v450 = vunpack.c.h.b16 %v442
  %v451 = vunpack.c.l.b16 %v443
  %v452 = vunpack.c.h.b16 %v443
  %v453 = vpack.c.b16 %v447, %v447
  %v454 = vpack.c.b16 %v448, %v448
  %v455 = vpack.c.b16 %v449, %v449
  %v456 = vpack.c.b16 %v450, %v450
  %v457 = vpack.c.b16 %v451, %v451
  %v458 = vpack.c.b16 %v452, %v452
  %vm465 = vcmask 584704
  %466 = vst.msk [vmem:[%s3] sm:$0xf] %vm465, %v453
  %467 = vst.msk [vmem:[%s3 + $0x4] sm:$0xf] %vm465, %v454
  %468 = vst.msk [vmem:[%s3 + $0x8] sm:$0xf] %vm465, %v455
  %469 = vst.msk [vmem:[%s3 + $0xc] sm:$0xf] %vm465, %v456
  %470 = vst.msk [vmem:[%s3 + $0x10] sm:$0xf] %vm465, %v457
  %471 = vst.msk [vmem:[%s3 + $0x14] sm:$0xf] %vm465, %v458
  // Predicated region
  $region14: #{net_forward.20} parent=0 // pred_check
    _
  $region15: #{net_forward.20} parent=0 // pred_check_branch
    %473 = sbr.rel (0) target = $region17
  $region16: #{net_forward.20} parent=0 // pred_region
    _
  $region17: #{net_forward.20} parent=0 // pred_fallthru
    _
  // Predicated region
  $region18: #{net_forward.20} parent=0 // pred_check
    _
  $region19: #{net_forward.20} parent=0 // pred_check_branch
    %475 = sbr.rel (0) target = $region21
  $region20: #{net_forward.20} parent=0 // pred_region
    _
  $region21: #{net_forward.20} parent=0 // pred_fallthru
    _
  // Predicated region
  $region22: #{net_forward.20} parent=0 // pred_check
    _
  $region23: #{net_forward.20} parent=0 // pred_check_branch
    %477 = sbr.rel (0) target = $region25
  $region24: #{net_forward.20} parent=0 // pred_region
    _
  $region25: #{net_forward.20} parent=0 // pred_fallthru
    _
  // Predicated region
  $region26: #{net_forward.20} parent=0 // pred_check
    _
  $region27: #{net_forward.20} parent=0 // pred_check_branch
    %479 = sbr.rel (0) target = $region29
  $region28: #{net_forward.20} parent=0 // pred_region
    _
  $region29: #{net_forward.20} parent=0 // pred_fallthru
    _

// kernel: net_forward.21
$region0: #{net_forward.21}
  #allocation0 [shape = 'u32[]', space=smem, size = 0x4, offset = 0x4, fixed_abs, tag = 'smem constant byte address 0x4 - core index']
  #allocation1 [shape = 'u32[144,128]{1,0:T(1,128)}', space=vmem, size = 0x12000, scoped, tag = 'internal scratch']
  %s0 = inlined_call_operand.vmem [shape: bf16[2,36,48], index: 0, kind: input, shape index: {}]
  %s1 = inlined_call_operand.vmem [shape: f32[48,10], index: 1, kind: input, shape index: {}]
  %s2 = inlined_call_operand.vmem [shape: f32[1,10], index: 2, kind: input, shape index: {}]
  %s3 = inlined_call_operand.hbm [shape: f32[2,10], index: 3, kind: output, shape index: {}]
  %s4 = sld [smem:[#allocation0]]
  $region22: #{net_forward.21} parent=0
    _
  %s6 = ssub.s32 1, %s4
  %s7 = scalar_select 0, %s6, %s4
  $region1: #{net_forward.21} parent=0
    #allocation2 [shape = 'u8[1024]{0}', space=vmem, size = 0x400, scoped, tag = 'output window, operand 0, single buffered']
    #allocation3 [shape = 's32[1]{0}', space=sflag, size = 0x4, scoped, tag = 'scoped memory for net_forward.21']
    %8 = vsyncpa [#allocation3], 0
    // Predicated region
    $region2: #{net_forward.21} parent=1 // pred_check
      _
    $region3: #{net_forward.21} parent=1 // pred_check_branch
      %10 = sbr.rel (0) target = $region5
    $region4: #{net_forward.21} parent=1 // pred_region
      _
    $region5: #{net_forward.21} parent=1 // pred_fallthru
      _
    // Predicated region
    $region6: #{net_forward.21} parent=1 // pred_check
      _
    $region7: #{net_forward.21} parent=1 // pred_check_branch
      %12 = sbr.rel (0) target = $region9
    $region8: #{net_forward.21} parent=1 // pred_region
      _
    $region9: #{net_forward.21} parent=1 // pred_fallthru
      _
    // Predicated region
    $region10: #{net_forward.21} parent=1 // pred_check
      _
    $region11: #{net_forward.21} parent=1 // pred_check_branch
      %14 = sbr.rel (0) target = $region13
    $region12: #{net_forward.21} parent=1 // pred_region
      _
    $region13: #{net_forward.21} parent=1 // pred_fallthru
      _
    %v15 = vld [vmem:[%s0] sm:$0xf]
    %v16 = vld [vmem:[%s0 + $0x4] sm:$0xf]
    %v17 = vld [vmem:[%s0 + $0x8] sm:$0xf]
    %v18 = vld [vmem:[%s0 + $0xc] sm:$0xf]
    %v19 = vld [vmem:[%s0 + $0x10] sm:$0x3]
    %v20 = vld [vmem:[%s0 + $0x14] sm:$0xf]
    %v21 = vld [vmem:[%s0 + $0x18] sm:$0xf]
    %v22 = vld [vmem:[%s0 + $0x1c] sm:$0xf]
    %v23 = vld [vmem:[%s0 + $0x20] sm:$0xf]
    %v24 = vld [vmem:[%s0 + $0x24] sm:$0x3]
    %v25 = vunpack.c.l.bf16 %v15
    %v26 = vunpack.c.l.bf16 %v16
    %v27 = vunpack.c.l.bf16 %v17
    %v28 = vunpack.c.l.bf16 %v18
    %v29 = vunpack.c.l.bf16 %v19
    %v30 = vunpack.c.l.bf16 %v20
    %v31 = vunpack.c.l.bf16 %v21
    %v32 = vunpack.c.l.bf16 %v22
    %v33 = vunpack.c.l.bf16 %v23
    %v34 = vunpack.c.l.bf16 %v24
    %vm35 = vcmask 392192
    %v36 = vsel %vm35, %v25, 0.0
    %v37 = vsel %vm35, %v26, 0.0
    %v38 = vadd.f32 %v36, %v37
    %v39 = vsel %vm35, %v27, 0.0
    %v40 = vadd.f32 %v38, %v39
    %v41 = vsel %vm35, %v28, 0.0
    %v42 = vadd.f32 %v40, %v41
    %vm43 = vcmask 388096
    %v44 = vsel %vm43, %v29, 0.0
    %v45 = vadd.f32 %v42, %v44
    %v46 = vrot.slane %v45, 4
    %v47 = vadd.f32 %v45, %v46
    %v48 = vrot.slane %v47, 2
    %v49 = vadd.f32 %v47, %v48
    %v50 = vrot.slane %v49, 1
    %v51 = vadd.f32 %v49, %v50
    %v52 = vsel %vm35, %v30, 0.0
    %v53 = vsel %vm35, %v31, 0.0
    %v54 = vadd.f32 %v52, %v53
    %v55 = vsel %vm35, %v32, 0.0
    %v56 = vadd.f32 %v54, %v55
    %v57 = vsel %vm35, %v33, 0.0
    %v58 = vadd.f32 %v56, %v57
    %v59 = vsel %vm43, %v34, 0.0
    %v60 = vadd.f32 %v58, %v59
    %v61 = vrot.slane %v60, 4
    %v62 = vadd.f32 %v60, %v61
    %v63 = vrot.slane %v62, 2
    %v64 = vadd.f32 %v62, %v63
    %v65 = vrot.slane %v64, 1
    %v66 = vadd.f32 %v64, %v65
    %v67 = vrcp.pop 36.0
    %v68 = vmul.f32 %v51, %v67
    %v69 = vmul.f32 %v66, %v67
    %v70 = vld [vmem:[%s1] sm:$0xff]
    %v71 = vld [vmem:[%s1 + $0x8] sm:$0xff]
    %v72 = vld [vmem:[%s1 + $0x10] sm:$0xff]
    %v73 = vld [vmem:[%s1 + $0x18] sm:$0xff]
    %v74 = vld [vmem:[%s1 + $0x20] sm:$0xff]
    %v75 = vld [vmem:[%s1 + $0x28] sm:$0xff]
    %v76 = vld [vmem:[%s2] sm:$0x1]
    %v78 = vlaneseq
    %v79 = vshrl.u32 %v78, 7
    %v80 = vsub.s32 0, %v79
    %v81 = vrot.slane %v76, %v80
    %vm85 = vcmask 1041409
    %v86 = vsel %vm85, %v69, %v68
    %v87 = vsel %vm35, %v86, 0
    %89 = vmatprep.subr.mxu0 0.0
    %90 = vmatpush1.msra.mxu0 %v70
    %91 = vmatprep.subr.mxu0 0.0
    %92 = vmatpush1.msra.mxu0 %v71
    %93 = vmatprep.subr.mxu0 0.0
    %94 = vmatpush1.msra.mxu0 %v72
    %95 = vmatprep.subr.mxu0 0.0
    %96 = vmatpush1.msra.mxu0 %v73
    %97 = vmatprep.subr.mxu0 0.0
    %98 = vmatpush1.msra.mxu0 %v74
    %99 = vmatprep.subr.mxu0 0.0
    %100 = vmatpush1.msra.mxu0 %v75
    %101 = vmatprep.subr.mxu0 0.0
    %102 = vmatpush1.msra.mxu0 0.0
    %103 = vmatprep.subr.mxu0 0.0
    %104 = vmatpush1.msra.mxu0 0.0
    %105 = vmatprep.subr.mxu0 0.0
    %106 = vmatpush1.msra.mxu0 0.0
    %107 = vmatprep.subr.mxu0 0.0
    %108 = vmatpush1.msra.mxu0 0.0
    %109 = vmatprep.subr.mxu0 0.0
    %110 = vmatpush1.msra.mxu0 0.0
    %111 = vmatprep.subr.mxu0 0.0
    %112 = vmatpush1.msra.mxu0 0.0
    %113 = vmatprep.subr.mxu0 0.0
    %114 = vmatpush1.msra.mxu0 0.0
    %115 = vmatprep.subr.mxu0 0.0
    %116 = vmatpush1.msra.mxu0 0.0
    %117 = vmatprep.subr.mxu0 0.0
    %118 = vmatpush1.msra.mxu0 0.0
    %119 = vmatprep.subr.mxu0 0.0
    %120 = vmatpush1.msra.mxu0 0.0
    %121 = vmatprep.subr.mxu0 0.0
    %122 = vmatpush1.msra.mxu0 0.0
    %123 = vmatprep.subr.mxu0 0.0
    %124 = vmatpush1.msra.mxu0 0.0
    %125 = vmatprep.subr.mxu0 0.0
    %126 = vmatpush1.msra.mxu0 0.0
    %127 = vmatprep.subr.mxu0 0.0
    %128 = vmatpush1.msra.mxu0 0.0
    %129 = vmatprep.subr.mxu0 0.0
    %130 = vmatpush1.msra.mxu0 0.0
    %131 = vmatprep.subr.mxu0 0.0
    %132 = vmatpush1.msra.mxu0 0.0
    %133 = vmatprep.subr.mxu0 0.0
    %134 = vmatpush1.msra.mxu0 0.0
    %135 = vmatprep.subr.mxu0 0.0
    %136 = vmatpush1.msra.mxu0 0.0
    %137 = vmatprep.subr.mxu0 0.0
    %138 = vmatpush1.msra.mxu0 0.0
    %139 = vmatprep.subr.mxu0 0.0
    %140 = vmatpush1.msra.mxu0 0.0
    %141 = vmatprep.subr.mxu0 0.0
    %142 = vmatpush1.msra.mxu0 0.0
    %143 = vmatprep.subr.mxu0 0.0
    %144 = vmatpush1.msra.mxu0 0.0
    %145 = vmatprep.subr.mxu0 0.0
    %146 = vmatpush1.msra.mxu0 0.0
    %147 = vmatprep.subr.mxu0 0.0
    %148 = vmatpush1.msra.mxu0 0.0
    %149 = vmatprep.subr.mxu0 0.0
    %150 = vmatpush1.msra.mxu0 0.0
    %151 = vmatprep.subr.mxu0 0.0
    %152 = vmatpush1.msra.mxu0 0.0
    %153 = vmatprep.mubr.f32.mxu0 0.0
    %154 = vmatmul.mubr.f32.gmra.mrb[0].mxu0 %v87
    %v155 = vpop.f32.mrb[0].mxu0
    %v156 = vadd.f32 %v81, %v155
    %v157 = vpop.f32.mrb[0].mxu0
    %158 = vdwg.mxu0
    %vm159 = vcmask 74752
    %v160 = vsel %vm159, %v156, -inf
    %161 = vmax.xlane.f32.xlu0 %v160
    %v162 = vpop.xlane.xlu0 %161
    %v163 = vsub.f32 %v156, %v162
    %v164 = vmul.f32 %v163, 1.442695
    %v165 = vpow.pop %v164
    %v166 = vsel %vm159, %v165, 0.0
    %167 = vadd.xlane.f32.xlu0 %v166
    %v168 = vpop.xlane.xlu0 %167
    %v169 = vlog2.pop %v168
    %v170 = vmul.f32 %v169, 0.6931472
    %v171 = vsub.f32 %v163, %v170
    %172 = vst.msk [vmem:[#allocation2] sm:$0x3] %vm159, %v171
    // Predicated region
    $region14: #{net_forward.21} parent=1 // pred_check
      _
    $region15: #{net_forward.21} parent=1 // pred_check_branch
      %174 = sbr.rel (0) target = $region17
    $region16: #{net_forward.21} parent=1 // pred_region
      %s176 = ssub.s32 32, 32
      %177 = vsyncadd [#allocation3], %s176
      %s179 = sshll.u32 [#allocation2], 4
      %s180 = int_to_ptr.vmem [resolvable:$true] %s179
      %182 = dma.vmem_to_hbm [thread:$0]  %s180, 32, %s3, [#allocation3]
    $region17: #{net_forward.21} parent=1 // pred_fallthru
      _
    // Predicated region
    $region18: #{net_forward.21} parent=1 // pred_check
      _
    $region19: #{net_forward.21} parent=1 // pred_check_branch
      %184 = sbr.rel (0) target = $region21
    $region20: #{net_forward.21} parent=1 // pred_region
      %185 = dma.done [#allocation3], 32
    $region21: #{net_forward.21} parent=1 // pred_fallthru
      _
    %186 = vsyncpa [#allocation3], 1

</llo_original>
